<compile_context>
chip_gen: v7x
topology: tpu7x:2x2x1
jax: 0.10.0
libtpu: 0.0.40
codegen_flags: <defaults>
</compile_context>

<pallas_src>
import functools

import jax
import jax.numpy as jnp
from jax import lax
from jax.experimental import pallas as pl
from jax.experimental.pallas import tpu as pltpu

EPS = 1e-5          # BatchNorm2d default eps
K = 2               # ConvTranspose2d kernel_size for the stride=2 path
K2 = K * K          # 4 output pixels per input pixel


# --------------------------- pass 1: statistics ------------------------------
def _stats_kernel(x_ref, w_ref, gb_ref, grp_ref, out_ref, p_sc, s_sc, q_sc,
                  *, inv_count):
    # x_ref   : (tile_m, Cin)        bf16   -- this M tile
    # w_ref   : (Cin, tile_cols)     bf16   -- this column tile of the weight
    # gb_ref  : (2, tile_cols)       f32    -- row 0 gamma, row 1 beta
    # grp_ref : (tile_cols, tile_cols) f32  -- group-of-4 reduce/broadcast 0/1
    # out_ref : (2, tile_cols)       f32    -- row 0 scale, row 1 shift
    # p_sc/s_sc/q_sc : (1, tile_cols) f32 scratch (pivot / sum / sum-of-sq)
    m = pl.program_id(1)

    # transposed conv for this tile: one MXU matmul (bf16 in, f32 accumulate)
    y = jnp.dot(x_ref[...], w_ref[...], preferred_element_type=jnp.float32)

    @pl.when(m == 0)
    def _():
        # Per-channel pivot (group mean of row 0) for a *shifted* one-pass
        # variance -- avoids E[y^2] - E[y]^2 cancellation on real activations.
        p_sc[...] = jnp.dot(y[0:1, :], grp_ref[...],
                            preferred_element_type=jnp.float32) * (1.0 / K2)
        s_sc[...] = jnp.zeros_like(s_sc)
        q_sc[...] = jnp.zeros_like(q_sc)

    d = y - p_sc[...]
    s_sc[...] += jnp.sum(d, axis=0, keepdims=True)
    q_sc[...] += jnp.sum(d * d, axis=0, keepdims=True)

    @pl.when(m == pl.num_programs(1) - 1)
    def _():
        # reduce the group of 4 columns per channel and broadcast back with
        # one tiny 0/1 matmul (no cross-lane reshapes)
        s_c = jnp.dot(s_sc[...], grp_ref[...], preferred_element_type=jnp.float32)
        q_c = jnp.dot(q_sc[...], grp_ref[...], preferred_element_type=jnp.float32)
        mean_sh = s_c * inv_count                       # E[y] - pivot
        var = q_c * inv_count - mean_sh * mean_sh       # biased variance
        mean = mean_sh + p_sc[...]
        inv = lax.rsqrt(var + EPS)
        scale = gb_ref[0:1, :] * inv
        shift = gb_ref[1:2, :] - mean * scale
        out_ref[0:1, :] = scale
        out_ref[1:2, :] = shift


# ------------------------ pass 2: matmul + affine + ReLU ----------------------
def _apply_kernel(x_ref, w_ref, ss_ref, out_ref):
    # x_ref : (tile_m, Cin) bf16, w_ref : (Cin, tile_cols) bf16
    # ss_ref: (2, tile_cols) f32 (scale, shift), out_ref: (tile_m, tile_cols) f32
    y = jnp.dot(x_ref[...], w_ref[...], preferred_element_type=jnp.float32)
    out_ref[...] = jnp.maximum(y * ss_ref[0:1, :] + ss_ref[1:2, :], 0.0)


def _pick_tile_m(m_total, max_tile=1024):
    """Largest multiple-of-8 divisor of m_total that is <= max_tile."""
    if m_total <= max_tile:
        return m_total
    for t in range(max_tile - (max_tile % 8), 7, -8):
        if m_total % t == 0:
            return t
    # TODO(synk): no aligned divisor found -- fall back to un-tiled M.
    return m_total


def convt_bn_relu(x_nchw, weight, bias, gamma, beta, *, tile_cols=None,
                  max_tile_m=1024):
    """ConvTBNRelu forward (stride=2 path).

    x_nchw : (N, Cin, H, W) float32
    weight : (Cin, Cout, 2, 2) float32  (PyTorch ConvTranspose2d layout)
    bias, gamma, beta : (Cout,) float32
    returns (N, Cout, 2H, 2W) float32
    """
    N, Cin, H, W = x_nchw.shape
    cin_w, Cout, kh, kw = weight.shape
    assert cin_w == Cin and (kh, kw) == (K, K)
    M = N * H * W
    cols = Cout * K2

    # Conv bias cancels exactly under training-mode BatchNorm -> not applied.
    del bias

    if tile_cols is None:
        # 128 keeps >=2 parallel column tiles for Cout>=64 (good for v7x's 2nd
        # TensorCore); on v6e prefer tile_cols=256 when cols % 256 == 0.
        tile_cols = 128 if cols % 128 == 0 else cols
    assert cols % tile_cols == 0
    # BN invariant: each channel's 4 columns must live inside one tile.
    assert tile_cols % K2 == 0
    tile_m = _pick_tile_m(M, max_tile_m)

    # ---- wrapper-side layout plumbing (lane-dense, bf16 inputs) -------------
    x2d = jnp.transpose(x_nchw.astype(jnp.bfloat16), (0, 2, 3, 1)).reshape(M, Cin)
    wmat = weight.reshape(Cin, cols).astype(jnp.bfloat16)      # col = co*4 + k
    gb = jnp.stack([jnp.repeat(gamma, K2), jnp.repeat(beta, K2)], axis=0)
    idx = jnp.arange(tile_cols)
    grp = (idx[:, None] // K2 == idx[None, :] // K2).astype(jnp.float32)

    ncol, nm = cols // tile_cols, M // tile_m
    grid = (ncol, nm)

    # ---- pass 1: batch statistics -> per-column (scale, shift) --------------
    stats = pl.pallas_call(
        functools.partial(_stats_kernel, inv_count=1.0 / float(M * K2)),
        out_shape=jax.ShapeDtypeStruct((2, cols), jnp.float32),
        grid=grid,
        in_specs=[
            pl.BlockSpec((tile_m, Cin), lambda j, m: (m, 0)),
            pl.BlockSpec((Cin, tile_cols), lambda j, m: (0, j)),
            pl.BlockSpec((2, tile_cols), lambda j, m: (0, j)),
            pl.BlockSpec((tile_cols, tile_cols), lambda j, m: (0, 0)),
        ],
        out_specs=pl.BlockSpec((2, tile_cols), lambda j, m: (0, j)),
        scratch_shapes=[
            pltpu.VMEM((1, tile_cols), jnp.float32),   # pivot
            pltpu.VMEM((1, tile_cols), jnp.float32),   # sum(y - pivot)
            pltpu.VMEM((1, tile_cols), jnp.float32),   # sum((y - pivot)^2)
        ],
        compiler_params=pltpu.CompilerParams(
            dimension_semantics=("parallel", "arbitrary")),
    )(x2d, wmat, gb, grp)

    # ---- pass 2: recompute matmul + affine + ReLU (fully parallel) ----------
    y2d = pl.pallas_call(
        _apply_kernel,
        out_shape=jax.ShapeDtypeStruct((M, cols), jnp.float32),
        grid=grid,
        in_specs=[
            pl.BlockSpec((tile_m, Cin), lambda j, m: (m, 0)),
            pl.BlockSpec((Cin, tile_cols), lambda j, m: (0, j)),
            pl.BlockSpec((2, tile_cols), lambda j, m: (0, j)),
        ],
        out_specs=pl.BlockSpec((tile_m, tile_cols), lambda j, m: (m, j)),
        compiler_params=pltpu.CompilerParams(
            dimension_semantics=("parallel", "parallel")),
    )(x2d, wmat, stats)

    # depth-to-space: (M, Cout*4) -> (N, Cout, 2H, 2W)
    y = y2d.reshape(N, H, W, Cout, K, K)
    y = jnp.transpose(y, (0, 3, 1, 4, 2, 5))          # N, Cout, H, ky, W, kx
    return y.reshape(N, Cout, K * H, K * W)


# -------------------- pure-JAX reference (sanity check) ----------------------
def _ref_convt_bn_relu(x, w, b, g, be):
    N, _, H, W = x.shape
    Cout = w.shape[1]
    y = jnp.einsum('ncij,copq->noipjq', x, w)
    y = y.reshape(N, Cout, K * H, K * W) + b.reshape(1, -1, 1, 1)
    mean = jnp.mean(y, axis=(0, 2, 3), keepdims=True)
    var = jnp.mean((y - mean) ** 2, axis=(0, 2, 3), keepdims=True)
    yn = (y - mean) * lax.rsqrt(var + EPS) * g.reshape(1, -1, 1, 1) \
         + be.reshape(1, -1, 1, 1)
    return jnp.maximum(yn, 0.0)


if __name__ == "__main__":
    N, Cin, Cout, H, W = 2, 32, 64, 16, 16

    key = jax.random.PRNGKey(0)
    kx, kw, kb, kg, kbe = jax.random.split(key, 5)
    x = jax.random.normal(kx, (N, Cin, H, W), jnp.float32)
    w = jax.random.normal(kw, (Cin, Cout, K, K), jnp.float32) / jnp.sqrt(float(Cin))
    b = 0.1 * jax.random.normal(kb, (Cout,), jnp.float32)
    g = 1.0 + 0.1 * jax.random.normal(kg, (Cout,), jnp.float32)
    be = 0.1 * jax.random.normal(kbe, (Cout,), jnp.float32)

    fwd = jax.jit(convt_bn_relu)
    y = jax.block_until_ready(fwd(x, w, b, g, be))
    assert y.shape == (N, Cout, 2 * H, 2 * W)

    # Tight check against a reference fed the same bf16-rounded x / W
    # (isolates kernel math from the intentional bf16 input cast).
    y_ref_bf16 = _ref_convt_bn_relu(
        x.astype(jnp.bfloat16).astype(jnp.float32),
        w.astype(jnp.bfloat16).astype(jnp.float32), b, g, be)
    assert jnp.allclose(y, y_ref_bf16, rtol=2e-3, atol=2e-3), \
        "mismatch vs bf16-rounded reference"

    # Loose check against the exact-f32 module semantics (incl. conv bias,
    # which cancels under training-mode BN).
    y_ref = _ref_convt_bn_relu(x, w, b, g, be)
    assert jnp.allclose(y, y_ref, rtol=3e-2, atol=3e-2), \
        "mismatch vs f32 reference"

    print("KERNEL_OK")
</pallas_src>

<mosaic_0001>
module attributes {stable_mosaic.version = 11 : i64} {
  func.func @_stats_kernel(%arg0: i32, %arg1: i32, %arg2: memref<512x32xbf16, #tpu.memory_space<vmem>>, %arg3: memref<32x128xbf16, #tpu.memory_space<vmem>>, %arg4: memref<2x128xf32, #tpu.memory_space<vmem>>, %arg5: memref<128x128xf32, #tpu.memory_space<vmem>>, %arg6: memref<2x128xf32, #tpu.memory_space<vmem>>, %arg7: memref<1x128xf32, #tpu.memory_space<vmem>>, %arg8: memref<1x128xf32, #tpu.memory_space<vmem>>, %arg9: memref<1x128xf32, #tpu.memory_space<vmem>>) attributes {dimension_semantics = [#tpu.dimension_semantics<parallel>, #tpu.dimension_semantics<arbitrary>], iteration_bounds = array<i64: 2, 1>, scalar_prefetch = 0 : i64, scratch_operands = 3 : i64, tpu.core_type = #tpu.core_type<tc>, window_params = [{transform_indices = @transform_0, window_bounds = array<i64: 512, 32>}, {transform_indices = @transform_1, window_bounds = array<i64: 32, 128>}, {transform_indices = @transform_2, window_bounds = array<i64: 2, 128>}, {pipeline_mode = #tpu.pipeline_mode<synchronous>, transform_indices = @transform_3, window_bounds = array<i64: 128, 128>}, {transform_indices = @transform_4, window_bounds = array<i64: 2, 128>}]} {
    %c0 = arith.constant 0 : index
    %c0_0 = arith.constant 0 : index
    %0 = vector.load %arg2[%c0, %c0_0] : memref<512x32xbf16, #tpu.memory_space<vmem>>, vector<512x32xbf16>
    %c0_1 = arith.constant 0 : index
    %c0_2 = arith.constant 0 : index
    %1 = vector.load %arg3[%c0_1, %c0_2] : memref<32x128xbf16, #tpu.memory_space<vmem>>, vector<32x128xbf16>
    %cst = arith.constant dense<0.000000e+00> : vector<512x128xf32>
    %2 = tpu.matmul %0, %1, %cst {dimension_numbers = #tpu.dot_dimension_numbers<[1], [0], [0], [1], [0, 0, 1, 1], [], []>} : vector<512x32xbf16>, vector<32x128xbf16>, vector<512x128xf32> -> vector<512x128xf32>
    %c0_i32 = arith.constant 0 : i32
    %3 = arith.cmpi eq, %arg1, %c0_i32 : i32
    %4 = arith.extui %3 : i1 to i32
    %c0_i32_3 = arith.constant 0 : i32
    %5 = arith.cmpi ne, %4, %c0_i32_3 : i32
    scf.if %5 {
      %23 = vector.extract_strided_slice %2 {offsets = [0, 0], sizes = [1, 128], strides = [1, 1]} : vector<512x128xf32> to vector<1x128xf32>
      %c0_18 = arith.constant 0 : index
      %c0_19 = arith.constant 0 : index
      %24 = vector.load %arg5[%c0_18, %c0_19] : memref<128x128xf32, #tpu.memory_space<vmem>>, vector<128x128xf32>
      %cst_20 = arith.constant dense<0.000000e+00> : vector<1x128xf32>
      %25 = tpu.matmul %23, %24, %cst_20 {dimension_numbers = #tpu.dot_dimension_numbers<[1], [0], [0], [1], [0, 0, 1, 1], [], []>} : vector<1x128xf32>, vector<128x128xf32>, vector<1x128xf32> -> vector<1x128xf32>
      %cst_21 = arith.constant 2.500000e-01 : f32
      %26 = vector.broadcast %cst_21 : f32 to vector<1x128xf32>
      %27 = arith.mulf %25, %26 : vector<1x128xf32>
      %c0_22 = arith.constant 0 : index
      %c0_23 = arith.constant 0 : index
      %28 = vector.load %arg7[%c0_22, %c0_23] : memref<1x128xf32, #tpu.memory_space<vmem>>, vector<1x128xf32>
      tpu.vector_store %arg7[%c0_22, %c0_23], %27 {strides = array<i32>} : memref<1x128xf32, #tpu.memory_space<vmem>>, vector<1x128xf32>,
      %cst_24 = arith.constant 0.000000e+00 : f32
      %29 = vector.broadcast %cst_24 : f32 to vector<1x128xf32>
      %c0_25 = arith.constant 0 : index
      %c0_26 = arith.constant 0 : index
      %30 = vector.load %arg8[%c0_25, %c0_26] : memref<1x128xf32, #tpu.memory_space<vmem>>, vector<1x128xf32>
      tpu.vector_store %arg8[%c0_25, %c0_26], %29 {strides = array<i32>} : memref<1x128xf32, #tpu.memory_space<vmem>>, vector<1x128xf32>,
      %cst_27 = arith.constant 0.000000e+00 : f32
      %31 = vector.broadcast %cst_27 : f32 to vector<1x128xf32>
      %c0_28 = arith.constant 0 : index
      %c0_29 = arith.constant 0 : index
      %32 = vector.load %arg9[%c0_28, %c0_29] : memref<1x128xf32, #tpu.memory_space<vmem>>, vector<1x128xf32>
      tpu.vector_store %arg9[%c0_28, %c0_29], %31 {strides = array<i32>} : memref<1x128xf32, #tpu.memory_space<vmem>>, vector<1x128xf32>,
    } else {
    }
    %c0_4 = arith.constant 0 : index
    %c0_5 = arith.constant 0 : index
    %6 = vector.load %arg7[%c0_4, %c0_5] : memref<1x128xf32, #tpu.memory_space<vmem>>, vector<1x128xf32>
    %7 = vector.broadcast %6 : vector<1x128xf32> to vector<512x128xf32>
    %8 = arith.subf %2, %7 : vector<512x128xf32>
    %c0_6 = arith.constant 0 : index
    %c0_7 = arith.constant 0 : index
    %9 = vector.load %arg8[%c0_6, %c0_7] : memref<1x128xf32, #tpu.memory_space<vmem>>, vector<1x128xf32>
    %cst_8 = arith.constant dense<0.000000e+00> : vector<128xf32>
    %10 = vector.multi_reduction <add>, %8, %cst_8 [0] : vector<512x128xf32> to vector<128xf32>
    %11 = vector.shape_cast %10 : vector<128xf32> to vector<1x128xf32>
    %12 = arith.addf %9, %11 : vector<1x128xf32>
    %c0_9 = arith.constant 0 : index
    %c0_10 = arith.constant 0 : index
    %13 = vector.load %arg8[%c0_9, %c0_10] : memref<1x128xf32, #tpu.memory_space<vmem>>, vector<1x128xf32>
    tpu.vector_store %arg8[%c0_9, %c0_10], %12 {strides = array<i32>} : memref<1x128xf32, #tpu.memory_space<vmem>>, vector<1x128xf32>,
    %c0_11 = arith.constant 0 : index
    %c0_12 = arith.constant 0 : index
    %14 = vector.load %arg9[%c0_11, %c0_12] : memref<1x128xf32, #tpu.memory_space<vmem>>, vector<1x128xf32>
    %15 = arith.mulf %8, %8 : vector<512x128xf32>
    %cst_13 = arith.constant dense<0.000000e+00> : vector<128xf32>
    %16 = vector.multi_reduction <add>, %15, %cst_13 [0] : vector<512x128xf32> to vector<128xf32>
    %17 = vector.shape_cast %16 : vector<128xf32> to vector<1x128xf32>
    %18 = arith.addf %14, %17 : vector<1x128xf32>
    %c0_14 = arith.constant 0 : index
    %c0_15 = arith.constant 0 : index
    %19 = vector.load %arg9[%c0_14, %c0_15] : memref<1x128xf32, #tpu.memory_space<vmem>>, vector<1x128xf32>
    tpu.vector_store %arg9[%c0_14, %c0_15], %18 {strides = array<i32>} : memref<1x128xf32, #tpu.memory_space<vmem>>, vector<1x128xf32>,
    %c0_i32_16 = arith.constant 0 : i32
    %20 = arith.cmpi eq, %arg1, %c0_i32_16 : i32
    %21 = arith.extui %20 : i1 to i32
    %c0_i32_17 = arith.constant 0 : i32
    %22 = arith.cmpi ne, %21, %c0_i32_17 : i32
    scf.if %22 {
      %c0_18 = arith.constant 0 : index
      %c0_19 = arith.constant 0 : index
      %23 = vector.load %arg8[%c0_18, %c0_19] : memref<1x128xf32, #tpu.memory_space<vmem>>, vector<1x128xf32>
      %c0_20 = arith.constant 0 : index
      %c0_21 = arith.constant 0 : index
      %24 = vector.load %arg5[%c0_20, %c0_21] : memref<128x128xf32, #tpu.memory_space<vmem>>, vector<128x128xf32>
      %cst_22 = arith.constant dense<0.000000e+00> : vector<1x128xf32>
      %25 = tpu.matmul %23, %24, %cst_22 {dimension_numbers = #tpu.dot_dimension_numbers<[1], [0], [0], [1], [0, 0, 1, 1], [], []>} : vector<1x128xf32>, vector<128x128xf32>, vector<1x128xf32> -> vector<1x128xf32>
      %c0_23 = arith.constant 0 : index
      %c0_24 = arith.constant 0 : index
      %26 = vector.load %arg9[%c0_23, %c0_24] : memref<1x128xf32, #tpu.memory_space<vmem>>, vector<1x128xf32>
      %c0_25 = arith.constant 0 : index
      %c0_26 = arith.constant 0 : index
      %27 = vector.load %arg5[%c0_25, %c0_26] : memref<128x128xf32, #tpu.memory_space<vmem>>, vector<128x128xf32>
      %cst_27 = arith.constant dense<0.000000e+00> : vector<1x128xf32>
      %28 = tpu.matmul %26, %27, %cst_27 {dimension_numbers = #tpu.dot_dimension_numbers<[1], [0], [0], [1], [0, 0, 1, 1], [], []>} : vector<1x128xf32>, vector<128x128xf32>, vector<1x128xf32> -> vector<1x128xf32>
      %cst_28 = arith.constant 4.8828125E-4 : f32
      %29 = vector.broadcast %cst_28 : f32 to vector<1x128xf32>
      %30 = arith.mulf %25, %29 : vector<1x128xf32>
      %cst_29 = arith.constant 4.8828125E-4 : f32
      %31 = vector.broadcast %cst_29 : f32 to vector<1x128xf32>
      %32 = arith.mulf %28, %31 : vector<1x128xf32>
      %33 = arith.mulf %30, %30 : vector<1x128xf32>
      %34 = arith.subf %32, %33 : vector<1x128xf32>
      %c0_30 = arith.constant 0 : index
      %c0_31 = arith.constant 0 : index
      %35 = vector.load %arg7[%c0_30, %c0_31] : memref<1x128xf32, #tpu.memory_space<vmem>>, vector<1x128xf32>
      %36 = arith.addf %30, %35 : vector<1x128xf32>
      %cst_32 = arith.constant 9.99999974E-6 : f32
      %37 = vector.broadcast %cst_32 : f32 to vector<1x128xf32>
      %38 = arith.addf %34, %37 : vector<1x128xf32>
      %39 = math.rsqrt %38 : vector<1x128xf32>
      %c0_33 = arith.constant 0 : index
      %c0_34 = arith.constant 0 : index
      %40 = vector.load %arg4[%c0_33, %c0_34] : memref<2x128xf32, #tpu.memory_space<vmem>>, vector<1x128xf32>
      %41 = arith.mulf %40, %39 : vector<1x128xf32>
      %c1 = arith.constant 1 : index
      %c0_35 = arith.constant 0 : index
      %42 = vector.load %arg4[%c1, %c0_35] : memref<2x128xf32, #tpu.memory_space<vmem>>, vector<1x128xf32>
      %43 = arith.mulf %36, %41 : vector<1x128xf32>
      %44 = arith.subf %42, %43 : vector<1x128xf32>
      %c0_36 = arith.constant 0 : index
      %c0_37 = arith.constant 0 : index
      %45 = vector.load %arg6[%c0_36, %c0_37] : memref<2x128xf32, #tpu.memory_space<vmem>>, vector<1x128xf32>
      tpu.vector_store %arg6[%c0_36, %c0_37], %41 {strides = array<i32>} : memref<2x128xf32, #tpu.memory_space<vmem>>, vector<1x128xf32>,
      %c1_38 = arith.constant 1 : index
      %c0_39 = arith.constant 0 : index
      %46 = vector.load %arg6[%c1_38, %c0_39] : memref<2x128xf32, #tpu.memory_space<vmem>>, vector<1x128xf32>
      tpu.vector_store %arg6[%c1_38, %c0_39], %44 {strides = array<i32>} : memref<2x128xf32, #tpu.memory_space<vmem>>, vector<1x128xf32>,
    } else {
    }
    return
  }
  func.func @transform_0(%arg0: i32, %arg1: i32) -> (i32, i32) {
    %c0_i32 = arith.constant 0 : i32
    %c0_i32_0 = arith.constant 0 : i32
    return %arg1, %c0_i32 : i32, i32
  }
  func.func @transform_1(%arg0: i32, %arg1: i32) -> (i32, i32) {
    %c0_i32 = arith.constant 0 : i32
    %c0_i32_0 = arith.constant 0 : i32
    return %c0_i32, %arg0 : i32, i32
  }
  func.func @transform_2(%arg0: i32, %arg1: i32) -> (i32, i32) {
    %c0_i32 = arith.constant 0 : i32
    %c0_i32_0 = arith.constant 0 : i32
    return %c0_i32, %arg0 : i32, i32
  }
  func.func @transform_3(%arg0: i32, %arg1: i32) -> (i32, i32) {
    %c0_i32 = arith.constant 0 : i32
    %c0_i32_0 = arith.constant 0 : i32
    %c0_i32_1 = arith.constant 0 : i32
    return %c0_i32, %c0_i32_0 : i32, i32
  }
  func.func @transform_4(%arg0: i32, %arg1: i32) -> (i32, i32) {
    %c0_i32 = arith.constant 0 : i32
    %c0_i32_0 = arith.constant 0 : i32
    return %c0_i32, %arg0 : i32, i32
  }
}

module attributes {stable_mosaic.version = 11 : i64} {
  func.func @_apply_kernel(%arg0: i32, %arg1: i32, %arg2: memref<512x32xbf16, #tpu.memory_space<vmem>>, %arg3: memref<32x128xbf16, #tpu.memory_space<vmem>>, %arg4: memref<2x128xf32, #tpu.memory_space<vmem>>, %arg5: memref<512x128xf32, #tpu.memory_space<vmem>>) attributes {dimension_semantics = [#tpu.dimension_semantics<parallel>, #tpu.dimension_semantics<parallel>], iteration_bounds = array<i64: 2, 1>, scalar_prefetch = 0 : i64, scratch_operands = 0 : i64, tpu.core_type = #tpu.core_type<tc>, window_params = [{transform_indices = @transform_0, window_bounds = array<i64: 512, 32>}, {transform_indices = @transform_1, window_bounds = array<i64: 32, 128>}, {transform_indices = @transform_2, window_bounds = array<i64: 2, 128>}, {transform_indices = @transform_3, window_bounds = array<i64: 512, 128>}]} {
    %c0 = arith.constant 0 : index
    %c0_0 = arith.constant 0 : index
    %0 = vector.load %arg2[%c0, %c0_0] : memref<512x32xbf16, #tpu.memory_space<vmem>>, vector<512x32xbf16>
    %c0_1 = arith.constant 0 : index
    %c0_2 = arith.constant 0 : index
    %1 = vector.load %arg3[%c0_1, %c0_2] : memref<32x128xbf16, #tpu.memory_space<vmem>>, vector<32x128xbf16>
    %cst = arith.constant dense<0.000000e+00> : vector<512x128xf32>
    %2 = tpu.matmul %0, %1, %cst {dimension_numbers = #tpu.dot_dimension_numbers<[1], [0], [0], [1], [0, 0, 1, 1], [], []>} : vector<512x32xbf16>, vector<32x128xbf16>, vector<512x128xf32> -> vector<512x128xf32>
    %c0_3 = arith.constant 0 : index
    %c0_4 = arith.constant 0 : index
    %3 = vector.load %arg4[%c0_3, %c0_4] : memref<2x128xf32, #tpu.memory_space<vmem>>, vector<1x128xf32>
    %4 = vector.broadcast %3 : vector<1x128xf32> to vector<512x128xf32>
    %5 = arith.mulf %2, %4 : vector<512x128xf32>
    %c1 = arith.constant 1 : index
    %c0_5 = arith.constant 0 : index
    %6 = vector.load %arg4[%c1, %c0_5] : memref<2x128xf32, #tpu.memory_space<vmem>>, vector<1x128xf32>
    %7 = vector.broadcast %6 : vector<1x128xf32> to vector<512x128xf32>
    %8 = arith.addf %5, %7 : vector<512x128xf32>
    %cst_6 = arith.constant 0.000000e+00 : f32
    %9 = vector.broadcast %cst_6 : f32 to vector<512x128xf32>
    %10 = arith.maximumf %8, %9 : vector<512x128xf32>
    %c0_7 = arith.constant 0 : index
    %c0_8 = arith.constant 0 : index
    %11 = vector.load %arg5[%c0_7, %c0_8] : memref<512x128xf32, #tpu.memory_space<vmem>>, vector<512x128xf32>
    tpu.vector_store %arg5[%c0_7, %c0_8], %10 {strides = array<i32>} : memref<512x128xf32, #tpu.memory_space<vmem>>, vector<512x128xf32>,
    return
  }
  func.func @transform_0(%arg0: i32, %arg1: i32) -> (i32, i32) {
    %c0_i32 = arith.constant 0 : i32
    %c0_i32_0 = arith.constant 0 : i32
    return %arg1, %c0_i32 : i32, i32
  }
  func.func @transform_1(%arg0: i32, %arg1: i32) -> (i32, i32) {
    %c0_i32 = arith.constant 0 : i32
    %c0_i32_0 = arith.constant 0 : i32
    return %c0_i32, %arg0 : i32, i32
  }
  func.func @transform_2(%arg0: i32, %arg1: i32) -> (i32, i32) {
    %c0_i32 = arith.constant 0 : i32
    %c0_i32_0 = arith.constant 0 : i32
    return %c0_i32, %arg0 : i32, i32
  }
  func.func @transform_3(%arg0: i32, %arg1: i32) -> (i32, i32) {
    %c0_i32 = arith.constant 0 : i32
    return %arg1, %arg0 : i32, i32
  }
}

</mosaic_0001>

<llo_original>
// kernel: convt_bn_relu.3
$region0: #{convt_bn_relu.3}
  #allocation0 [shape = 'u32[]', space=smem, size = 0x4, offset = 0x4, fixed_abs, tag = 'smem constant byte address 0x4 - core index']
  #allocation1 [shape = 'u32[144,128]{1,0:T(1,128)}', space=vmem, size = 0x12000, scoped, tag = 'internal scratch']
  %s0 = inlined_call_operand.vmem [shape: bf16[512,32], index: 0, kind: input, shape index: {}]
  %s1 = inlined_call_operand.vmem [shape: bf16[32,256], index: 1, kind: input, shape index: {}]
  %s2 = inlined_call_operand.vmem [shape: f32[2,256], index: 2, kind: input, shape index: {}]
  %s3 = inlined_call_operand.vmem [shape: f32[512,256], index: 3, kind: output, shape index: {}]
  %s4 = sld [smem:[#allocation0]]
  $region120: #{convt_bn_relu.3} parent=0
    _
  %s6 = ssub.s32 1, %s4
  %s7 = scalar_select 0, %s6, %s4
  $region1: #{convt_bn_relu.3} parent=0
    #allocation2 [shape = 'u8[16384]{0}', space=vmem, size = 0x4000, scoped, tag = 'input window, operand 1']
    #allocation3 [shape = 'u8[524288]{0}', space=vmem, size = 0x80000, scoped, tag = 'output window, operand 0']
    loop: start=0, step=1, limit=4
    $region2: #{convt_bn_relu.3} parent=1 // loop_pre_header
      _
    $region3: #{convt_bn_relu.3} parent=1 // loop_header
      %s9 = sphi 0, %s13
      %p10 = scmp.ge.s32.totalorder %s9, 4
      %s16 = sphi 0, %s28
      %s17 = sphi 0, %s24
      %s18 = sphi 0, %s16
      %s19 = sphi 0, %s17
      %s20 = sphi 0, %s18
      %s21 = sphi 0, %s19
      %s31 = sphi 0, %s33
      %s34 = sphi 0, %s31
      %s35 = sphi 0, %s34
      %s51 = sphi 0, %s35
      %s57 = sphi 0, %s59
      %s60 = sphi 0, %s57
      %s61 = sphi 0, %s60
      %s77 = sphi 0, %s61
      %s83 = sphi 0, %s85
      %s86 = sphi 0, %s83
      %s87 = sphi 0, %s86
      %s103 = sphi 0, %s87
      %s111 = sphi 0, %s113
      %s114 = sphi 0, %s111
      %s115 = sphi 0, %s114
      %s131 = sphi 0, %s115
    $region4: #{convt_bn_relu.3} parent=1 // loop_header_branch
      %12 = sbr.rel (%p10) target = $region8
    $region5: #{convt_bn_relu.3} parent=1 // loop_body
      %s14 = ssub.s32 %s9, 1
      %s15 = ssub.s32 %s9, 2
      %s22 = sadd.s32 1, %s17
      %p23 = scmp.ge.s32.totalorder %s22, 1
      %s24 = scalar_select %p23, 0, %s22
      %s25 = sadd.s32 1, %s16
      %s26 = scalar_select %p23, %s25, %s16
      %p27 = scmp.ge.s32.totalorder %s26, 2
      %s28 = scalar_select %p27, 0, %s26
      %s29 = ssub.s32 %s17, %s24
      %p30 = scmp.eq.s32.totalorder %s29, 0
      %s32 = sadd.s32 %s31, 1
      %s33 = scalar_select %p30, %s31, %s32
      %p36 = pneg %p30
      %p37 = scmp.eq.s32.totalorder %s9, 1
      %p38 = por %p36, %p37
      %p39 = scmp.ne.s32.totalorder %s31, %s34
      %p40 = scmp.eq.s32.totalorder %s9, 0
      %p41 = por %p39, %p40
      %p42 = scmp.ne.s32.totalorder %s31, %s34
      %p43 = scmp.eq.s32.totalorder %s14, 1
      %p44 = por %p42, %p43
      %p45 = scmp.ne.s32.totalorder %s34, %s35
      %p46 = scmp.eq.s32.totalorder %s14, 0
      %p47 = por %p45, %p46
      %p48 = scmp.ne.s32.totalorder %s34, %s35
      %p49 = scmp.eq.s32.totalorder %s15, 1
      %p50 = por %p48, %p49
      %p52 = scmp.ne.s32.totalorder %s35, %s51
      %p53 = scmp.eq.s32.totalorder %s15, 0
      %p54 = por %p52, %p53
      %s55 = ssub.s32 %s16, %s28
      %p56 = scmp.eq.s32.totalorder %s55, 0
      %s58 = sadd.s32 %s57, 1
      %s59 = scalar_select %p56, %s57, %s58
      %p62 = pneg %p56
      %p63 = scmp.eq.s32.totalorder %s9, 1
      %p64 = por %p62, %p63
      %p65 = scmp.ne.s32.totalorder %s57, %s60
      %p66 = scmp.eq.s32.totalorder %s9, 0
      %p67 = por %p65, %p66
      %p68 = scmp.ne.s32.totalorder %s57, %s60
      %p69 = scmp.eq.s32.totalorder %s14, 1
      %p70 = por %p68, %p69
      %p71 = scmp.ne.s32.totalorder %s60, %s61
      %p72 = scmp.eq.s32.totalorder %s14, 0
      %p73 = por %p71, %p72
      %p74 = scmp.ne.s32.totalorder %s60, %s61
      %p75 = scmp.eq.s32.totalorder %s15, 1
      %p76 = por %p74, %p75
      %p78 = scmp.ne.s32.totalorder %s61, %s77
      %p79 = scmp.eq.s32.totalorder %s15, 0
      %p80 = por %p78, %p79
      %s81 = ssub.s32 %s16, %s28
      %p82 = scmp.eq.s32.totalorder %s81, 0
      %s84 = sadd.s32 %s83, 1
      %s85 = scalar_select %p82, %s83, %s84
      %p88 = pneg %p82
      %p89 = scmp.eq.s32.totalorder %s9, 1
      %p90 = por %p88, %p89
      %p91 = scmp.ne.s32.totalorder %s83, %s86
      %p92 = scmp.eq.s32.totalorder %s9, 0
      %p93 = por %p91, %p92
      %p94 = scmp.ne.s32.totalorder %s83, %s86
      %p95 = scmp.eq.s32.totalorder %s14, 1
      %p96 = por %p94, %p95
      %p97 = scmp.ne.s32.totalorder %s86, %s87
      %p98 = scmp.eq.s32.totalorder %s14, 0
      %p99 = por %p97, %p98
      %p100 = scmp.ne.s32.totalorder %s86, %s87
      %p101 = scmp.eq.s32.totalorder %s15, 1
      %p102 = por %p100, %p101
      %p104 = scmp.ne.s32.totalorder %s87, %s103
      %p105 = scmp.eq.s32.totalorder %s15, 0
      %p106 = por %p104, %p105
      %s107 = ssub.s32 %s17, %s24
      %s108 = ssub.s32 %s16, %s28
      %s109 = sor.u32 %s107, %s108
      %p110 = scmp.eq.s32.totalorder %s109, 0
      %s112 = sadd.s32 %s111, 1
      %s113 = scalar_select %p110, %s111, %s112
      %p116 = pneg %p110
      %p117 = scmp.eq.s32.totalorder %s9, 1
      %p118 = por %p116, %p117
      %p119 = scmp.ne.s32.totalorder %s111, %s114
      %p120 = scmp.eq.s32.totalorder %s9, 0
      %p121 = por %p119, %p120
      %p122 = scmp.ne.s32.totalorder %s111, %s114
      %p123 = scmp.eq.s32.totalorder %s14, 1
      %p124 = por %p122, %p123
      %p125 = scmp.ne.s32.totalorder %s114, %s115
      %p126 = scmp.eq.s32.totalorder %s14, 0
      %p127 = por %p125, %p126
      %p128 = scmp.ne.s32.totalorder %s114, %s115
      %p129 = scmp.eq.s32.totalorder %s15, 1
      %p130 = por %p128, %p129
      %p132 = scmp.ne.s32.totalorder %s115, %s131
      %p133 = scmp.eq.s32.totalorder %s15, 0
      %p134 = por %p132, %p133
      %p135 = scmp.le.s32.totalorder 1, %s9
      %p136 = scmp.lt.s32.totalorder %s9, 3
      %p137 = pnand %p135, %p136
      %p138 = pneg %p137
      // Predicated region
      $region9: #{convt_bn_relu.3} parent=5 // pred_check
        _
      $region10: #{convt_bn_relu.3} parent=5 // pred_check_branch
        %140 = sbr.rel (%p137) target = $region12
      $region11: #{convt_bn_relu.3} parent=5 // pred_region
        %s141 = ssub.s32 %s9, 1
        // Predicated region
        $region13: #{convt_bn_relu.3} parent=11 // pred_check
          %p142 = pneg %p47
        $region14: #{convt_bn_relu.3} parent=11 // pred_check_branch
          %144 = sbr.rel (%p142) target = $region16
        $region15: #{convt_bn_relu.3} parent=11 // pred_region
          %s145 = smul.u32 64, %s19
          %p146 = scmp.lt.s32.totalorder %s145, 63
          %s147 = scalar_select %p146, %s145, 63
          %s148 = smul.addr %s147, 4
          %s149 = scalar_lea.vmem %s0, %s148
          %s150 = smul.u32 64, %s19
        $region16: #{convt_bn_relu.3} parent=11 // pred_fallthru
          _
      $region12: #{convt_bn_relu.3} parent=5 // pred_fallthru
        _
      %p151 = scmp.lt.s32.totalorder %s9, 2
      // Predicated region
      $region17: #{convt_bn_relu.3} parent=5 // pred_check
        %p152 = pneg %p151
      $region18: #{convt_bn_relu.3} parent=5 // pred_check_branch
        %154 = sbr.rel (%p152) target = $region20
      $region19: #{convt_bn_relu.3} parent=5 // pred_region
        // Predicated region
        $region21: #{convt_bn_relu.3} parent=19 // pred_check
          %p155 = pneg %p67
        $region22: #{convt_bn_relu.3} parent=19 // pred_check_branch
          %157 = sbr.rel (%p155) target = $region24
        $region23: #{convt_bn_relu.3} parent=19 // pred_region
          %s158 = sand.u32 %s57, 1
          %s159 = sand.u32 %s57, 1
          %s160 = smul.addr %s159, 16
          %s161 = scalar_lea.vmem [#allocation2], %s160
          %s162 = smul.addr %s16, 4
          %s163 = scalar_lea.vmem %s1, %s162
          // Predicated region
          $region25: #{convt_bn_relu.3} parent=23 // pred_check
            _
          $region26: #{convt_bn_relu.3} parent=23 // pred_check_branch
            %165 = sbr.rel (0) target = $region28
          $region27: #{convt_bn_relu.3} parent=23 // pred_region
            // Predicated region
            $region29: #{convt_bn_relu.3} parent=27 // pred_check
              _
            $region30: #{convt_bn_relu.3} parent=27 // pred_check_branch
              %167 = sbr.rel target = $region32
            $region31: #{convt_bn_relu.3} parent=27 // pred_region
              // Predicated region
              $region44: #{convt_bn_relu.3} parent=31 // pred_check
                _
              $region45: #{convt_bn_relu.3} parent=31 // pred_check_branch
                %188 = sbr.rel (0) target = $region47
              $region46: #{convt_bn_relu.3} parent=31 // pred_region
                loop: start=0, step=1, limit=1
                $region48: #{convt_bn_relu.3} parent=46 // loop_pre_header
                  _
                $region49: #{convt_bn_relu.3} parent=46 // loop_header
                  %s190 = sphi 0, %s194
                  %p191 = scmp.ge.s32.totalorder %s190, 1
                  %s195 = sphi %s163, %s163
                  %s196 = sphi %s161, %s161
                $region50: #{convt_bn_relu.3} parent=46 // loop_header_branch
                  %193 = sbr.rel (%p191) target = $region54
                $region51: #{convt_bn_relu.3} parent=46 // loop_body
                  _
                $region52: #{convt_bn_relu.3} parent=46 // loop_footer
                  %s194 = sadd.s32 1, %s190
                $region53: #{convt_bn_relu.3} parent=46 // loop_footer_branch
                  %189 = sbr.rel target = $region49
                $region54: #{convt_bn_relu.3} parent=46 // loop_exit
                  _
                loop: start=0, step=1, limit=1
                $region55: #{convt_bn_relu.3} parent=46 // loop_pre_header
                  _
                $region56: #{convt_bn_relu.3} parent=46 // loop_header
                  %s199 = sphi 0, %s203
                  %p200 = scmp.ge.s32.totalorder %s199, 1
                  %s204 = sphi %s163, %s163
                  %s205 = sphi %s161, %s161
                $region57: #{convt_bn_relu.3} parent=46 // loop_header_branch
                  %202 = sbr.rel (%p200) target = $region61
                $region58: #{convt_bn_relu.3} parent=46 // loop_body
                  %v206 = vld [vmem:[%s204] sm:$0xf]
                  %207 = vst [vmem:[%s205] sm:$0xf] %v206
                  %v208 = vld [vmem:[%s204 + $0x8] sm:$0xf]
                  %209 = vst [vmem:[%s205 + $0x4] sm:$0xf] %v208
                  %v210 = vld [vmem:[%s204 + $0x10] sm:$0xf]
                  %211 = vst [vmem:[%s205 + $0x8] sm:$0xf] %v210
                  %v212 = vld [vmem:[%s204 + $0x18] sm:$0xf]
                  %213 = vst [vmem:[%s205 + $0xc] sm:$0xf] %v212
                $region59: #{convt_bn_relu.3} parent=46 // loop_footer
                  %s203 = sadd.s32 1, %s199
                $region60: #{convt_bn_relu.3} parent=46 // loop_footer_branch
                  %198 = sbr.rel target = $region56
                $region61: #{convt_bn_relu.3} parent=46 // loop_exit
                  _
              $region47: #{convt_bn_relu.3} parent=31 // pred_fallthru
                _
            $region32: #{convt_bn_relu.3} parent=27 // pred_fallthru
              _
            // Predicated region
            $region33: #{convt_bn_relu.3} parent=27 // pred_check
              _
            $region34: #{convt_bn_relu.3} parent=27 // pred_check_branch
              %169 = sbr.rel (0) target = $region36
            $region35: #{convt_bn_relu.3} parent=27 // pred_region
              loop: start=0, step=1, limit=1
              $region37: #{convt_bn_relu.3} parent=35 // loop_pre_header
                _
              $region38: #{convt_bn_relu.3} parent=35 // loop_header
                %s172 = sphi 0, %s176
                %p173 = scmp.ge.s32.totalorder %s172, 1
                %s177 = sphi %s163, %s163
                %s178 = sphi %s161, %s161
              $region39: #{convt_bn_relu.3} parent=35 // loop_header_branch
                %175 = sbr.rel (%p173) target = $region43
              $region40: #{convt_bn_relu.3} parent=35 // loop_body
                %v179 = vld [vmem:[%s177] sm:$0xf]
                %180 = vst [vmem:[%s178] sm:$0xf] %v179
                %v181 = vld [vmem:[%s177 + $0x8] sm:$0xf]
                %182 = vst [vmem:[%s178 + $0x4] sm:$0xf] %v181
                %v183 = vld [vmem:[%s177 + $0x10] sm:$0xf]
                %184 = vst [vmem:[%s178 + $0x8] sm:$0xf] %v183
                %v185 = vld [vmem:[%s177 + $0x18] sm:$0xf]
                %186 = vst [vmem:[%s178 + $0xc] sm:$0xf] %v185
              $region41: #{convt_bn_relu.3} parent=35 // loop_footer
                %s176 = sadd.s32 1, %s172
              $region42: #{convt_bn_relu.3} parent=35 // loop_footer_branch
                %171 = sbr.rel target = $region38
              $region43: #{convt_bn_relu.3} parent=35 // loop_exit
                _
            $region36: #{convt_bn_relu.3} parent=27 // pred_fallthru
              _
          $region28: #{convt_bn_relu.3} parent=23 // pred_fallthru
            _
          %214 = vnop
        $region24: #{convt_bn_relu.3} parent=19 // pred_fallthru
          _
        // Predicated region
        $region62: #{convt_bn_relu.3} parent=19 // pred_check
          %p215 = pneg %p93
        $region63: #{convt_bn_relu.3} parent=19 // pred_check_branch
          %217 = sbr.rel (%p215) target = $region65
        $region64: #{convt_bn_relu.3} parent=19 // pred_region
          %p218 = scmp.lt.s32.totalorder %s16, 1
          %s219 = scalar_select %p218, %s16, 1
          %s220 = smul.addr %s219, 2
          %s221 = scalar_lea.vmem %s2, %s220
        $region65: #{convt_bn_relu.3} parent=19 // pred_fallthru
          _
      $region20: #{convt_bn_relu.3} parent=5 // pred_fallthru
        _
      %p222 = scmp.le.s32.totalorder 1, %s9
      %p223 = scmp.lt.s32.totalorder %s9, 3
      %p224 = pnand %p222, %p223
      %p225 = pneg %p224
      // Predicated region
      $region66: #{convt_bn_relu.3} parent=5 // pred_check
        _
      $region67: #{convt_bn_relu.3} parent=5 // pred_check_branch
        %227 = sbr.rel (%p224) target = $region69
      $region68: #{convt_bn_relu.3} parent=5 // pred_region
        %s228 = ssub.s32 %s9, 1
        %s229 = sand.u32 %s60, 1
        %s230 = sand.u32 %s60, 1
        %s231 = smul.addr %s230, 16
        %s232 = scalar_lea.vmem [#allocation2], %s231
        // Predicated region
        $region70: #{convt_bn_relu.3} parent=68 // pred_check
          %p233 = pneg %p73
        $region71: #{convt_bn_relu.3} parent=68 // pred_check_branch
          %235 = sbr.rel (%p233) target = $region73
        $region72: #{convt_bn_relu.3} parent=68 // pred_region
          _
        $region73: #{convt_bn_relu.3} parent=68 // pred_fallthru
          _
        %s236 = smul.u32 64, %s19
        %p237 = scmp.lt.s32.totalorder %s236, 63
        %s238 = scalar_select %p237, %s236, 63
        %s239 = smul.addr %s238, 4
        %s240 = scalar_lea.vmem %s0, %s239
        %p241 = pneg %p47
        %p242 = pneg %p44
        %s243 = sand.u32 %s60, 1
        %s244 = sand.u32 %s60, 1
        %s245 = smul.addr %s244, 16
        %s246 = scalar_lea.vmem [#allocation2], %s245
        %p247 = pneg %p73
        %p248 = pneg %p70
        %p249 = scmp.lt.s32.totalorder %s18, 1
        %s250 = scalar_select %p249, %s18, 1
        %s251 = smul.addr %s250, 2
        %s252 = scalar_lea.vmem %s2, %s251
        %p253 = pneg %p99
        %p254 = pneg %p96
        %p255 = pneg %p127
        %p256 = pneg %p124
        %s257 = sand.u32 %s114, 1
        %s258 = sand.u32 %s114, 1
        %s259 = smul.addr %s258, 512
        %s260 = scalar_lea.vmem [#allocation3], %s259
        %s261 = smul.u32 64, %s19
        %p262 = scmp.lt.s32.totalorder %s261, 63
        %s263 = scalar_select %p262, %s261, 63
        %s264 = smul.addr %s263, 4
        %s265 = scalar_lea.vmem %s0, %s264
        %s266 = smul.u32 64, %s19
        %p267 = scmp.lt.s32.totalorder %s18, 1
        %s268 = scalar_select %p267, %s18, 1
        %s269 = smul.addr %s268, 2
        %s270 = scalar_lea.vmem %s2, %s269
        %s271 = smul.u32 64, %s19
        %v273 = vld [vmem:[%s265] sm:$0xf]
        %v274 = vld [vmem:[%s265 + $0x4] sm:$0xf]
        %v275 = vld [vmem:[%s265 + $0x8] sm:$0xf]
        %v276 = vld [vmem:[%s265 + $0xc] sm:$0xf]
        %v277 = vld [vmem:[%s265 + $0x10] sm:$0xf]
        %v278 = vld [vmem:[%s265 + $0x14] sm:$0xf]
        %v279 = vld [vmem:[%s265 + $0x18] sm:$0xf]
        %v280 = vld [vmem:[%s265 + $0x1c] sm:$0xf]
        %v281 = vld [vmem:[%s265 + $0x20] sm:$0xf]
        %v282 = vld [vmem:[%s265 + $0x24] sm:$0xf]
        %v283 = vld [vmem:[%s265 + $0x28] sm:$0xf]
        %v284 = vld [vmem:[%s265 + $0x2c] sm:$0xf]
        %v285 = vld [vmem:[%s265 + $0x30] sm:$0xf]
        %v286 = vld [vmem:[%s265 + $0x34] sm:$0xf]
        %v287 = vld [vmem:[%s265 + $0x38] sm:$0xf]
        %v288 = vld [vmem:[%s265 + $0x3c] sm:$0xf]
        %v289 = vld [vmem:[%s265 + $0x40] sm:$0xf]
        %v290 = vld [vmem:[%s265 + $0x44] sm:$0xf]
        %v291 = vld [vmem:[%s265 + $0x48] sm:$0xf]
        %v292 = vld [vmem:[%s265 + $0x4c] sm:$0xf]
        %v293 = vld [vmem:[%s265 + $0x50] sm:$0xf]
        %v294 = vld [vmem:[%s265 + $0x54] sm:$0xf]
        %v295 = vld [vmem:[%s265 + $0x58] sm:$0xf]
        %v296 = vld [vmem:[%s265 + $0x5c] sm:$0xf]
        %v297 = vld [vmem:[%s265 + $0x60] sm:$0xf]
        %v298 = vld [vmem:[%s265 + $0x64] sm:$0xf]
        %v299 = vld [vmem:[%s265 + $0x68] sm:$0xf]
        %v300 = vld [vmem:[%s265 + $0x6c] sm:$0xf]
        %v301 = vld [vmem:[%s265 + $0x70] sm:$0xf]
        %v302 = vld [vmem:[%s265 + $0x74] sm:$0xf]
        %v303 = vld [vmem:[%s265 + $0x78] sm:$0xf]
        %v304 = vld [vmem:[%s265 + $0x7c] sm:$0xf]
        %v305 = vld [vmem:[%s265 + $0x80] sm:$0xf]
        %v306 = vld [vmem:[%s265 + $0x84] sm:$0xf]
        %v307 = vld [vmem:[%s265 + $0x88] sm:$0xf]
        %v308 = vld [vmem:[%s265 + $0x8c] sm:$0xf]
        %v309 = vld [vmem:[%s265 + $0x90] sm:$0xf]
        %v310 = vld [vmem:[%s265 + $0x94] sm:$0xf]
        %v311 = vld [vmem:[%s265 + $0x98] sm:$0xf]
        %v312 = vld [vmem:[%s265 + $0x9c] sm:$0xf]
        %v313 = vld [vmem:[%s265 + $0xa0] sm:$0xf]
        %v314 = vld [vmem:[%s265 + $0xa4] sm:$0xf]
        %v315 = vld [vmem:[%s265 + $0xa8] sm:$0xf]
        %v316 = vld [vmem:[%s265 + $0xac] sm:$0xf]
        %v317 = vld [vmem:[%s265 + $0xb0] sm:$0xf]
        %v318 = vld [vmem:[%s265 + $0xb4] sm:$0xf]
        %v319 = vld [vmem:[%s265 + $0xb8] sm:$0xf]
        %v320 = vld [vmem:[%s265 + $0xbc] sm:$0xf]
        %v321 = vld [vmem:[%s265 + $0xc0] sm:$0xf]
        %v322 = vld [vmem:[%s265 + $0xc4] sm:$0xf]
        %v323 = vld [vmem:[%s265 + $0xc8] sm:$0xf]
        %v324 = vld [vmem:[%s265 + $0xcc] sm:$0xf]
        %v325 = vld [vmem:[%s265 + $0xd0] sm:$0xf]
        %v326 = vld [vmem:[%s265 + $0xd4] sm:$0xf]
        %v327 = vld [vmem:[%s265 + $0xd8] sm:$0xf]
        %v328 = vld [vmem:[%s265 + $0xdc] sm:$0xf]
        %v329 = vld [vmem:[%s265 + $0xe0] sm:$0xf]
        %v330 = vld [vmem:[%s265 + $0xe4] sm:$0xf]
        %v331 = vld [vmem:[%s265 + $0xe8] sm:$0xf]
        %v332 = vld [vmem:[%s265 + $0xec] sm:$0xf]
        %v333 = vld [vmem:[%s265 + $0xf0] sm:$0xf]
        %v334 = vld [vmem:[%s265 + $0xf4] sm:$0xf]
        %v335 = vld [vmem:[%s265 + $0xf8] sm:$0xf]
        %v336 = vld [vmem:[%s265 + $0xfc] sm:$0xf]
        %v337 = vld [vmem:[%s232] sm:$0xf]
        %v338 = vld [vmem:[%s232 + $0x4] sm:$0xf]
        %v339 = vld [vmem:[%s232 + $0x8] sm:$0xf]
        %v340 = vld [vmem:[%s232 + $0xc] sm:$0xf]
        %v405 = vunpack.c.l.b16 %v273
        %v406 = vunpack.c.l.b16 %v274
        %v407 = vunpack.c.l.b16 %v275
        %v408 = vunpack.c.l.b16 %v276
        %v409 = vunpack.c.l.b16 %v277
        %v410 = vunpack.c.l.b16 %v278
        %v411 = vunpack.c.l.b16 %v279
        %v412 = vunpack.c.l.b16 %v280
        %v413 = vunpack.c.l.b16 %v281
        %v414 = vunpack.c.l.b16 %v282
        %v415 = vunpack.c.l.b16 %v283
        %v416 = vunpack.c.l.b16 %v284
        %v417 = vunpack.c.l.b16 %v285
        %v418 = vunpack.c.l.b16 %v286
        %v419 = vunpack.c.l.b16 %v287
        %v420 = vunpack.c.l.b16 %v288
        %v421 = vunpack.c.l.b16 %v289
        %v422 = vunpack.c.l.b16 %v290
        %v423 = vunpack.c.l.b16 %v291
        %v424 = vunpack.c.l.b16 %v292
        %v425 = vunpack.c.l.b16 %v293
        %v426 = vunpack.c.l.b16 %v294
        %v427 = vunpack.c.l.b16 %v295
        %v428 = vunpack.c.l.b16 %v296
        %v429 = vunpack.c.l.b16 %v297
        %v430 = vunpack.c.l.b16 %v298
        %v431 = vunpack.c.l.b16 %v299
        %v432 = vunpack.c.l.b16 %v300
        %v433 = vunpack.c.l.b16 %v301
        %v434 = vunpack.c.l.b16 %v302
        %v435 = vunpack.c.l.b16 %v303
        %v436 = vunpack.c.l.b16 %v304
        %v437 = vunpack.c.l.b16 %v305
        %v438 = vunpack.c.l.b16 %v306
        %v439 = vunpack.c.l.b16 %v307
        %v440 = vunpack.c.l.b16 %v308
        %v441 = vunpack.c.l.b16 %v309
        %v442 = vunpack.c.l.b16 %v310
        %v443 = vunpack.c.l.b16 %v311
        %v444 = vunpack.c.l.b16 %v312
        %v445 = vunpack.c.l.b16 %v313
        %v446 = vunpack.c.l.b16 %v314
        %v447 = vunpack.c.l.b16 %v315
        %v448 = vunpack.c.l.b16 %v316
        %v449 = vunpack.c.l.b16 %v317
        %v450 = vunpack.c.l.b16 %v318
        %v451 = vunpack.c.l.b16 %v319
        %v452 = vunpack.c.l.b16 %v320
        %v453 = vunpack.c.l.b16 %v321
        %v454 = vunpack.c.l.b16 %v322
        %v455 = vunpack.c.l.b16 %v323
        %v456 = vunpack.c.l.b16 %v324
        %v457 = vunpack.c.l.b16 %v325
        %v458 = vunpack.c.l.b16 %v326
        %v459 = vunpack.c.l.b16 %v327
        %v460 = vunpack.c.l.b16 %v328
        %v461 = vunpack.c.l.b16 %v329
        %v462 = vunpack.c.l.b16 %v330
        %v463 = vunpack.c.l.b16 %v331
        %v464 = vunpack.c.l.b16 %v332
        %v465 = vunpack.c.l.b16 %v333
        %v466 = vunpack.c.l.b16 %v334
        %v467 = vunpack.c.l.b16 %v335
        %v468 = vunpack.c.l.b16 %v336
        %v469 = vpack.c.b16 %v406, %v405
        %v470 = vpack.c.b16 %v408, %v407
        %v471 = vpack.c.b16 %v410, %v409
        %v472 = vpack.c.b16 %v412, %v411
        %v473 = vpack.c.b16 %v414, %v413
        %v474 = vpack.c.b16 %v416, %v415
        %v475 = vpack.c.b16 %v418, %v417
        %v476 = vpack.c.b16 %v420, %v419
        %v477 = vpack.c.b16 %v422, %v421
        %v478 = vpack.c.b16 %v424, %v423
        %v479 = vpack.c.b16 %v426, %v425
        %v480 = vpack.c.b16 %v428, %v427
        %v481 = vpack.c.b16 %v430, %v429
        %v482 = vpack.c.b16 %v432, %v431
        %v483 = vpack.c.b16 %v434, %v433
        %v484 = vpack.c.b16 %v436, %v435
        %v485 = vpack.c.b16 %v438, %v437
        %v486 = vpack.c.b16 %v440, %v439
        %v487 = vpack.c.b16 %v442, %v441
        %v488 = vpack.c.b16 %v444, %v443
        %v489 = vpack.c.b16 %v446, %v445
        %v490 = vpack.c.b16 %v448, %v447
        %v491 = vpack.c.b16 %v450, %v449
        %v492 = vpack.c.b16 %v452, %v451
        %v493 = vpack.c.b16 %v454, %v453
        %v494 = vpack.c.b16 %v456, %v455
        %v495 = vpack.c.b16 %v458, %v457
        %v496 = vpack.c.b16 %v460, %v459
        %v497 = vpack.c.b16 %v462, %v461
        %v498 = vpack.c.b16 %v464, %v463
        %v499 = vpack.c.b16 %v466, %v465
        %v500 = vpack.c.b16 %v468, %v467
        %v505 = vunpack.c.l.b16 %v337
        %v506 = vunpack.c.l.b16 %v338
        %v507 = vunpack.c.l.b16 %v339
        %v508 = vunpack.c.l.b16 %v340
        %v509 = vpack.c.b16 %v506, %v505
        %v510 = vpack.c.b16 %v508, %v507
        %vm513 = vcmask 261120
        %v515 = vsel %vm513, %v469, 0
        %v518 = vsel %vm513, %v470, 0
        %v521 = vsel %vm513, %v471, 0
        %v524 = vsel %vm513, %v472, 0
        %v527 = vsel %vm513, %v473, 0
        %v530 = vsel %vm513, %v474, 0
        %v533 = vsel %vm513, %v475, 0
        %v536 = vsel %vm513, %v476, 0
        %v539 = vsel %vm513, %v477, 0
        %v542 = vsel %vm513, %v478, 0
        %v545 = vsel %vm513, %v479, 0
        %v548 = vsel %vm513, %v480, 0
        %v551 = vsel %vm513, %v481, 0
        %v554 = vsel %vm513, %v482, 0
        %v557 = vsel %vm513, %v483, 0
        %v560 = vsel %vm513, %v484, 0
        %v563 = vsel %vm513, %v485, 0
        %v566 = vsel %vm513, %v486, 0
        %v569 = vsel %vm513, %v487, 0
        %v572 = vsel %vm513, %v488, 0
        %v575 = vsel %vm513, %v489, 0
        %v578 = vsel %vm513, %v490, 0
        %v581 = vsel %vm513, %v491, 0
        %v584 = vsel %vm513, %v492, 0
        %v587 = vsel %vm513, %v493, 0
        %v590 = vsel %vm513, %v494, 0
        %v593 = vsel %vm513, %v495, 0
        %v596 = vsel %vm513, %v496, 0
        %v599 = vsel %vm513, %v497, 0
        %v602 = vsel %vm513, %v498, 0
        %v605 = vsel %vm513, %v499, 0
        %v608 = vsel %vm513, %v500, 0
        %610 = vmatprep.subr.bf16.mxu0 0
        %611 = vmatpush1.bf16.msra.mxu0 %v509
        %612 = vmatprep.subr.bf16.mxu0 0
        %613 = vmatpush1.bf16.msra.mxu0 %v510
        %614 = vmatprep.subr.bf16.mxu0 0
        %615 = vmatpush1.bf16.msra.mxu0 0
        %616 = vmatprep.subr.bf16.mxu0 0
        %617 = vmatpush1.bf16.msra.mxu0 0
        %618 = vmatprep.subr.bf16.mxu0 0
        %619 = vmatpush1.bf16.msra.mxu0 0
        %620 = vmatprep.subr.bf16.mxu0 0
        %621 = vmatpush1.bf16.msra.mxu0 0
        %622 = vmatprep.subr.bf16.mxu0 0
        %623 = vmatpush1.bf16.msra.mxu0 0
        %624 = vmatprep.subr.bf16.mxu0 0
        %625 = vmatpush1.bf16.msra.mxu0 0
        %626 = vmatprep.subr.bf16.mxu0 0
        %627 = vmatpush1.bf16.msra.mxu0 0
        %628 = vmatprep.subr.bf16.mxu0 0
        %629 = vmatpush1.bf16.msra.mxu0 0
        %630 = vmatprep.subr.bf16.mxu0 0
        %631 = vmatpush1.bf16.msra.mxu0 0
        %632 = vmatprep.subr.bf16.mxu0 0
        %633 = vmatpush1.bf16.msra.mxu0 0
        %634 = vmatprep.subr.bf16.mxu0 0
        %635 = vmatpush1.bf16.msra.mxu0 0
        %636 = vmatprep.subr.bf16.mxu0 0
        %637 = vmatpush1.bf16.msra.mxu0 0
        %638 = vmatprep.subr.bf16.mxu0 0
        %639 = vmatpush1.bf16.msra.mxu0 0
        %640 = vmatprep.subr.bf16.mxu0 0
        %641 = vmatpush1.bf16.msra.mxu0 0
        %642 = vmatprep.mubr.bf16.mxu0 0
        %643 = vmatmul.mubr.bf16.gmra.mrb[0].mxu0 %v515
        %v644 = vpop.f32.mrb[0].mxu0
        %v645 = vadd.f32 0.0, %v644
        %v646 = vpop.f32.mrb[0].mxu0
        %v647 = vpop.f32.mrb[0].mxu0
        %v648 = vadd.f32 0.0, %v647
        %v649 = vpop.f32.mrb[0].mxu0
        %650 = vmatprep.mubr.bf16.mxu0 0
        %651 = vmatmul.mubr.bf16.gmra.mrb[0].mxu0 %v518
        %v652 = vpop.f32.mrb[0].mxu0
        %v653 = vadd.f32 0.0, %v652
        %v654 = vpop.f32.mrb[0].mxu0
        %v655 = vpop.f32.mrb[0].mxu0
        %v656 = vadd.f32 0.0, %v655
        %v657 = vpop.f32.mrb[0].mxu0
        %658 = vmatprep.mubr.bf16.mxu0 0
        %659 = vmatmul.mubr.bf16.gmra.mrb[0].mxu0 %v521
        %v660 = vpop.f32.mrb[0].mxu0
        %v661 = vadd.f32 0.0, %v660
        %v662 = vpop.f32.mrb[0].mxu0
        %v663 = vpop.f32.mrb[0].mxu0
        %v664 = vadd.f32 0.0, %v663
        %v665 = vpop.f32.mrb[0].mxu0
        %666 = vmatprep.mubr.bf16.mxu0 0
        %667 = vmatmul.mubr.bf16.gmra.mrb[0].mxu0 %v524
        %v668 = vpop.f32.mrb[0].mxu0
        %v669 = vadd.f32 0.0, %v668
        %v670 = vpop.f32.mrb[0].mxu0
        %v671 = vpop.f32.mrb[0].mxu0
        %v672 = vadd.f32 0.0, %v671
        %v673 = vpop.f32.mrb[0].mxu0
        %674 = vmatprep.mubr.bf16.mxu0 0
        %675 = vmatmul.mubr.bf16.gmra.mrb[0].mxu0 %v527
        %v676 = vpop.f32.mrb[0].mxu0
        %v677 = vadd.f32 0.0, %v676
        %v678 = vpop.f32.mrb[0].mxu0
        %v679 = vpop.f32.mrb[0].mxu0
        %v680 = vadd.f32 0.0, %v679
        %v681 = vpop.f32.mrb[0].mxu0
        %682 = vmatprep.mubr.bf16.mxu0 0
        %683 = vmatmul.mubr.bf16.gmra.mrb[0].mxu0 %v530
        %v684 = vpop.f32.mrb[0].mxu0
        %v685 = vadd.f32 0.0, %v684
        %v686 = vpop.f32.mrb[0].mxu0
        %v687 = vpop.f32.mrb[0].mxu0
        %v688 = vadd.f32 0.0, %v687
        %v689 = vpop.f32.mrb[0].mxu0
        %690 = vmatprep.mubr.bf16.mxu0 0
        %691 = vmatmul.mubr.bf16.gmra.mrb[0].mxu0 %v533
        %v692 = vpop.f32.mrb[0].mxu0
        %v693 = vadd.f32 0.0, %v692
        %v694 = vpop.f32.mrb[0].mxu0
        %v695 = vpop.f32.mrb[0].mxu0
        %v696 = vadd.f32 0.0, %v695
        %v697 = vpop.f32.mrb[0].mxu0
        %698 = vmatprep.mubr.bf16.mxu0 0
        %699 = vmatmul.mubr.bf16.gmra.mrb[0].mxu0 %v536
        %v700 = vpop.f32.mrb[0].mxu0
        %v701 = vadd.f32 0.0, %v700
        %v702 = vpop.f32.mrb[0].mxu0
        %v703 = vpop.f32.mrb[0].mxu0
        %v704 = vadd.f32 0.0, %v703
        %v705 = vpop.f32.mrb[0].mxu0
        %706 = vmatprep.mubr.bf16.mxu0 0
        %707 = vmatmul.mubr.bf16.gmra.mrb[0].mxu0 %v539
        %v708 = vpop.f32.mrb[0].mxu0
        %v709 = vadd.f32 0.0, %v708
        %v710 = vpop.f32.mrb[0].mxu0
        %v711 = vpop.f32.mrb[0].mxu0
        %v712 = vadd.f32 0.0, %v711
        %v713 = vpop.f32.mrb[0].mxu0
        %714 = vmatprep.mubr.bf16.mxu0 0
        %715 = vmatmul.mubr.bf16.gmra.mrb[0].mxu0 %v542
        %v716 = vpop.f32.mrb[0].mxu0
        %v717 = vadd.f32 0.0, %v716
        %v718 = vpop.f32.mrb[0].mxu0
        %v719 = vpop.f32.mrb[0].mxu0
        %v720 = vadd.f32 0.0, %v719
        %v721 = vpop.f32.mrb[0].mxu0
        %722 = vmatprep.mubr.bf16.mxu0 0
        %723 = vmatmul.mubr.bf16.gmra.mrb[0].mxu0 %v545
        %v724 = vpop.f32.mrb[0].mxu0
        %v725 = vadd.f32 0.0, %v724
        %v726 = vpop.f32.mrb[0].mxu0
        %v727 = vpop.f32.mrb[0].mxu0
        %v728 = vadd.f32 0.0, %v727
        %v729 = vpop.f32.mrb[0].mxu0
        %730 = vmatprep.mubr.bf16.mxu0 0
        %731 = vmatmul.mubr.bf16.gmra.mrb[0].mxu0 %v548
        %v732 = vpop.f32.mrb[0].mxu0
        %v733 = vadd.f32 0.0, %v732
        %v734 = vpop.f32.mrb[0].mxu0
        %v735 = vpop.f32.mrb[0].mxu0
        %v736 = vadd.f32 0.0, %v735
        %v737 = vpop.f32.mrb[0].mxu0
        %738 = vmatprep.mubr.bf16.mxu0 0
        %739 = vmatmul.mubr.bf16.gmra.mrb[0].mxu0 %v551
        %v740 = vpop.f32.mrb[0].mxu0
        %v741 = vadd.f32 0.0, %v740
        %v742 = vpop.f32.mrb[0].mxu0
        %v743 = vpop.f32.mrb[0].mxu0
        %v744 = vadd.f32 0.0, %v743
        %v745 = vpop.f32.mrb[0].mxu0
        %746 = vmatprep.mubr.bf16.mxu0 0
        %747 = vmatmul.mubr.bf16.gmra.mrb[0].mxu0 %v554
        %v748 = vpop.f32.mrb[0].mxu0
        %v749 = vadd.f32 0.0, %v748
        %v750 = vpop.f32.mrb[0].mxu0
        %v751 = vpop.f32.mrb[0].mxu0
        %v752 = vadd.f32 0.0, %v751
        %v753 = vpop.f32.mrb[0].mxu0
        %754 = vmatprep.mubr.bf16.mxu0 0
        %755 = vmatmul.mubr.bf16.gmra.mrb[0].mxu0 %v557
        %v756 = vpop.f32.mrb[0].mxu0
        %v757 = vadd.f32 0.0, %v756
        %v758 = vpop.f32.mrb[0].mxu0
        %v759 = vpop.f32.mrb[0].mxu0
        %v760 = vadd.f32 0.0, %v759
        %v761 = vpop.f32.mrb[0].mxu0
        %762 = vmatprep.mubr.bf16.mxu0 0
        %763 = vmatmul.mubr.bf16.gmra.mrb[0].mxu0 %v560
        %v764 = vpop.f32.mrb[0].mxu0
        %v765 = vadd.f32 0.0, %v764
        %v766 = vpop.f32.mrb[0].mxu0
        %v767 = vpop.f32.mrb[0].mxu0
        %v768 = vadd.f32 0.0, %v767
        %v769 = vpop.f32.mrb[0].mxu0
        %770 = vmatprep.mubr.bf16.mxu0 0
        %771 = vmatmul.mubr.bf16.gmra.mrb[0].mxu0 %v563
        %v772 = vpop.f32.mrb[0].mxu0
        %v773 = vadd.f32 0.0, %v772
        %v774 = vpop.f32.mrb[0].mxu0
        %v775 = vpop.f32.mrb[0].mxu0
        %v776 = vadd.f32 0.0, %v775
        %v777 = vpop.f32.mrb[0].mxu0
        %778 = vmatprep.mubr.bf16.mxu0 0
        %779 = vmatmul.mubr.bf16.gmra.mrb[0].mxu0 %v566
        %v780 = vpop.f32.mrb[0].mxu0
        %v781 = vadd.f32 0.0, %v780
        %v782 = vpop.f32.mrb[0].mxu0
        %v783 = vpop.f32.mrb[0].mxu0
        %v784 = vadd.f32 0.0, %v783
        %v785 = vpop.f32.mrb[0].mxu0
        %786 = vmatprep.mubr.bf16.mxu0 0
        %787 = vmatmul.mubr.bf16.gmra.mrb[0].mxu0 %v569
        %v788 = vpop.f32.mrb[0].mxu0
        %v789 = vadd.f32 0.0, %v788
        %v790 = vpop.f32.mrb[0].mxu0
        %v791 = vpop.f32.mrb[0].mxu0
        %v792 = vadd.f32 0.0, %v791
        %v793 = vpop.f32.mrb[0].mxu0
        %794 = vmatprep.mubr.bf16.mxu0 0
        %795 = vmatmul.mubr.bf16.gmra.mrb[0].mxu0 %v572
        %v796 = vpop.f32.mrb[0].mxu0
        %v797 = vadd.f32 0.0, %v796
        %v798 = vpop.f32.mrb[0].mxu0
        %v799 = vpop.f32.mrb[0].mxu0
        %v800 = vadd.f32 0.0, %v799
        %v801 = vpop.f32.mrb[0].mxu0
        %802 = vmatprep.mubr.bf16.mxu0 0
        %803 = vmatmul.mubr.bf16.gmra.mrb[0].mxu0 %v575
        %v804 = vpop.f32.mrb[0].mxu0
        %v805 = vadd.f32 0.0, %v804
        %v806 = vpop.f32.mrb[0].mxu0
        %v807 = vpop.f32.mrb[0].mxu0
        %v808 = vadd.f32 0.0, %v807
        %v809 = vpop.f32.mrb[0].mxu0
        %810 = vmatprep.mubr.bf16.mxu0 0
        %811 = vmatmul.mubr.bf16.gmra.mrb[0].mxu0 %v578
        %v812 = vpop.f32.mrb[0].mxu0
        %v813 = vadd.f32 0.0, %v812
        %v814 = vpop.f32.mrb[0].mxu0
        %v815 = vpop.f32.mrb[0].mxu0
        %v816 = vadd.f32 0.0, %v815
        %v817 = vpop.f32.mrb[0].mxu0
        %818 = vmatprep.mubr.bf16.mxu0 0
        %819 = vmatmul.mubr.bf16.gmra.mrb[0].mxu0 %v581
        %v820 = vpop.f32.mrb[0].mxu0
        %v821 = vadd.f32 0.0, %v820
        %v822 = vpop.f32.mrb[0].mxu0
        %v823 = vpop.f32.mrb[0].mxu0
        %v824 = vadd.f32 0.0, %v823
        %v825 = vpop.f32.mrb[0].mxu0
        %826 = vmatprep.mubr.bf16.mxu0 0
        %827 = vmatmul.mubr.bf16.gmra.mrb[0].mxu0 %v584
        %v828 = vpop.f32.mrb[0].mxu0
        %v829 = vadd.f32 0.0, %v828
        %v830 = vpop.f32.mrb[0].mxu0
        %v831 = vpop.f32.mrb[0].mxu0
        %v832 = vadd.f32 0.0, %v831
        %v833 = vpop.f32.mrb[0].mxu0
        %834 = vmatprep.mubr.bf16.mxu0 0
        %835 = vmatmul.mubr.bf16.gmra.mrb[0].mxu0 %v587
        %v836 = vpop.f32.mrb[0].mxu0
        %v837 = vadd.f32 0.0, %v836
        %v838 = vpop.f32.mrb[0].mxu0
        %v839 = vpop.f32.mrb[0].mxu0
        %v840 = vadd.f32 0.0, %v839
        %v841 = vpop.f32.mrb[0].mxu0
        %842 = vmatprep.mubr.bf16.mxu0 0
        %843 = vmatmul.mubr.bf16.gmra.mrb[0].mxu0 %v590
        %v844 = vpop.f32.mrb[0].mxu0
        %v845 = vadd.f32 0.0, %v844
        %v846 = vpop.f32.mrb[0].mxu0
        %v847 = vpop.f32.mrb[0].mxu0
        %v848 = vadd.f32 0.0, %v847
        %v849 = vpop.f32.mrb[0].mxu0
        %850 = vmatprep.mubr.bf16.mxu0 0
        %851 = vmatmul.mubr.bf16.gmra.mrb[0].mxu0 %v593
        %v852 = vpop.f32.mrb[0].mxu0
        %v853 = vadd.f32 0.0, %v852
        %v854 = vpop.f32.mrb[0].mxu0
        %v855 = vpop.f32.mrb[0].mxu0
        %v856 = vadd.f32 0.0, %v855
        %v857 = vpop.f32.mrb[0].mxu0
        %858 = vmatprep.mubr.bf16.mxu0 0
        %859 = vmatmul.mubr.bf16.gmra.mrb[0].mxu0 %v596
        %v860 = vpop.f32.mrb[0].mxu0
        %v861 = vadd.f32 0.0, %v860
        %v862 = vpop.f32.mrb[0].mxu0
        %v863 = vpop.f32.mrb[0].mxu0
        %v864 = vadd.f32 0.0, %v863
        %v865 = vpop.f32.mrb[0].mxu0
        %866 = vmatprep.mubr.bf16.mxu0 0
        %867 = vmatmul.mubr.bf16.gmra.mrb[0].mxu0 %v599
        %v868 = vpop.f32.mrb[0].mxu0
        %v869 = vadd.f32 0.0, %v868
        %v870 = vpop.f32.mrb[0].mxu0
        %v871 = vpop.f32.mrb[0].mxu0
        %v872 = vadd.f32 0.0, %v871
        %v873 = vpop.f32.mrb[0].mxu0
        %874 = vmatprep.mubr.bf16.mxu0 0
        %875 = vmatmul.mubr.bf16.gmra.mrb[0].mxu0 %v602
        %v876 = vpop.f32.mrb[0].mxu0
        %v877 = vadd.f32 0.0, %v876
        %v878 = vpop.f32.mrb[0].mxu0
        %v879 = vpop.f32.mrb[0].mxu0
        %v880 = vadd.f32 0.0, %v879
        %v881 = vpop.f32.mrb[0].mxu0
        %882 = vmatprep.mubr.bf16.mxu0 0
        %883 = vmatmul.mubr.bf16.gmra.mrb[0].mxu0 %v605
        %v884 = vpop.f32.mrb[0].mxu0
        %v885 = vadd.f32 0.0, %v884
        %v886 = vpop.f32.mrb[0].mxu0
        %v887 = vpop.f32.mrb[0].mxu0
        %v888 = vadd.f32 0.0, %v887
        %v889 = vpop.f32.mrb[0].mxu0
        %890 = vmatprep.mubr.bf16.mxu0 0
        %891 = vmatmul.mubr.bf16.gmra.mrb[0].mxu0 %v608
        %v892 = vpop.f32.mrb[0].mxu0
        %v893 = vadd.f32 0.0, %v892
        %v894 = vpop.f32.mrb[0].mxu0
        %v895 = vpop.f32.mrb[0].mxu0
        %v896 = vadd.f32 0.0, %v895
        %v897 = vpop.f32.mrb[0].mxu0
        %898 = vdwg.mxu0
        %v899 = vld [vmem:[%s270] sm:$0x1]
        %v900 = vlaneseq
        %v901 = vshrl.u32 %v900, 7
        %v902 = vsub.s32 0, %v901
        %v903 = vrot.slane %v899, %v902
        %v904 = vmul.f32 %v645, %v903
        %v905 = vmul.f32 %v648, %v903
        %v906 = vmul.f32 %v653, %v903
        %v907 = vmul.f32 %v656, %v903
        %v908 = vmul.f32 %v661, %v903
        %v909 = vmul.f32 %v664, %v903
        %v910 = vmul.f32 %v669, %v903
        %v911 = vmul.f32 %v672, %v903
        %v912 = vmul.f32 %v677, %v903
        %v913 = vmul.f32 %v680, %v903
        %v914 = vmul.f32 %v685, %v903
        %v915 = vmul.f32 %v688, %v903
        %v916 = vmul.f32 %v693, %v903
        %v917 = vmul.f32 %v696, %v903
        %v918 = vmul.f32 %v701, %v903
        %v919 = vmul.f32 %v704, %v903
        %v920 = vmul.f32 %v709, %v903
        %v921 = vmul.f32 %v712, %v903
        %v922 = vmul.f32 %v717, %v903
        %v923 = vmul.f32 %v720, %v903
        %v924 = vmul.f32 %v725, %v903
        %v925 = vmul.f32 %v728, %v903
        %v926 = vmul.f32 %v733, %v903
        %v927 = vmul.f32 %v736, %v903
        %v928 = vmul.f32 %v741, %v903
        %v929 = vmul.f32 %v744, %v903
        %v930 = vmul.f32 %v749, %v903
        %v931 = vmul.f32 %v752, %v903
        %v932 = vmul.f32 %v757, %v903
        %v933 = vmul.f32 %v760, %v903
        %v934 = vmul.f32 %v765, %v903
        %v935 = vmul.f32 %v768, %v903
        %v936 = vmul.f32 %v773, %v903
        %v937 = vmul.f32 %v776, %v903
        %v938 = vmul.f32 %v781, %v903
        %v939 = vmul.f32 %v784, %v903
        %v940 = vmul.f32 %v789, %v903
        %v941 = vmul.f32 %v792, %v903
        %v942 = vmul.f32 %v797, %v903
        %v943 = vmul.f32 %v800, %v903
        %v944 = vmul.f32 %v805, %v903
        %v945 = vmul.f32 %v808, %v903
        %v946 = vmul.f32 %v813, %v903
        %v947 = vmul.f32 %v816, %v903
        %v948 = vmul.f32 %v821, %v903
        %v949 = vmul.f32 %v824, %v903
        %v950 = vmul.f32 %v829, %v903
        %v951 = vmul.f32 %v832, %v903
        %v952 = vmul.f32 %v837, %v903
        %v953 = vmul.f32 %v840, %v903
        %v954 = vmul.f32 %v845, %v903
        %v955 = vmul.f32 %v848, %v903
        %v956 = vmul.f32 %v853, %v903
        %v957 = vmul.f32 %v856, %v903
        %v958 = vmul.f32 %v861, %v903
        %v959 = vmul.f32 %v864, %v903
        %v960 = vmul.f32 %v869, %v903
        %v961 = vmul.f32 %v872, %v903
        %v962 = vmul.f32 %v877, %v903
        %v963 = vmul.f32 %v880, %v903
        %v964 = vmul.f32 %v885, %v903
        %v965 = vmul.f32 %v888, %v903
        %v966 = vmul.f32 %v893, %v903
        %v967 = vmul.f32 %v896, %v903
        %v968 = vld [vmem:[%s270 + $0x1] sm:$0x1]
        %v969 = vlaneseq
        %v970 = vshrl.u32 %v969, 7
        %v971 = vsub.s32 0, %v970
        %v972 = vrot.slane %v968, %v971
        %v973 = vadd.f32 %v904, %v972
        %v974 = vadd.f32 %v905, %v972
        %v975 = vadd.f32 %v906, %v972
        %v976 = vadd.f32 %v907, %v972
        %v977 = vadd.f32 %v908, %v972
        %v978 = vadd.f32 %v909, %v972
        %v979 = vadd.f32 %v910, %v972
        %v980 = vadd.f32 %v911, %v972
        %v981 = vadd.f32 %v912, %v972
        %v982 = vadd.f32 %v913, %v972
        %v983 = vadd.f32 %v914, %v972
        %v984 = vadd.f32 %v915, %v972
        %v985 = vadd.f32 %v916, %v972
        %v986 = vadd.f32 %v917, %v972
        %v987 = vadd.f32 %v918, %v972
        %v988 = vadd.f32 %v919, %v972
        %v989 = vadd.f32 %v920, %v972
        %v990 = vadd.f32 %v921, %v972
        %v991 = vadd.f32 %v922, %v972
        %v992 = vadd.f32 %v923, %v972
        %v993 = vadd.f32 %v924, %v972
        %v994 = vadd.f32 %v925, %v972
        %v995 = vadd.f32 %v926, %v972
        %v996 = vadd.f32 %v927, %v972
        %v997 = vadd.f32 %v928, %v972
        %v998 = vadd.f32 %v929, %v972
        %v999 = vadd.f32 %v930, %v972
        %v1000 = vadd.f32 %v931, %v972
        %v1001 = vadd.f32 %v932, %v972
        %v1002 = vadd.f32 %v933, %v972
        %v1003 = vadd.f32 %v934, %v972
        %v1004 = vadd.f32 %v935, %v972
        %v1005 = vadd.f32 %v936, %v972
        %v1006 = vadd.f32 %v937, %v972
        %v1007 = vadd.f32 %v938, %v972
        %v1008 = vadd.f32 %v939, %v972
        %v1009 = vadd.f32 %v940, %v972
        %v1010 = vadd.f32 %v941, %v972
        %v1011 = vadd.f32 %v942, %v972
        %v1012 = vadd.f32 %v943, %v972
        %v1013 = vadd.f32 %v944, %v972
        %v1014 = vadd.f32 %v945, %v972
        %v1015 = vadd.f32 %v946, %v972
        %v1016 = vadd.f32 %v947, %v972
        %v1017 = vadd.f32 %v948, %v972
        %v1018 = vadd.f32 %v949, %v972
        %v1019 = vadd.f32 %v950, %v972
        %v1020 = vadd.f32 %v951, %v972
        %v1021 = vadd.f32 %v952, %v972
        %v1022 = vadd.f32 %v953, %v972
        %v1023 = vadd.f32 %v954, %v972
        %v1024 = vadd.f32 %v955, %v972
        %v1025 = vadd.f32 %v956, %v972
        %v1026 = vadd.f32 %v957, %v972
        %v1027 = vadd.f32 %v958, %v972
        %v1028 = vadd.f32 %v959, %v972
        %v1029 = vadd.f32 %v960, %v972
        %v1030 = vadd.f32 %v961, %v972
        %v1031 = vadd.f32 %v962, %v972
        %v1032 = vadd.f32 %v963, %v972
        %v1033 = vadd.f32 %v964, %v972
        %v1034 = vadd.f32 %v965, %v972
        %v1035 = vadd.f32 %v966, %v972
        %v1036 = vadd.f32 %v967, %v972
        %v1037 = vmax.f32 %v973, 0.0
        %v1038 = vmax.f32 %v974, 0.0
        %v1039 = vmax.f32 %v975, 0.0
        %v1040 = vmax.f32 %v976, 0.0
        %v1041 = vmax.f32 %v977, 0.0
        %v1042 = vmax.f32 %v978, 0.0
        %v1043 = vmax.f32 %v979, 0.0
        %v1044 = vmax.f32 %v980, 0.0
        %v1045 = vmax.f32 %v981, 0.0
        %v1046 = vmax.f32 %v982, 0.0
        %v1047 = vmax.f32 %v983, 0.0
        %v1048 = vmax.f32 %v984, 0.0
        %v1049 = vmax.f32 %v985, 0.0
        %v1050 = vmax.f32 %v986, 0.0
        %v1051 = vmax.f32 %v987, 0.0
        %v1052 = vmax.f32 %v988, 0.0
        %v1053 = vmax.f32 %v989, 0.0
        %v1054 = vmax.f32 %v990, 0.0
        %v1055 = vmax.f32 %v991, 0.0
        %v1056 = vmax.f32 %v992, 0.0
        %v1057 = vmax.f32 %v993, 0.0
        %v1058 = vmax.f32 %v994, 0.0
        %v1059 = vmax.f32 %v995, 0.0
        %v1060 = vmax.f32 %v996, 0.0
        %v1061 = vmax.f32 %v997, 0.0
        %v1062 = vmax.f32 %v998, 0.0
        %v1063 = vmax.f32 %v999, 0.0
        %v1064 = vmax.f32 %v1000, 0.0
        %v1065 = vmax.f32 %v1001, 0.0
        %v1066 = vmax.f32 %v1002, 0.0
        %v1067 = vmax.f32 %v1003, 0.0
        %v1068 = vmax.f32 %v1004, 0.0
        %v1069 = vmax.f32 %v1005, 0.0
        %v1070 = vmax.f32 %v1006, 0.0
        %v1071 = vmax.f32 %v1007, 0.0
        %v1072 = vmax.f32 %v1008, 0.0
        %v1073 = vmax.f32 %v1009, 0.0
        %v1074 = vmax.f32 %v1010, 0.0
        %v1075 = vmax.f32 %v1011, 0.0
        %v1076 = vmax.f32 %v1012, 0.0
        %v1077 = vmax.f32 %v1013, 0.0
        %v1078 = vmax.f32 %v1014, 0.0
        %v1079 = vmax.f32 %v1015, 0.0
        %v1080 = vmax.f32 %v1016, 0.0
        %v1081 = vmax.f32 %v1017, 0.0
        %v1082 = vmax.f32 %v1018, 0.0
        %v1083 = vmax.f32 %v1019, 0.0
        %v1084 = vmax.f32 %v1020, 0.0
        %v1085 = vmax.f32 %v1021, 0.0
        %v1086 = vmax.f32 %v1022, 0.0
        %v1087 = vmax.f32 %v1023, 0.0
        %v1088 = vmax.f32 %v1024, 0.0
        %v1089 = vmax.f32 %v1025, 0.0
        %v1090 = vmax.f32 %v1026, 0.0
        %v1091 = vmax.f32 %v1027, 0.0
        %v1092 = vmax.f32 %v1028, 0.0
        %v1093 = vmax.f32 %v1029, 0.0
        %v1094 = vmax.f32 %v1030, 0.0
        %v1095 = vmax.f32 %v1031, 0.0
        %v1096 = vmax.f32 %v1032, 0.0
        %v1097 = vmax.f32 %v1033, 0.0
        %v1098 = vmax.f32 %v1034, 0.0
        %v1099 = vmax.f32 %v1035, 0.0
        %v1100 = vmax.f32 %v1036, 0.0
        %1101 = vst [vmem:[%s260] sm:$0xff] %v1037
        %1102 = vst [vmem:[%s260 + $0x8] sm:$0xff] %v1038
        %1103 = vst [vmem:[%s260 + $0x10] sm:$0xff] %v1039
        %1104 = vst [vmem:[%s260 + $0x18] sm:$0xff] %v1040
        %1105 = vst [vmem:[%s260 + $0x20] sm:$0xff] %v1041
        %1106 = vst [vmem:[%s260 + $0x28] sm:$0xff] %v1042
        %1107 = vst [vmem:[%s260 + $0x30] sm:$0xff] %v1043
        %1108 = vst [vmem:[%s260 + $0x38] sm:$0xff] %v1044
        %1109 = vst [vmem:[%s260 + $0x40] sm:$0xff] %v1045
        %1110 = vst [vmem:[%s260 + $0x48] sm:$0xff] %v1046
        %1111 = vst [vmem:[%s260 + $0x50] sm:$0xff] %v1047
        %1112 = vst [vmem:[%s260 + $0x58] sm:$0xff] %v1048
        %1113 = vst [vmem:[%s260 + $0x60] sm:$0xff] %v1049
        %1114 = vst [vmem:[%s260 + $0x68] sm:$0xff] %v1050
        %1115 = vst [vmem:[%s260 + $0x70] sm:$0xff] %v1051
        %1116 = vst [vmem:[%s260 + $0x78] sm:$0xff] %v1052
        %1117 = vst [vmem:[%s260 + $0x80] sm:$0xff] %v1053
        %1118 = vst [vmem:[%s260 + $0x88] sm:$0xff] %v1054
        %1119 = vst [vmem:[%s260 + $0x90] sm:$0xff] %v1055
        %1120 = vst [vmem:[%s260 + $0x98] sm:$0xff] %v1056
        %1121 = vst [vmem:[%s260 + $0xa0] sm:$0xff] %v1057
        %1122 = vst [vmem:[%s260 + $0xa8] sm:$0xff] %v1058
        %1123 = vst [vmem:[%s260 + $0xb0] sm:$0xff] %v1059
        %1124 = vst [vmem:[%s260 + $0xb8] sm:$0xff] %v1060
        %1125 = vst [vmem:[%s260 + $0xc0] sm:$0xff] %v1061
        %1126 = vst [vmem:[%s260 + $0xc8] sm:$0xff] %v1062
        %1127 = vst [vmem:[%s260 + $0xd0] sm:$0xff] %v1063
        %1128 = vst [vmem:[%s260 + $0xd8] sm:$0xff] %v1064
        %1129 = vst [vmem:[%s260 + $0xe0] sm:$0xff] %v1065
        %1130 = vst [vmem:[%s260 + $0xe8] sm:$0xff] %v1066
        %1131 = vst [vmem:[%s260 + $0xf0] sm:$0xff] %v1067
        %1132 = vst [vmem:[%s260 + $0xf8] sm:$0xff] %v1068
        %1133 = vst [vmem:[%s260 + $0x100] sm:$0xff] %v1069
        %1134 = vst [vmem:[%s260 + $0x108] sm:$0xff] %v1070
        %1135 = vst [vmem:[%s260 + $0x110] sm:$0xff] %v1071
        %1136 = vst [vmem:[%s260 + $0x118] sm:$0xff] %v1072
        %1137 = vst [vmem:[%s260 + $0x120] sm:$0xff] %v1073
        %1138 = vst [vmem:[%s260 + $0x128] sm:$0xff] %v1074
        %1139 = vst [vmem:[%s260 + $0x130] sm:$0xff] %v1075
        %1140 = vst [vmem:[%s260 + $0x138] sm:$0xff] %v1076
        %1141 = vst [vmem:[%s260 + $0x140] sm:$0xff] %v1077
        %1142 = vst [vmem:[%s260 + $0x148] sm:$0xff] %v1078
        %1143 = vst [vmem:[%s260 + $0x150] sm:$0xff] %v1079
        %1144 = vst [vmem:[%s260 + $0x158] sm:$0xff] %v1080
        %1145 = vst [vmem:[%s260 + $0x160] sm:$0xff] %v1081
        %1146 = vst [vmem:[%s260 + $0x168] sm:$0xff] %v1082
        %1147 = vst [vmem:[%s260 + $0x170] sm:$0xff] %v1083
        %1148 = vst [vmem:[%s260 + $0x178] sm:$0xff] %v1084
        %1149 = vst [vmem:[%s260 + $0x180] sm:$0xff] %v1085
        %1150 = vst [vmem:[%s260 + $0x188] sm:$0xff] %v1086
        %1151 = vst [vmem:[%s260 + $0x190] sm:$0xff] %v1087
        %1152 = vst [vmem:[%s260 + $0x198] sm:$0xff] %v1088
        %1153 = vst [vmem:[%s260 + $0x1a0] sm:$0xff] %v1089
        %1154 = vst [vmem:[%s260 + $0x1a8] sm:$0xff] %v1090
        %1155 = vst [vmem:[%s260 + $0x1b0] sm:$0xff] %v1091
        %1156 = vst [vmem:[%s260 + $0x1b8] sm:$0xff] %v1092
        %1157 = vst [vmem:[%s260 + $0x1c0] sm:$0xff] %v1093
        %1158 = vst [vmem:[%s260 + $0x1c8] sm:$0xff] %v1094
        %1159 = vst [vmem:[%s260 + $0x1d0] sm:$0xff] %v1095
        %1160 = vst [vmem:[%s260 + $0x1d8] sm:$0xff] %v1096
        %1161 = vst [vmem:[%s260 + $0x1e0] sm:$0xff] %v1097
        %1162 = vst [vmem:[%s260 + $0x1e8] sm:$0xff] %v1098
        %1163 = vst [vmem:[%s260 + $0x1f0] sm:$0xff] %v1099
        %1164 = vst [vmem:[%s260 + $0x1f8] sm:$0xff] %v1100
        %s1165 = sand.u32 %s114, 1
        %s1166 = sand.u32 %s114, 1
        %s1167 = smul.addr %s1166, 512
        %s1168 = scalar_lea.vmem [#allocation3], %s1167
        // Predicated region
        $region74: #{convt_bn_relu.3} parent=68 // pred_check
          %p1169 = pneg %p124
        $region75: #{convt_bn_relu.3} parent=68 // pred_check_branch
          %1171 = sbr.rel (%p1169) target = $region77
        $region76: #{convt_bn_relu.3} parent=68 // pred_region
          %s1172 = smul.u32 64, %s19
          %s1173 = smul.addr %s1172, 2
          %s1174 = sadd.s32 %s18, %s1173
          %s1175 = smul.addr %s1174, 8
          %s1176 = scalar_lea.vmem %s3, %s1175
          // Predicated region
          $region78: #{convt_bn_relu.3} parent=76 // pred_check
            _
          $region79: #{convt_bn_relu.3} parent=76 // pred_check_branch
            %1178 = sbr.rel (0) target = $region81
          $region80: #{convt_bn_relu.3} parent=76 // pred_region
            // Predicated region
            $region82: #{convt_bn_relu.3} parent=80 // pred_check
              _
            $region83: #{convt_bn_relu.3} parent=80 // pred_check_branch
              %1180 = sbr.rel (0) target = $region85
            $region84: #{convt_bn_relu.3} parent=80 // pred_region
              // Predicated region
              $region97: #{convt_bn_relu.3} parent=84 // pred_check
                _
              $region98: #{convt_bn_relu.3} parent=84 // pred_check_branch
                %1321 = sbr.rel (0) target = $region100
              $region99: #{convt_bn_relu.3} parent=84 // pred_region
                loop: start=0, step=1, limit=1
                $region101: #{convt_bn_relu.3} parent=99 // loop_pre_header
                  _
                $region102: #{convt_bn_relu.3} parent=99 // loop_header
                  %s1323 = sphi 0, %s1327
                  %p1324 = scmp.ge.s32.totalorder %s1323, 1
                  %s1328 = sphi %s1168, %s1168
                  %s1329 = sphi %s1176, %s1176
                $region103: #{convt_bn_relu.3} parent=99 // loop_header_branch
                  %1326 = sbr.rel (%p1324) target = $region107
                $region104: #{convt_bn_relu.3} parent=99 // loop_body
                  %v1330 = vld [vmem:[%s1328] sm:$0xff]
                  %1331 = vst [vmem:[%s1329] sm:$0xff] %v1330
                  %v1332 = vld [vmem:[%s1328 + $0x8] sm:$0xff]
                  %1333 = vst [vmem:[%s1329 + $0x10] sm:$0xff] %v1332
                  %v1334 = vld [vmem:[%s1328 + $0x10] sm:$0xff]
                  %1335 = vst [vmem:[%s1329 + $0x20] sm:$0xff] %v1334
                  %v1336 = vld [vmem:[%s1328 + $0x18] sm:$0xff]
                  %1337 = vst [vmem:[%s1329 + $0x30] sm:$0xff] %v1336
                  %v1338 = vld [vmem:[%s1328 + $0x20] sm:$0xff]
                  %1339 = vst [vmem:[%s1329 + $0x40] sm:$0xff] %v1338
                  %v1340 = vld [vmem:[%s1328 + $0x28] sm:$0xff]
                  %1341 = vst [vmem:[%s1329 + $0x50] sm:$0xff] %v1340
                  %v1342 = vld [vmem:[%s1328 + $0x30] sm:$0xff]
                  %1343 = vst [vmem:[%s1329 + $0x60] sm:$0xff] %v1342
                  %v1344 = vld [vmem:[%s1328 + $0x38] sm:$0xff]
                  %1345 = vst [vmem:[%s1329 + $0x70] sm:$0xff] %v1344
                  %v1346 = vld [vmem:[%s1328 + $0x40] sm:$0xff]
                  %1347 = vst [vmem:[%s1329 + $0x80] sm:$0xff] %v1346
                  %v1348 = vld [vmem:[%s1328 + $0x48] sm:$0xff]
                  %1349 = vst [vmem:[%s1329 + $0x90] sm:$0xff] %v1348
                  %v1350 = vld [vmem:[%s1328 + $0x50] sm:$0xff]
                  %1351 = vst [vmem:[%s1329 + $0xa0] sm:$0xff] %v1350
                  %v1352 = vld [vmem:[%s1328 + $0x58] sm:$0xff]
                  %1353 = vst [vmem:[%s1329 + $0xb0] sm:$0xff] %v1352
                  %v1354 = vld [vmem:[%s1328 + $0x60] sm:$0xff]
                  %1355 = vst [vmem:[%s1329 + $0xc0] sm:$0xff] %v1354
                  %v1356 = vld [vmem:[%s1328 + $0x68] sm:$0xff]
                  %1357 = vst [vmem:[%s1329 + $0xd0] sm:$0xff] %v1356
                  %v1358 = vld [vmem:[%s1328 + $0x70] sm:$0xff]
                  %1359 = vst [vmem:[%s1329 + $0xe0] sm:$0xff] %v1358
                  %v1360 = vld [vmem:[%s1328 + $0x78] sm:$0xff]
                  %1361 = vst [vmem:[%s1329 + $0xf0] sm:$0xff] %v1360
                  %v1362 = vld [vmem:[%s1328 + $0x80] sm:$0xff]
                  %1363 = vst [vmem:[%s1329 + $0x100] sm:$0xff] %v1362
                  %v1364 = vld [vmem:[%s1328 + $0x88] sm:$0xff]
                  %1365 = vst [vmem:[%s1329 + $0x110] sm:$0xff] %v1364
                  %v1366 = vld [vmem:[%s1328 + $0x90] sm:$0xff]
                  %1367 = vst [vmem:[%s1329 + $0x120] sm:$0xff] %v1366
                  %v1368 = vld [vmem:[%s1328 + $0x98] sm:$0xff]
                  %1369 = vst [vmem:[%s1329 + $0x130] sm:$0xff] %v1368
                  %v1370 = vld [vmem:[%s1328 + $0xa0] sm:$0xff]
                  %1371 = vst [vmem:[%s1329 + $0x140] sm:$0xff] %v1370
                  %v1372 = vld [vmem:[%s1328 + $0xa8] sm:$0xff]
                  %1373 = vst [vmem:[%s1329 + $0x150] sm:$0xff] %v1372
                  %v1374 = vld [vmem:[%s1328 + $0xb0] sm:$0xff]
                  %1375 = vst [vmem:[%s1329 + $0x160] sm:$0xff] %v1374
                  %v1376 = vld [vmem:[%s1328 + $0xb8] sm:$0xff]
                  %1377 = vst [vmem:[%s1329 + $0x170] sm:$0xff] %v1376
                  %v1378 = vld [vmem:[%s1328 + $0xc0] sm:$0xff]
                  %1379 = vst [vmem:[%s1329 + $0x180] sm:$0xff] %v1378
                  %v1380 = vld [vmem:[%s1328 + $0xc8] sm:$0xff]
                  %1381 = vst [vmem:[%s1329 + $0x190] sm:$0xff] %v1380
                  %v1382 = vld [vmem:[%s1328 + $0xd0] sm:$0xff]
                  %1383 = vst [vmem:[%s1329 + $0x1a0] sm:$0xff] %v1382
                  %v1384 = vld [vmem:[%s1328 + $0xd8] sm:$0xff]
                  %1385 = vst [vmem:[%s1329 + $0x1b0] sm:$0xff] %v1384
                  %v1386 = vld [vmem:[%s1328 + $0xe0] sm:$0xff]
                  %1387 = vst [vmem:[%s1329 + $0x1c0] sm:$0xff] %v1386
                  %v1388 = vld [vmem:[%s1328 + $0xe8] sm:$0xff]
                  %1389 = vst [vmem:[%s1329 + $0x1d0] sm:$0xff] %v1388
                  %v1390 = vld [vmem:[%s1328 + $0xf0] sm:$0xff]
                  %1391 = vst [vmem:[%s1329 + $0x1e0] sm:$0xff] %v1390
                  %v1392 = vld [vmem:[%s1328 + $0xf8] sm:$0xff]
                  %1393 = vst [vmem:[%s1329 + $0x1f0] sm:$0xff] %v1392
                  %v1394 = vld [vmem:[%s1328 + $0x100] sm:$0xff]
                  %1395 = vst [vmem:[%s1329 + $0x200] sm:$0xff] %v1394
                  %v1396 = vld [vmem:[%s1328 + $0x108] sm:$0xff]
                  %1397 = vst [vmem:[%s1329 + $0x210] sm:$0xff] %v1396
                  %v1398 = vld [vmem:[%s1328 + $0x110] sm:$0xff]
                  %1399 = vst [vmem:[%s1329 + $0x220] sm:$0xff] %v1398
                  %v1400 = vld [vmem:[%s1328 + $0x118] sm:$0xff]
                  %1401 = vst [vmem:[%s1329 + $0x230] sm:$0xff] %v1400
                  %v1402 = vld [vmem:[%s1328 + $0x120] sm:$0xff]
                  %1403 = vst [vmem:[%s1329 + $0x240] sm:$0xff] %v1402
                  %v1404 = vld [vmem:[%s1328 + $0x128] sm:$0xff]
                  %1405 = vst [vmem:[%s1329 + $0x250] sm:$0xff] %v1404
                  %v1406 = vld [vmem:[%s1328 + $0x130] sm:$0xff]
                  %1407 = vst [vmem:[%s1329 + $0x260] sm:$0xff] %v1406
                  %v1408 = vld [vmem:[%s1328 + $0x138] sm:$0xff]
                  %1409 = vst [vmem:[%s1329 + $0x270] sm:$0xff] %v1408
                  %v1410 = vld [vmem:[%s1328 + $0x140] sm:$0xff]
                  %1411 = vst [vmem:[%s1329 + $0x280] sm:$0xff] %v1410
                  %v1412 = vld [vmem:[%s1328 + $0x148] sm:$0xff]
                  %1413 = vst [vmem:[%s1329 + $0x290] sm:$0xff] %v1412
                  %v1414 = vld [vmem:[%s1328 + $0x150] sm:$0xff]
                  %1415 = vst [vmem:[%s1329 + $0x2a0] sm:$0xff] %v1414
                  %v1416 = vld [vmem:[%s1328 + $0x158] sm:$0xff]
                  %1417 = vst [vmem:[%s1329 + $0x2b0] sm:$0xff] %v1416
                  %v1418 = vld [vmem:[%s1328 + $0x160] sm:$0xff]
                  %1419 = vst [vmem:[%s1329 + $0x2c0] sm:$0xff] %v1418
                  %v1420 = vld [vmem:[%s1328 + $0x168] sm:$0xff]
                  %1421 = vst [vmem:[%s1329 + $0x2d0] sm:$0xff] %v1420
                  %v1422 = vld [vmem:[%s1328 + $0x170] sm:$0xff]
                  %1423 = vst [vmem:[%s1329 + $0x2e0] sm:$0xff] %v1422
                  %v1424 = vld [vmem:[%s1328 + $0x178] sm:$0xff]
                  %1425 = vst [vmem:[%s1329 + $0x2f0] sm:$0xff] %v1424
                  %v1426 = vld [vmem:[%s1328 + $0x180] sm:$0xff]
                  %1427 = vst [vmem:[%s1329 + $0x300] sm:$0xff] %v1426
                  %v1428 = vld [vmem:[%s1328 + $0x188] sm:$0xff]
                  %1429 = vst [vmem:[%s1329 + $0x310] sm:$0xff] %v1428
                  %v1430 = vld [vmem:[%s1328 + $0x190] sm:$0xff]
                  %1431 = vst [vmem:[%s1329 + $0x320] sm:$0xff] %v1430
                  %v1432 = vld [vmem:[%s1328 + $0x198] sm:$0xff]
                  %1433 = vst [vmem:[%s1329 + $0x330] sm:$0xff] %v1432
                  %v1434 = vld [vmem:[%s1328 + $0x1a0] sm:$0xff]
                  %1435 = vst [vmem:[%s1329 + $0x340] sm:$0xff] %v1434
                  %v1436 = vld [vmem:[%s1328 + $0x1a8] sm:$0xff]
                  %1437 = vst [vmem:[%s1329 + $0x350] sm:$0xff] %v1436
                  %v1438 = vld [vmem:[%s1328 + $0x1b0] sm:$0xff]
                  %1439 = vst [vmem:[%s1329 + $0x360] sm:$0xff] %v1438
                  %v1440 = vld [vmem:[%s1328 + $0x1b8] sm:$0xff]
                  %1441 = vst [vmem:[%s1329 + $0x370] sm:$0xff] %v1440
                  %v1442 = vld [vmem:[%s1328 + $0x1c0] sm:$0xff]
                  %1443 = vst [vmem:[%s1329 + $0x380] sm:$0xff] %v1442
                  %v1444 = vld [vmem:[%s1328 + $0x1c8] sm:$0xff]
                  %1445 = vst [vmem:[%s1329 + $0x390] sm:$0xff] %v1444
                  %v1446 = vld [vmem:[%s1328 + $0x1d0] sm:$0xff]
                  %1447 = vst [vmem:[%s1329 + $0x3a0] sm:$0xff] %v1446
                  %v1448 = vld [vmem:[%s1328 + $0x1d8] sm:$0xff]
                  %1449 = vst [vmem:[%s1329 + $0x3b0] sm:$0xff] %v1448
                  %v1450 = vld [vmem:[%s1328 + $0x1e0] sm:$0xff]
                  %1451 = vst [vmem:[%s1329 + $0x3c0] sm:$0xff] %v1450
                  %v1452 = vld [vmem:[%s1328 + $0x1e8] sm:$0xff]
                  %1453 = vst [vmem:[%s1329 + $0x3d0] sm:$0xff] %v1452
                  %v1454 = vld [vmem:[%s1328 + $0x1f0] sm:$0xff]
                  %1455 = vst [vmem:[%s1329 + $0x3e0] sm:$0xff] %v1454
                  %v1456 = vld [vmem:[%s1328 + $0x1f8] sm:$0xff]
                  %1457 = vst [vmem:[%s1329 + $0x3f0] sm:$0xff] %v1456
                $region105: #{convt_bn_relu.3} parent=99 // loop_footer
                  %s1327 = sadd.s32 1, %s1323
                $region106: #{convt_bn_relu.3} parent=99 // loop_footer_branch
                  %1322 = sbr.rel target = $region102
                $region107: #{convt_bn_relu.3} parent=99 // loop_exit
                  _
              $region100: #{convt_bn_relu.3} parent=84 // pred_fallthru
                _
              // Predicated region
              $region108: #{convt_bn_relu.3} parent=84 // pred_check
                _
              $region109: #{convt_bn_relu.3} parent=84 // pred_check_branch
                %1459 = sbr.rel target = $region111
              $region110: #{convt_bn_relu.3} parent=84 // pred_region
                _
              $region111: #{convt_bn_relu.3} parent=84 // pred_fallthru
                _
            $region85: #{convt_bn_relu.3} parent=80 // pred_fallthru
              _
            // Predicated region
            $region86: #{convt_bn_relu.3} parent=80 // pred_check
              _
            $region87: #{convt_bn_relu.3} parent=80 // pred_check_branch
              %1182 = sbr.rel target = $region89
            $region88: #{convt_bn_relu.3} parent=80 // pred_region
              loop: start=0, step=1, limit=1
              $region90: #{convt_bn_relu.3} parent=88 // loop_pre_header
                _
              $region91: #{convt_bn_relu.3} parent=88 // loop_header
                %s1185 = sphi 0, %s1189
                %p1186 = scmp.ge.s32.totalorder %s1185, 1
                %s1190 = sphi %s1168, %s1168
                %s1191 = sphi %s1176, %s1176
              $region92: #{convt_bn_relu.3} parent=88 // loop_header_branch
                %1188 = sbr.rel (%p1186) target = $region96
              $region93: #{convt_bn_relu.3} parent=88 // loop_body
                %v1192 = vld [vmem:[%s1190] sm:$0xff]
                %1193 = vst [vmem:[%s1191] sm:$0xff] %v1192
                %v1194 = vld [vmem:[%s1190 + $0x8] sm:$0xff]
                %1195 = vst [vmem:[%s1191 + $0x10] sm:$0xff] %v1194
                %v1196 = vld [vmem:[%s1190 + $0x10] sm:$0xff]
                %1197 = vst [vmem:[%s1191 + $0x20] sm:$0xff] %v1196
                %v1198 = vld [vmem:[%s1190 + $0x18] sm:$0xff]
                %1199 = vst [vmem:[%s1191 + $0x30] sm:$0xff] %v1198
                %v1200 = vld [vmem:[%s1190 + $0x20] sm:$0xff]
                %1201 = vst [vmem:[%s1191 + $0x40] sm:$0xff] %v1200
                %v1202 = vld [vmem:[%s1190 + $0x28] sm:$0xff]
                %1203 = vst [vmem:[%s1191 + $0x50] sm:$0xff] %v1202
                %v1204 = vld [vmem:[%s1190 + $0x30] sm:$0xff]
                %1205 = vst [vmem:[%s1191 + $0x60] sm:$0xff] %v1204
                %v1206 = vld [vmem:[%s1190 + $0x38] sm:$0xff]
                %1207 = vst [vmem:[%s1191 + $0x70] sm:$0xff] %v1206
                %v1208 = vld [vmem:[%s1190 + $0x40] sm:$0xff]
                %1209 = vst [vmem:[%s1191 + $0x80] sm:$0xff] %v1208
                %v1210 = vld [vmem:[%s1190 + $0x48] sm:$0xff]
                %1211 = vst [vmem:[%s1191 + $0x90] sm:$0xff] %v1210
                %v1212 = vld [vmem:[%s1190 + $0x50] sm:$0xff]
                %1213 = vst [vmem:[%s1191 + $0xa0] sm:$0xff] %v1212
                %v1214 = vld [vmem:[%s1190 + $0x58] sm:$0xff]
                %1215 = vst [vmem:[%s1191 + $0xb0] sm:$0xff] %v1214
                %v1216 = vld [vmem:[%s1190 + $0x60] sm:$0xff]
                %1217 = vst [vmem:[%s1191 + $0xc0] sm:$0xff] %v1216
                %v1218 = vld [vmem:[%s1190 + $0x68] sm:$0xff]
                %1219 = vst [vmem:[%s1191 + $0xd0] sm:$0xff] %v1218
                %v1220 = vld [vmem:[%s1190 + $0x70] sm:$0xff]
                %1221 = vst [vmem:[%s1191 + $0xe0] sm:$0xff] %v1220
                %v1222 = vld [vmem:[%s1190 + $0x78] sm:$0xff]
                %1223 = vst [vmem:[%s1191 + $0xf0] sm:$0xff] %v1222
                %v1224 = vld [vmem:[%s1190 + $0x80] sm:$0xff]
                %1225 = vst [vmem:[%s1191 + $0x100] sm:$0xff] %v1224
                %v1226 = vld [vmem:[%s1190 + $0x88] sm:$0xff]
                %1227 = vst [vmem:[%s1191 + $0x110] sm:$0xff] %v1226
                %v1228 = vld [vmem:[%s1190 + $0x90] sm:$0xff]
                %1229 = vst [vmem:[%s1191 + $0x120] sm:$0xff] %v1228
                %v1230 = vld [vmem:[%s1190 + $0x98] sm:$0xff]
                %1231 = vst [vmem:[%s1191 + $0x130] sm:$0xff] %v1230
                %v1232 = vld [vmem:[%s1190 + $0xa0] sm:$0xff]
                %1233 = vst [vmem:[%s1191 + $0x140] sm:$0xff] %v1232
                %v1234 = vld [vmem:[%s1190 + $0xa8] sm:$0xff]
                %1235 = vst [vmem:[%s1191 + $0x150] sm:$0xff] %v1234
                %v1236 = vld [vmem:[%s1190 + $0xb0] sm:$0xff]
                %1237 = vst [vmem:[%s1191 + $0x160] sm:$0xff] %v1236
                %v1238 = vld [vmem:[%s1190 + $0xb8] sm:$0xff]
                %1239 = vst [vmem:[%s1191 + $0x170] sm:$0xff] %v1238
                %v1240 = vld [vmem:[%s1190 + $0xc0] sm:$0xff]
                %1241 = vst [vmem:[%s1191 + $0x180] sm:$0xff] %v1240
                %v1242 = vld [vmem:[%s1190 + $0xc8] sm:$0xff]
                %1243 = vst [vmem:[%s1191 + $0x190] sm:$0xff] %v1242
                %v1244 = vld [vmem:[%s1190 + $0xd0] sm:$0xff]
                %1245 = vst [vmem:[%s1191 + $0x1a0] sm:$0xff] %v1244
                %v1246 = vld [vmem:[%s1190 + $0xd8] sm:$0xff]
                %1247 = vst [vmem:[%s1191 + $0x1b0] sm:$0xff] %v1246
                %v1248 = vld [vmem:[%s1190 + $0xe0] sm:$0xff]
                %1249 = vst [vmem:[%s1191 + $0x1c0] sm:$0xff] %v1248
                %v1250 = vld [vmem:[%s1190 + $0xe8] sm:$0xff]
                %1251 = vst [vmem:[%s1191 + $0x1d0] sm:$0xff] %v1250
                %v1252 = vld [vmem:[%s1190 + $0xf0] sm:$0xff]
                %1253 = vst [vmem:[%s1191 + $0x1e0] sm:$0xff] %v1252
                %v1254 = vld [vmem:[%s1190 + $0xf8] sm:$0xff]
                %1255 = vst [vmem:[%s1191 + $0x1f0] sm:$0xff] %v1254
                %v1256 = vld [vmem:[%s1190 + $0x100] sm:$0xff]
                %1257 = vst [vmem:[%s1191 + $0x200] sm:$0xff] %v1256
                %v1258 = vld [vmem:[%s1190 + $0x108] sm:$0xff]
                %1259 = vst [vmem:[%s1191 + $0x210] sm:$0xff] %v1258
                %v1260 = vld [vmem:[%s1190 + $0x110] sm:$0xff]
                %1261 = vst [vmem:[%s1191 + $0x220] sm:$0xff] %v1260
                %v1262 = vld [vmem:[%s1190 + $0x118] sm:$0xff]
                %1263 = vst [vmem:[%s1191 + $0x230] sm:$0xff] %v1262
                %v1264 = vld [vmem:[%s1190 + $0x120] sm:$0xff]
                %1265 = vst [vmem:[%s1191 + $0x240] sm:$0xff] %v1264
                %v1266 = vld [vmem:[%s1190 + $0x128] sm:$0xff]
                %1267 = vst [vmem:[%s1191 + $0x250] sm:$0xff] %v1266
                %v1268 = vld [vmem:[%s1190 + $0x130] sm:$0xff]
                %1269 = vst [vmem:[%s1191 + $0x260] sm:$0xff] %v1268
                %v1270 = vld [vmem:[%s1190 + $0x138] sm:$0xff]
                %1271 = vst [vmem:[%s1191 + $0x270] sm:$0xff] %v1270
                %v1272 = vld [vmem:[%s1190 + $0x140] sm:$0xff]
                %1273 = vst [vmem:[%s1191 + $0x280] sm:$0xff] %v1272
                %v1274 = vld [vmem:[%s1190 + $0x148] sm:$0xff]
                %1275 = vst [vmem:[%s1191 + $0x290] sm:$0xff] %v1274
                %v1276 = vld [vmem:[%s1190 + $0x150] sm:$0xff]
                %1277 = vst [vmem:[%s1191 + $0x2a0] sm:$0xff] %v1276
                %v1278 = vld [vmem:[%s1190 + $0x158] sm:$0xff]
                %1279 = vst [vmem:[%s1191 + $0x2b0] sm:$0xff] %v1278
                %v1280 = vld [vmem:[%s1190 + $0x160] sm:$0xff]
                %1281 = vst [vmem:[%s1191 + $0x2c0] sm:$0xff] %v1280
                %v1282 = vld [vmem:[%s1190 + $0x168] sm:$0xff]
                %1283 = vst [vmem:[%s1191 + $0x2d0] sm:$0xff] %v1282
                %v1284 = vld [vmem:[%s1190 + $0x170] sm:$0xff]
                %1285 = vst [vmem:[%s1191 + $0x2e0] sm:$0xff] %v1284
                %v1286 = vld [vmem:[%s1190 + $0x178] sm:$0xff]
                %1287 = vst [vmem:[%s1191 + $0x2f0] sm:$0xff] %v1286
                %v1288 = vld [vmem:[%s1190 + $0x180] sm:$0xff]
                %1289 = vst [vmem:[%s1191 + $0x300] sm:$0xff] %v1288
                %v1290 = vld [vmem:[%s1190 + $0x188] sm:$0xff]
                %1291 = vst [vmem:[%s1191 + $0x310] sm:$0xff] %v1290
                %v1292 = vld [vmem:[%s1190 + $0x190] sm:$0xff]
                %1293 = vst [vmem:[%s1191 + $0x320] sm:$0xff] %v1292
                %v1294 = vld [vmem:[%s1190 + $0x198] sm:$0xff]
                %1295 = vst [vmem:[%s1191 + $0x330] sm:$0xff] %v1294
                %v1296 = vld [vmem:[%s1190 + $0x1a0] sm:$0xff]
                %1297 = vst [vmem:[%s1191 + $0x340] sm:$0xff] %v1296
                %v1298 = vld [vmem:[%s1190 + $0x1a8] sm:$0xff]
                %1299 = vst [vmem:[%s1191 + $0x350] sm:$0xff] %v1298
                %v1300 = vld [vmem:[%s1190 + $0x1b0] sm:$0xff]
                %1301 = vst [vmem:[%s1191 + $0x360] sm:$0xff] %v1300
                %v1302 = vld [vmem:[%s1190 + $0x1b8] sm:$0xff]
                %1303 = vst [vmem:[%s1191 + $0x370] sm:$0xff] %v1302
                %v1304 = vld [vmem:[%s1190 + $0x1c0] sm:$0xff]
                %1305 = vst [vmem:[%s1191 + $0x380] sm:$0xff] %v1304
                %v1306 = vld [vmem:[%s1190 + $0x1c8] sm:$0xff]
                %1307 = vst [vmem:[%s1191 + $0x390] sm:$0xff] %v1306
                %v1308 = vld [vmem:[%s1190 + $0x1d0] sm:$0xff]
                %1309 = vst [vmem:[%s1191 + $0x3a0] sm:$0xff] %v1308
                %v1310 = vld [vmem:[%s1190 + $0x1d8] sm:$0xff]
                %1311 = vst [vmem:[%s1191 + $0x3b0] sm:$0xff] %v1310
                %v1312 = vld [vmem:[%s1190 + $0x1e0] sm:$0xff]
                %1313 = vst [vmem:[%s1191 + $0x3c0] sm:$0xff] %v1312
                %v1314 = vld [vmem:[%s1190 + $0x1e8] sm:$0xff]
                %1315 = vst [vmem:[%s1191 + $0x3d0] sm:$0xff] %v1314
                %v1316 = vld [vmem:[%s1190 + $0x1f0] sm:$0xff]
                %1317 = vst [vmem:[%s1191 + $0x3e0] sm:$0xff] %v1316
                %v1318 = vld [vmem:[%s1190 + $0x1f8] sm:$0xff]
                %1319 = vst [vmem:[%s1191 + $0x3f0] sm:$0xff] %v1318
              $region94: #{convt_bn_relu.3} parent=88 // loop_footer
                %s1189 = sadd.s32 1, %s1185
              $region95: #{convt_bn_relu.3} parent=88 // loop_footer_branch
                %1184 = sbr.rel target = $region91
              $region96: #{convt_bn_relu.3} parent=88 // loop_exit
                _
            $region89: #{convt_bn_relu.3} parent=80 // pred_fallthru
              _
          $region81: #{convt_bn_relu.3} parent=76 // pred_fallthru
            _
          %1460 = vnop
        $region77: #{convt_bn_relu.3} parent=68 // pred_fallthru
          _
      $region69: #{convt_bn_relu.3} parent=5 // pred_fallthru
        _
      %p1461 = scmp.le.s32.totalorder 2, %s9
      // Predicated region
      $region112: #{convt_bn_relu.3} parent=5 // pred_check
        %p1462 = pneg %p1461
      $region113: #{convt_bn_relu.3} parent=5 // pred_check_branch
        %1464 = sbr.rel (%p1462) target = $region115
      $region114: #{convt_bn_relu.3} parent=5 // pred_region
        %s1465 = ssub.s32 %s9, 2
        // Predicated region
        $region116: #{convt_bn_relu.3} parent=114 // pred_check
          %p1466 = pneg %p130
        $region117: #{convt_bn_relu.3} parent=114 // pred_check_branch
          %1468 = sbr.rel (%p1466) target = $region119
        $region118: #{convt_bn_relu.3} parent=114 // pred_region
          %s1469 = sand.u32 %s115, 1
          %s1470 = sand.u32 %s115, 1
          %s1471 = smul.addr %s1470, 512
          %s1472 = scalar_lea.vmem [#allocation3], %s1471
        $region119: #{convt_bn_relu.3} parent=114 // pred_fallthru
          _
      $region115: #{convt_bn_relu.3} parent=5 // pred_fallthru
        _
    $region6: #{convt_bn_relu.3} parent=1 // loop_footer
      %s13 = sadd.s32 1, %s9
    $region7: #{convt_bn_relu.3} parent=1 // loop_footer_branch
      %8 = sbr.rel target = $region3
    $region8: #{convt_bn_relu.3} parent=1 // loop_exit
      _

// kernel: convt_bn_relu.2
$region0: #{convt_bn_relu.2}
  #allocation0 [shape = 'u32[]', space=smem, size = 0x4, offset = 0x4, fixed_abs, tag = 'smem constant byte address 0x4 - core index']
  #allocation1 [shape = 'u32[144,128]{1,0:T(1,128)}', space=vmem, size = 0x12000, scoped, tag = 'internal scratch']
  #allocation2 [shape = 'f32[1,128]{1,0:T(1,128)}', space=vmem, size = 0x200, scoped, tag = 'scratch operand']
  #allocation3 [shape = 'f32[1,128]{1,0:T(1,128)}', space=vmem, size = 0x200, scoped, tag = 'scratch operand']
  #allocation4 [shape = 'f32[1,128]{1,0:T(1,128)}', space=vmem, size = 0x200, scoped, tag = 'scratch operand']
  %s0 = inlined_call_operand.vmem [shape: bf16[512,32], index: 0, kind: input, shape index: {}]
  %s1 = inlined_call_operand.vmem [shape: bf16[32,256], index: 1, kind: input, shape index: {}]
  %s2 = inlined_call_operand.vmem [shape: f32[2,256], index: 2, kind: input, shape index: {}]
  %s3 = inlined_call_operand.vmem [shape: f32[128,128], index: 3, kind: input, shape index: {}]
  %s4 = inlined_call_operand.vmem [shape: f32[2,256], index: 4, kind: output, shape index: {}]
  %s5 = sld [smem:[#allocation0]]
  $region98: #{convt_bn_relu.2} parent=0
    _
  %s7 = ssub.s32 1, %s5
  %s8 = scalar_select 0, %s7, %s5
  $region1: #{convt_bn_relu.2} parent=0
    #allocation5 [shape = 'u8[16384]{0}', space=vmem, size = 0x4000, scoped, tag = 'input window, operand 1']
    loop: start=0, step=1, limit=4
    $region2: #{convt_bn_relu.2} parent=1 // loop_pre_header
      _
    $region3: #{convt_bn_relu.2} parent=1 // loop_header
      %s10 = sphi 0, %s14
      %p11 = scmp.ge.s32.totalorder %s10, 4
      %s17 = sphi 0, %s29
      %s18 = sphi 0, %s25
      %s19 = sphi 0, %s17
      %s20 = sphi 0, %s18
      %s21 = sphi 0, %s19
      %s22 = sphi 0, %s20
      %s32 = sphi 0, %s34
      %s35 = sphi 0, %s32
      %s36 = sphi 0, %s35
      %s52 = sphi 0, %s36
      %s58 = sphi 0, %s60
      %s61 = sphi 0, %s58
      %s62 = sphi 0, %s61
      %s78 = sphi 0, %s62
      %s84 = sphi 0, %s86
      %s87 = sphi 0, %s84
      %s88 = sphi 0, %s87
      %s104 = sphi 0, %s88
      %s108 = sphi 0, %s108
      %s110 = sphi 0, %s108
      %s111 = sphi 0, %s110
      %s125 = sphi 0, %s111
      %s131 = sphi 0, %s133
      %s134 = sphi 0, %s131
      %s135 = sphi 0, %s134
      %s151 = sphi 0, %s135
    $region4: #{convt_bn_relu.2} parent=1 // loop_header_branch
      %13 = sbr.rel (%p11) target = $region8
    $region5: #{convt_bn_relu.2} parent=1 // loop_body
      %s15 = ssub.s32 %s10, 1
      %s16 = ssub.s32 %s10, 2
      %s23 = sadd.s32 1, %s18
      %p24 = scmp.ge.s32.totalorder %s23, 1
      %s25 = scalar_select %p24, 0, %s23
      %s26 = sadd.s32 1, %s17
      %s27 = scalar_select %p24, %s26, %s17
      %p28 = scmp.ge.s32.totalorder %s27, 2
      %s29 = scalar_select %p28, 0, %s27
      %s30 = ssub.s32 %s18, %s25
      %p31 = scmp.eq.s32.totalorder %s30, 0
      %s33 = sadd.s32 %s32, 1
      %s34 = scalar_select %p31, %s32, %s33
      %p37 = pneg %p31
      %p38 = scmp.eq.s32.totalorder %s10, 1
      %p39 = por %p37, %p38
      %p40 = scmp.ne.s32.totalorder %s32, %s35
      %p41 = scmp.eq.s32.totalorder %s10, 0
      %p42 = por %p40, %p41
      %p43 = scmp.ne.s32.totalorder %s32, %s35
      %p44 = scmp.eq.s32.totalorder %s15, 1
      %p45 = por %p43, %p44
      %p46 = scmp.ne.s32.totalorder %s35, %s36
      %p47 = scmp.eq.s32.totalorder %s15, 0
      %p48 = por %p46, %p47
      %p49 = scmp.ne.s32.totalorder %s35, %s36
      %p50 = scmp.eq.s32.totalorder %s16, 1
      %p51 = por %p49, %p50
      %p53 = scmp.ne.s32.totalorder %s36, %s52
      %p54 = scmp.eq.s32.totalorder %s16, 0
      %p55 = por %p53, %p54
      %s56 = ssub.s32 %s17, %s29
      %p57 = scmp.eq.s32.totalorder %s56, 0
      %s59 = sadd.s32 %s58, 1
      %s60 = scalar_select %p57, %s58, %s59
      %p63 = pneg %p57
      %p64 = scmp.eq.s32.totalorder %s10, 1
      %p65 = por %p63, %p64
      %p66 = scmp.ne.s32.totalorder %s58, %s61
      %p67 = scmp.eq.s32.totalorder %s10, 0
      %p68 = por %p66, %p67
      %p69 = scmp.ne.s32.totalorder %s58, %s61
      %p70 = scmp.eq.s32.totalorder %s15, 1
      %p71 = por %p69, %p70
      %p72 = scmp.ne.s32.totalorder %s61, %s62
      %p73 = scmp.eq.s32.totalorder %s15, 0
      %p74 = por %p72, %p73
      %p75 = scmp.ne.s32.totalorder %s61, %s62
      %p76 = scmp.eq.s32.totalorder %s16, 1
      %p77 = por %p75, %p76
      %p79 = scmp.ne.s32.totalorder %s62, %s78
      %p80 = scmp.eq.s32.totalorder %s16, 0
      %p81 = por %p79, %p80
      %s82 = ssub.s32 %s17, %s29
      %p83 = scmp.eq.s32.totalorder %s82, 0
      %s85 = sadd.s32 %s84, 1
      %s86 = scalar_select %p83, %s84, %s85
      %p89 = pneg %p83
      %p90 = scmp.eq.s32.totalorder %s10, 1
      %p91 = por %p89, %p90
      %p92 = scmp.ne.s32.totalorder %s84, %s87
      %p93 = scmp.eq.s32.totalorder %s10, 0
      %p94 = por %p92, %p93
      %p95 = scmp.ne.s32.totalorder %s84, %s87
      %p96 = scmp.eq.s32.totalorder %s15, 1
      %p97 = por %p95, %p96
      %p98 = scmp.ne.s32.totalorder %s87, %s88
      %p99 = scmp.eq.s32.totalorder %s15, 0
      %p100 = por %p98, %p99
      %p101 = scmp.ne.s32.totalorder %s87, %s88
      %p102 = scmp.eq.s32.totalorder %s16, 1
      %p103 = por %p101, %p102
      %p105 = scmp.ne.s32.totalorder %s88, %s104
      %p106 = scmp.eq.s32.totalorder %s16, 0
      %p107 = por %p105, %p106
      %s109 = sadd.s32 %s108, 1
      %p112 = scmp.eq.s32.totalorder %s10, 1
      %p113 = scmp.ne.s32.totalorder %s108, %s110
      %p114 = scmp.eq.s32.totalorder %s10, 0
      %p115 = por %p113, %p114
      %p116 = scmp.ne.s32.totalorder %s108, %s110
      %p117 = scmp.eq.s32.totalorder %s15, 1
      %p118 = por %p116, %p117
      %p119 = scmp.ne.s32.totalorder %s110, %s111
      %p120 = scmp.eq.s32.totalorder %s15, 0
      %p121 = por %p119, %p120
      %p122 = scmp.ne.s32.totalorder %s110, %s111
      %p123 = scmp.eq.s32.totalorder %s16, 1
      %p124 = por %p122, %p123
      %p126 = scmp.ne.s32.totalorder %s111, %s125
      %p127 = scmp.eq.s32.totalorder %s16, 0
      %p128 = por %p126, %p127
      %s129 = ssub.s32 %s17, %s29
      %p130 = scmp.eq.s32.totalorder %s129, 0
      %s132 = sadd.s32 %s131, 1
      %s133 = scalar_select %p130, %s131, %s132
      %p136 = pneg %p130
      %p137 = scmp.eq.s32.totalorder %s10, 1
      %p138 = por %p136, %p137
      %p139 = scmp.ne.s32.totalorder %s131, %s134
      %p140 = scmp.eq.s32.totalorder %s10, 0
      %p141 = por %p139, %p140
      %p142 = scmp.ne.s32.totalorder %s131, %s134
      %p143 = scmp.eq.s32.totalorder %s15, 1
      %p144 = por %p142, %p143
      %p145 = scmp.ne.s32.totalorder %s134, %s135
      %p146 = scmp.eq.s32.totalorder %s15, 0
      %p147 = por %p145, %p146
      %p148 = scmp.ne.s32.totalorder %s134, %s135
      %p149 = scmp.eq.s32.totalorder %s16, 1
      %p150 = por %p148, %p149
      %p152 = scmp.ne.s32.totalorder %s135, %s151
      %p153 = scmp.eq.s32.totalorder %s16, 0
      %p154 = por %p152, %p153
      %p155 = scmp.le.s32.totalorder 1, %s10
      %p156 = scmp.lt.s32.totalorder %s10, 3
      %p157 = pnand %p155, %p156
      %p158 = pneg %p157
      // Predicated region
      $region9: #{convt_bn_relu.2} parent=5 // pred_check
        _
      $region10: #{convt_bn_relu.2} parent=5 // pred_check_branch
        %160 = sbr.rel (%p157) target = $region12
      $region11: #{convt_bn_relu.2} parent=5 // pred_region
        %s161 = ssub.s32 %s10, 1
        // Predicated region
        $region13: #{convt_bn_relu.2} parent=11 // pred_check
          %p162 = pneg %p48
        $region14: #{convt_bn_relu.2} parent=11 // pred_check_branch
          %164 = sbr.rel (%p162) target = $region16
        $region15: #{convt_bn_relu.2} parent=11 // pred_region
          %s165 = smul.u32 64, %s20
          %p166 = scmp.lt.s32.totalorder %s165, 63
          %s167 = scalar_select %p166, %s165, 63
          %s168 = smul.addr %s167, 4
          %s169 = scalar_lea.vmem %s0, %s168
          %s170 = smul.u32 64, %s20
        $region16: #{convt_bn_relu.2} parent=11 // pred_fallthru
          _
        // Predicated region
        $region17: #{convt_bn_relu.2} parent=11 // pred_check
          %p171 = pneg %p121
        $region18: #{convt_bn_relu.2} parent=11 // pred_check_branch
          %173 = sbr.rel (%p171) target = $region20
        $region19: #{convt_bn_relu.2} parent=11 // pred_region
          _
        $region20: #{convt_bn_relu.2} parent=11 // pred_fallthru
          _
      $region12: #{convt_bn_relu.2} parent=5 // pred_fallthru
        _
      %p174 = scmp.lt.s32.totalorder %s10, 2
      // Predicated region
      $region21: #{convt_bn_relu.2} parent=5 // pred_check
        %p175 = pneg %p174
      $region22: #{convt_bn_relu.2} parent=5 // pred_check_branch
        %177 = sbr.rel (%p175) target = $region24
      $region23: #{convt_bn_relu.2} parent=5 // pred_region
        // Predicated region
        $region25: #{convt_bn_relu.2} parent=23 // pred_check
          %p178 = pneg %p68
        $region26: #{convt_bn_relu.2} parent=23 // pred_check_branch
          %180 = sbr.rel (%p178) target = $region28
        $region27: #{convt_bn_relu.2} parent=23 // pred_region
          %s181 = sand.u32 %s58, 1
          %s182 = sand.u32 %s58, 1
          %s183 = smul.addr %s182, 16
          %s184 = scalar_lea.vmem [#allocation5], %s183
          %s185 = smul.addr %s17, 4
          %s186 = scalar_lea.vmem %s1, %s185
          // Predicated region
          $region29: #{convt_bn_relu.2} parent=27 // pred_check
            _
          $region30: #{convt_bn_relu.2} parent=27 // pred_check_branch
            %188 = sbr.rel (0) target = $region32
          $region31: #{convt_bn_relu.2} parent=27 // pred_region
            // Predicated region
            $region33: #{convt_bn_relu.2} parent=31 // pred_check
              _
            $region34: #{convt_bn_relu.2} parent=31 // pred_check_branch
              %190 = sbr.rel target = $region36
            $region35: #{convt_bn_relu.2} parent=31 // pred_region
              // Predicated region
              $region48: #{convt_bn_relu.2} parent=35 // pred_check
                _
              $region49: #{convt_bn_relu.2} parent=35 // pred_check_branch
                %211 = sbr.rel (0) target = $region51
              $region50: #{convt_bn_relu.2} parent=35 // pred_region
                loop: start=0, step=1, limit=1
                $region52: #{convt_bn_relu.2} parent=50 // loop_pre_header
                  _
                $region53: #{convt_bn_relu.2} parent=50 // loop_header
                  %s213 = sphi 0, %s217
                  %p214 = scmp.ge.s32.totalorder %s213, 1
                  %s218 = sphi %s186, %s186
                  %s219 = sphi %s184, %s184
                $region54: #{convt_bn_relu.2} parent=50 // loop_header_branch
                  %216 = sbr.rel (%p214) target = $region58
                $region55: #{convt_bn_relu.2} parent=50 // loop_body
                  _
                $region56: #{convt_bn_relu.2} parent=50 // loop_footer
                  %s217 = sadd.s32 1, %s213
                $region57: #{convt_bn_relu.2} parent=50 // loop_footer_branch
                  %212 = sbr.rel target = $region53
                $region58: #{convt_bn_relu.2} parent=50 // loop_exit
                  _
                loop: start=0, step=1, limit=1
                $region59: #{convt_bn_relu.2} parent=50 // loop_pre_header
                  _
                $region60: #{convt_bn_relu.2} parent=50 // loop_header
                  %s222 = sphi 0, %s226
                  %p223 = scmp.ge.s32.totalorder %s222, 1
                  %s227 = sphi %s186, %s186
                  %s228 = sphi %s184, %s184
                $region61: #{convt_bn_relu.2} parent=50 // loop_header_branch
                  %225 = sbr.rel (%p223) target = $region65
                $region62: #{convt_bn_relu.2} parent=50 // loop_body
                  %v229 = vld [vmem:[%s227] sm:$0xf]
                  %230 = vst [vmem:[%s228] sm:$0xf] %v229
                  %v231 = vld [vmem:[%s227 + $0x8] sm:$0xf]
                  %232 = vst [vmem:[%s228 + $0x4] sm:$0xf] %v231
                  %v233 = vld [vmem:[%s227 + $0x10] sm:$0xf]
                  %234 = vst [vmem:[%s228 + $0x8] sm:$0xf] %v233
                  %v235 = vld [vmem:[%s227 + $0x18] sm:$0xf]
                  %236 = vst [vmem:[%s228 + $0xc] sm:$0xf] %v235
                $region63: #{convt_bn_relu.2} parent=50 // loop_footer
                  %s226 = sadd.s32 1, %s222
                $region64: #{convt_bn_relu.2} parent=50 // loop_footer_branch
                  %221 = sbr.rel target = $region60
                $region65: #{convt_bn_relu.2} parent=50 // loop_exit
                  _
              $region51: #{convt_bn_relu.2} parent=35 // pred_fallthru
                _
            $region36: #{convt_bn_relu.2} parent=31 // pred_fallthru
              _
            // Predicated region
            $region37: #{convt_bn_relu.2} parent=31 // pred_check
              _
            $region38: #{convt_bn_relu.2} parent=31 // pred_check_branch
              %192 = sbr.rel (0) target = $region40
            $region39: #{convt_bn_relu.2} parent=31 // pred_region
              loop: start=0, step=1, limit=1
              $region41: #{convt_bn_relu.2} parent=39 // loop_pre_header
                _
              $region42: #{convt_bn_relu.2} parent=39 // loop_header
                %s195 = sphi 0, %s199
                %p196 = scmp.ge.s32.totalorder %s195, 1
                %s200 = sphi %s186, %s186
                %s201 = sphi %s184, %s184
              $region43: #{convt_bn_relu.2} parent=39 // loop_header_branch
                %198 = sbr.rel (%p196) target = $region47
              $region44: #{convt_bn_relu.2} parent=39 // loop_body
                %v202 = vld [vmem:[%s200] sm:$0xf]
                %203 = vst [vmem:[%s201] sm:$0xf] %v202
                %v204 = vld [vmem:[%s200 + $0x8] sm:$0xf]
                %205 = vst [vmem:[%s201 + $0x4] sm:$0xf] %v204
                %v206 = vld [vmem:[%s200 + $0x10] sm:$0xf]
                %207 = vst [vmem:[%s201 + $0x8] sm:$0xf] %v206
                %v208 = vld [vmem:[%s200 + $0x18] sm:$0xf]
                %209 = vst [vmem:[%s201 + $0xc] sm:$0xf] %v208
              $region45: #{convt_bn_relu.2} parent=39 // loop_footer
                %s199 = sadd.s32 1, %s195
              $region46: #{convt_bn_relu.2} parent=39 // loop_footer_branch
                %194 = sbr.rel target = $region42
              $region47: #{convt_bn_relu.2} parent=39 // loop_exit
                _
            $region40: #{convt_bn_relu.2} parent=31 // pred_fallthru
              _
          $region32: #{convt_bn_relu.2} parent=27 // pred_fallthru
            _
          %237 = vnop
        $region28: #{convt_bn_relu.2} parent=23 // pred_fallthru
          _
        // Predicated region
        $region66: #{convt_bn_relu.2} parent=23 // pred_check
          %p238 = pneg %p94
        $region67: #{convt_bn_relu.2} parent=23 // pred_check_branch
          %240 = sbr.rel (%p238) target = $region69
        $region68: #{convt_bn_relu.2} parent=23 // pred_region
          %p241 = scmp.lt.s32.totalorder %s17, 1
          %s242 = scalar_select %p241, %s17, 1
          %s243 = smul.addr %s242, 2
          %s244 = scalar_lea.vmem %s2, %s243
        $region69: #{convt_bn_relu.2} parent=23 // pred_fallthru
          _
      $region24: #{convt_bn_relu.2} parent=5 // pred_fallthru
        _
      %p245 = scmp.le.s32.totalorder 1, %s10
      %p246 = scmp.lt.s32.totalorder %s10, 3
      %p247 = pnand %p245, %p246
      %p248 = pneg %p247
      // Predicated region
      $region70: #{convt_bn_relu.2} parent=5 // pred_check
        _
      $region71: #{convt_bn_relu.2} parent=5 // pred_check_branch
        %250 = sbr.rel (%p247) target = $region73
      $region72: #{convt_bn_relu.2} parent=5 // pred_region
        %s251 = ssub.s32 %s10, 1
        %s252 = sand.u32 %s61, 1
        %s253 = sand.u32 %s61, 1
        %s254 = smul.addr %s253, 16
        %s255 = scalar_lea.vmem [#allocation5], %s254
        // Predicated region
        $region74: #{convt_bn_relu.2} parent=72 // pred_check
          %p256 = pneg %p74
        $region75: #{convt_bn_relu.2} parent=72 // pred_check_branch
          %258 = sbr.rel (%p256) target = $region77
        $region76: #{convt_bn_relu.2} parent=72 // pred_region
          _
        $region77: #{convt_bn_relu.2} parent=72 // pred_fallthru
          _
        %s259 = smul.u32 64, %s20
        %p260 = scmp.lt.s32.totalorder %s259, 63
        %s261 = scalar_select %p260, %s259, 63
        %s262 = smul.addr %s261, 4
        %s263 = scalar_lea.vmem %s0, %s262
        %p264 = pneg %p48
        %p265 = pneg %p45
        %s266 = sand.u32 %s61, 1
        %s267 = sand.u32 %s61, 1
        %s268 = smul.addr %s267, 16
        %s269 = scalar_lea.vmem [#allocation5], %s268
        %p270 = pneg %p74
        %p271 = pneg %p71
        %p272 = scmp.lt.s32.totalorder %s19, 1
        %s273 = scalar_select %p272, %s19, 1
        %s274 = smul.addr %s273, 2
        %s275 = scalar_lea.vmem %s2, %s274
        %p276 = pneg %p100
        %p277 = pneg %p97
        %p278 = pneg %p121
        %p279 = pneg %p118
        %p280 = pneg %p147
        %p281 = pneg %p144
        %p282 = scmp.lt.s32.totalorder %s19, 1
        %s283 = scalar_select %p282, %s19, 1
        %s284 = smul.addr %s283, 2
        %s285 = scalar_lea.vmem %s4, %s284
        %s286 = smul.u32 64, %s20
        %p287 = scmp.lt.s32.totalorder %s286, 63
        %s288 = scalar_select %p287, %s286, 63
        %s289 = smul.addr %s288, 4
        %s290 = scalar_lea.vmem %s0, %s289
        %s291 = smul.u32 64, %s20
        %p292 = scmp.lt.s32.totalorder %s19, 1
        %s293 = scalar_select %p292, %s19, 1
        %s294 = smul.addr %s293, 2
        %s295 = scalar_lea.vmem %s2, %s294
        %p296 = scmp.lt.s32.totalorder %s19, 1
        %s297 = scalar_select %p296, %s19, 1
        %s298 = smul.addr %s297, 2
        %s299 = scalar_lea.vmem %s4, %s298
        %v301 = vld [vmem:[%s290] sm:$0xf]
        %v302 = vld [vmem:[%s290 + $0x4] sm:$0xf]
        %v303 = vld [vmem:[%s290 + $0x8] sm:$0xf]
        %v304 = vld [vmem:[%s290 + $0xc] sm:$0xf]
        %v305 = vld [vmem:[%s290 + $0x10] sm:$0xf]
        %v306 = vld [vmem:[%s290 + $0x14] sm:$0xf]
        %v307 = vld [vmem:[%s290 + $0x18] sm:$0xf]
        %v308 = vld [vmem:[%s290 + $0x1c] sm:$0xf]
        %v309 = vld [vmem:[%s290 + $0x20] sm:$0xf]
        %v310 = vld [vmem:[%s290 + $0x24] sm:$0xf]
        %v311 = vld [vmem:[%s290 + $0x28] sm:$0xf]
        %v312 = vld [vmem:[%s290 + $0x2c] sm:$0xf]
        %v313 = vld [vmem:[%s290 + $0x30] sm:$0xf]
        %v314 = vld [vmem:[%s290 + $0x34] sm:$0xf]
        %v315 = vld [vmem:[%s290 + $0x38] sm:$0xf]
        %v316 = vld [vmem:[%s290 + $0x3c] sm:$0xf]
        %v317 = vld [vmem:[%s290 + $0x40] sm:$0xf]
        %v318 = vld [vmem:[%s290 + $0x44] sm:$0xf]
        %v319 = vld [vmem:[%s290 + $0x48] sm:$0xf]
        %v320 = vld [vmem:[%s290 + $0x4c] sm:$0xf]
        %v321 = vld [vmem:[%s290 + $0x50] sm:$0xf]
        %v322 = vld [vmem:[%s290 + $0x54] sm:$0xf]
        %v323 = vld [vmem:[%s290 + $0x58] sm:$0xf]
        %v324 = vld [vmem:[%s290 + $0x5c] sm:$0xf]
        %v325 = vld [vmem:[%s290 + $0x60] sm:$0xf]
        %v326 = vld [vmem:[%s290 + $0x64] sm:$0xf]
        %v327 = vld [vmem:[%s290 + $0x68] sm:$0xf]
        %v328 = vld [vmem:[%s290 + $0x6c] sm:$0xf]
        %v329 = vld [vmem:[%s290 + $0x70] sm:$0xf]
        %v330 = vld [vmem:[%s290 + $0x74] sm:$0xf]
        %v331 = vld [vmem:[%s290 + $0x78] sm:$0xf]
        %v332 = vld [vmem:[%s290 + $0x7c] sm:$0xf]
        %v333 = vld [vmem:[%s290 + $0x80] sm:$0xf]
        %v334 = vld [vmem:[%s290 + $0x84] sm:$0xf]
        %v335 = vld [vmem:[%s290 + $0x88] sm:$0xf]
        %v336 = vld [vmem:[%s290 + $0x8c] sm:$0xf]
        %v337 = vld [vmem:[%s290 + $0x90] sm:$0xf]
        %v338 = vld [vmem:[%s290 + $0x94] sm:$0xf]
        %v339 = vld [vmem:[%s290 + $0x98] sm:$0xf]
        %v340 = vld [vmem:[%s290 + $0x9c] sm:$0xf]
        %v341 = vld [vmem:[%s290 + $0xa0] sm:$0xf]
        %v342 = vld [vmem:[%s290 + $0xa4] sm:$0xf]
        %v343 = vld [vmem:[%s290 + $0xa8] sm:$0xf]
        %v344 = vld [vmem:[%s290 + $0xac] sm:$0xf]
        %v345 = vld [vmem:[%s290 + $0xb0] sm:$0xf]
        %v346 = vld [vmem:[%s290 + $0xb4] sm:$0xf]
        %v347 = vld [vmem:[%s290 + $0xb8] sm:$0xf]
        %v348 = vld [vmem:[%s290 + $0xbc] sm:$0xf]
        %v349 = vld [vmem:[%s290 + $0xc0] sm:$0xf]
        %v350 = vld [vmem:[%s290 + $0xc4] sm:$0xf]
        %v351 = vld [vmem:[%s290 + $0xc8] sm:$0xf]
        %v352 = vld [vmem:[%s290 + $0xcc] sm:$0xf]
        %v353 = vld [vmem:[%s290 + $0xd0] sm:$0xf]
        %v354 = vld [vmem:[%s290 + $0xd4] sm:$0xf]
        %v355 = vld [vmem:[%s290 + $0xd8] sm:$0xf]
        %v356 = vld [vmem:[%s290 + $0xdc] sm:$0xf]
        %v357 = vld [vmem:[%s290 + $0xe0] sm:$0xf]
        %v358 = vld [vmem:[%s290 + $0xe4] sm:$0xf]
        %v359 = vld [vmem:[%s290 + $0xe8] sm:$0xf]
        %v360 = vld [vmem:[%s290 + $0xec] sm:$0xf]
        %v361 = vld [vmem:[%s290 + $0xf0] sm:$0xf]
        %v362 = vld [vmem:[%s290 + $0xf4] sm:$0xf]
        %v363 = vld [vmem:[%s290 + $0xf8] sm:$0xf]
        %v364 = vld [vmem:[%s290 + $0xfc] sm:$0xf]
        %v365 = vld [vmem:[%s255] sm:$0xf]
        %v366 = vld [vmem:[%s255 + $0x4] sm:$0xf]
        %v367 = vld [vmem:[%s255 + $0x8] sm:$0xf]
        %v368 = vld [vmem:[%s255 + $0xc] sm:$0xf]
        %v433 = vunpack.c.l.b16 %v301
        %v434 = vunpack.c.l.b16 %v302
        %v435 = vunpack.c.l.b16 %v303
        %v436 = vunpack.c.l.b16 %v304
        %v437 = vunpack.c.l.b16 %v305
        %v438 = vunpack.c.l.b16 %v306
        %v439 = vunpack.c.l.b16 %v307
        %v440 = vunpack.c.l.b16 %v308
        %v441 = vunpack.c.l.b16 %v309
        %v442 = vunpack.c.l.b16 %v310
        %v443 = vunpack.c.l.b16 %v311
        %v444 = vunpack.c.l.b16 %v312
        %v445 = vunpack.c.l.b16 %v313
        %v446 = vunpack.c.l.b16 %v314
        %v447 = vunpack.c.l.b16 %v315
        %v448 = vunpack.c.l.b16 %v316
        %v449 = vunpack.c.l.b16 %v317
        %v450 = vunpack.c.l.b16 %v318
        %v451 = vunpack.c.l.b16 %v319
        %v452 = vunpack.c.l.b16 %v320
        %v453 = vunpack.c.l.b16 %v321
        %v454 = vunpack.c.l.b16 %v322
        %v455 = vunpack.c.l.b16 %v323
        %v456 = vunpack.c.l.b16 %v324
        %v457 = vunpack.c.l.b16 %v325
        %v458 = vunpack.c.l.b16 %v326
        %v459 = vunpack.c.l.b16 %v327
        %v460 = vunpack.c.l.b16 %v328
        %v461 = vunpack.c.l.b16 %v329
        %v462 = vunpack.c.l.b16 %v330
        %v463 = vunpack.c.l.b16 %v331
        %v464 = vunpack.c.l.b16 %v332
        %v465 = vunpack.c.l.b16 %v333
        %v466 = vunpack.c.l.b16 %v334
        %v467 = vunpack.c.l.b16 %v335
        %v468 = vunpack.c.l.b16 %v336
        %v469 = vunpack.c.l.b16 %v337
        %v470 = vunpack.c.l.b16 %v338
        %v471 = vunpack.c.l.b16 %v339
        %v472 = vunpack.c.l.b16 %v340
        %v473 = vunpack.c.l.b16 %v341
        %v474 = vunpack.c.l.b16 %v342
        %v475 = vunpack.c.l.b16 %v343
        %v476 = vunpack.c.l.b16 %v344
        %v477 = vunpack.c.l.b16 %v345
        %v478 = vunpack.c.l.b16 %v346
        %v479 = vunpack.c.l.b16 %v347
        %v480 = vunpack.c.l.b16 %v348
        %v481 = vunpack.c.l.b16 %v349
        %v482 = vunpack.c.l.b16 %v350
        %v483 = vunpack.c.l.b16 %v351
        %v484 = vunpack.c.l.b16 %v352
        %v485 = vunpack.c.l.b16 %v353
        %v486 = vunpack.c.l.b16 %v354
        %v487 = vunpack.c.l.b16 %v355
        %v488 = vunpack.c.l.b16 %v356
        %v489 = vunpack.c.l.b16 %v357
        %v490 = vunpack.c.l.b16 %v358
        %v491 = vunpack.c.l.b16 %v359
        %v492 = vunpack.c.l.b16 %v360
        %v493 = vunpack.c.l.b16 %v361
        %v494 = vunpack.c.l.b16 %v362
        %v495 = vunpack.c.l.b16 %v363
        %v496 = vunpack.c.l.b16 %v364
        %v497 = vpack.c.b16 %v434, %v433
        %v498 = vpack.c.b16 %v436, %v435
        %v499 = vpack.c.b16 %v438, %v437
        %v500 = vpack.c.b16 %v440, %v439
        %v501 = vpack.c.b16 %v442, %v441
        %v502 = vpack.c.b16 %v444, %v443
        %v503 = vpack.c.b16 %v446, %v445
        %v504 = vpack.c.b16 %v448, %v447
        %v505 = vpack.c.b16 %v450, %v449
        %v506 = vpack.c.b16 %v452, %v451
        %v507 = vpack.c.b16 %v454, %v453
        %v508 = vpack.c.b16 %v456, %v455
        %v509 = vpack.c.b16 %v458, %v457
        %v510 = vpack.c.b16 %v460, %v459
        %v511 = vpack.c.b16 %v462, %v461
        %v512 = vpack.c.b16 %v464, %v463
        %v513 = vpack.c.b16 %v466, %v465
        %v514 = vpack.c.b16 %v468, %v467
        %v515 = vpack.c.b16 %v470, %v469
        %v516 = vpack.c.b16 %v472, %v471
        %v517 = vpack.c.b16 %v474, %v473
        %v518 = vpack.c.b16 %v476, %v475
        %v519 = vpack.c.b16 %v478, %v477
        %v520 = vpack.c.b16 %v480, %v479
        %v521 = vpack.c.b16 %v482, %v481
        %v522 = vpack.c.b16 %v484, %v483
        %v523 = vpack.c.b16 %v486, %v485
        %v524 = vpack.c.b16 %v488, %v487
        %v525 = vpack.c.b16 %v490, %v489
        %v526 = vpack.c.b16 %v492, %v491
        %v527 = vpack.c.b16 %v494, %v493
        %v528 = vpack.c.b16 %v496, %v495
        %v533 = vunpack.c.l.b16 %v365
        %v534 = vunpack.c.l.b16 %v366
        %v535 = vunpack.c.l.b16 %v367
        %v536 = vunpack.c.l.b16 %v368
        %v537 = vpack.c.b16 %v534, %v533
        %v538 = vpack.c.b16 %v536, %v535
        %vm541 = vcmask 261120
        %v543 = vsel %vm541, %v497, 0
        %v546 = vsel %vm541, %v498, 0
        %v549 = vsel %vm541, %v499, 0
        %v552 = vsel %vm541, %v500, 0
        %v555 = vsel %vm541, %v501, 0
        %v558 = vsel %vm541, %v502, 0
        %v561 = vsel %vm541, %v503, 0
        %v564 = vsel %vm541, %v504, 0
        %v567 = vsel %vm541, %v505, 0
        %v570 = vsel %vm541, %v506, 0
        %v573 = vsel %vm541, %v507, 0
        %v576 = vsel %vm541, %v508, 0
        %v579 = vsel %vm541, %v509, 0
        %v582 = vsel %vm541, %v510, 0
        %v585 = vsel %vm541, %v511, 0
        %v588 = vsel %vm541, %v512, 0
        %v591 = vsel %vm541, %v513, 0
        %v594 = vsel %vm541, %v514, 0
        %v597 = vsel %vm541, %v515, 0
        %v600 = vsel %vm541, %v516, 0
        %v603 = vsel %vm541, %v517, 0
        %v606 = vsel %vm541, %v518, 0
        %v609 = vsel %vm541, %v519, 0
        %v612 = vsel %vm541, %v520, 0
        %v615 = vsel %vm541, %v521, 0
        %v618 = vsel %vm541, %v522, 0
        %v621 = vsel %vm541, %v523, 0
        %v624 = vsel %vm541, %v524, 0
        %v627 = vsel %vm541, %v525, 0
        %v630 = vsel %vm541, %v526, 0
        %v633 = vsel %vm541, %v527, 0
        %v636 = vsel %vm541, %v528, 0
        %638 = vmatprep.subr.bf16.mxu0 0
        %639 = vmatpush1.bf16.msra.mxu0 %v537
        %640 = vmatprep.subr.bf16.mxu0 0
        %641 = vmatpush1.bf16.msra.mxu0 %v538
        %642 = vmatprep.subr.bf16.mxu0 0
        %643 = vmatpush1.bf16.msra.mxu0 0
        %644 = vmatprep.subr.bf16.mxu0 0
        %645 = vmatpush1.bf16.msra.mxu0 0
        %646 = vmatprep.subr.bf16.mxu0 0
        %647 = vmatpush1.bf16.msra.mxu0 0
        %648 = vmatprep.subr.bf16.mxu0 0
        %649 = vmatpush1.bf16.msra.mxu0 0
        %650 = vmatprep.subr.bf16.mxu0 0
        %651 = vmatpush1.bf16.msra.mxu0 0
        %652 = vmatprep.subr.bf16.mxu0 0
        %653 = vmatpush1.bf16.msra.mxu0 0
        %654 = vmatprep.subr.bf16.mxu0 0
        %655 = vmatpush1.bf16.msra.mxu0 0
        %656 = vmatprep.subr.bf16.mxu0 0
        %657 = vmatpush1.bf16.msra.mxu0 0
        %658 = vmatprep.subr.bf16.mxu0 0
        %659 = vmatpush1.bf16.msra.mxu0 0
        %660 = vmatprep.subr.bf16.mxu0 0
        %661 = vmatpush1.bf16.msra.mxu0 0
        %662 = vmatprep.subr.bf16.mxu0 0
        %663 = vmatpush1.bf16.msra.mxu0 0
        %664 = vmatprep.subr.bf16.mxu0 0
        %665 = vmatpush1.bf16.msra.mxu0 0
        %666 = vmatprep.subr.bf16.mxu0 0
        %667 = vmatpush1.bf16.msra.mxu0 0
        %668 = vmatprep.subr.bf16.mxu0 0
        %669 = vmatpush1.bf16.msra.mxu0 0
        %670 = vmatprep.mubr.bf16.mxu0 0
        %671 = vmatmul.mubr.bf16.gmra.mrb[0].mxu0 %v543
        %v672 = vpop.f32.mrb[0].mxu0
        %v673 = vadd.f32 0.0, %v672
        %v674 = vpop.f32.mrb[0].mxu0
        %v675 = vpop.f32.mrb[0].mxu0
        %v676 = vadd.f32 0.0, %v675
        %v677 = vpop.f32.mrb[0].mxu0
        %678 = vmatprep.mubr.bf16.mxu0 0
        %679 = vmatmul.mubr.bf16.gmra.mrb[0].mxu0 %v546
        %v680 = vpop.f32.mrb[0].mxu0
        %v681 = vadd.f32 0.0, %v680
        %v682 = vpop.f32.mrb[0].mxu0
        %v683 = vpop.f32.mrb[0].mxu0
        %v684 = vadd.f32 0.0, %v683
        %v685 = vpop.f32.mrb[0].mxu0
        %686 = vmatprep.mubr.bf16.mxu0 0
        %687 = vmatmul.mubr.bf16.gmra.mrb[0].mxu0 %v549
        %v688 = vpop.f32.mrb[0].mxu0
        %v689 = vadd.f32 0.0, %v688
        %v690 = vpop.f32.mrb[0].mxu0
        %v691 = vpop.f32.mrb[0].mxu0
        %v692 = vadd.f32 0.0, %v691
        %v693 = vpop.f32.mrb[0].mxu0
        %694 = vmatprep.mubr.bf16.mxu0 0
        %695 = vmatmul.mubr.bf16.gmra.mrb[0].mxu0 %v552
        %v696 = vpop.f32.mrb[0].mxu0
        %v697 = vadd.f32 0.0, %v696
        %v698 = vpop.f32.mrb[0].mxu0
        %v699 = vpop.f32.mrb[0].mxu0
        %v700 = vadd.f32 0.0, %v699
        %v701 = vpop.f32.mrb[0].mxu0
        %702 = vmatprep.mubr.bf16.mxu0 0
        %703 = vmatmul.mubr.bf16.gmra.mrb[0].mxu0 %v555
        %v704 = vpop.f32.mrb[0].mxu0
        %v705 = vadd.f32 0.0, %v704
        %v706 = vpop.f32.mrb[0].mxu0
        %v707 = vpop.f32.mrb[0].mxu0
        %v708 = vadd.f32 0.0, %v707
        %v709 = vpop.f32.mrb[0].mxu0
        %710 = vmatprep.mubr.bf16.mxu0 0
        %711 = vmatmul.mubr.bf16.gmra.mrb[0].mxu0 %v558
        %v712 = vpop.f32.mrb[0].mxu0
        %v713 = vadd.f32 0.0, %v712
        %v714 = vpop.f32.mrb[0].mxu0
        %v715 = vpop.f32.mrb[0].mxu0
        %v716 = vadd.f32 0.0, %v715
        %v717 = vpop.f32.mrb[0].mxu0
        %718 = vmatprep.mubr.bf16.mxu0 0
        %719 = vmatmul.mubr.bf16.gmra.mrb[0].mxu0 %v561
        %v720 = vpop.f32.mrb[0].mxu0
        %v721 = vadd.f32 0.0, %v720
        %v722 = vpop.f32.mrb[0].mxu0
        %v723 = vpop.f32.mrb[0].mxu0
        %v724 = vadd.f32 0.0, %v723
        %v725 = vpop.f32.mrb[0].mxu0
        %726 = vmatprep.mubr.bf16.mxu0 0
        %727 = vmatmul.mubr.bf16.gmra.mrb[0].mxu0 %v564
        %v728 = vpop.f32.mrb[0].mxu0
        %v729 = vadd.f32 0.0, %v728
        %v730 = vpop.f32.mrb[0].mxu0
        %v731 = vpop.f32.mrb[0].mxu0
        %v732 = vadd.f32 0.0, %v731
        %v733 = vpop.f32.mrb[0].mxu0
        %734 = vmatprep.mubr.bf16.mxu0 0
        %735 = vmatmul.mubr.bf16.gmra.mrb[0].mxu0 %v567
        %v736 = vpop.f32.mrb[0].mxu0
        %v737 = vadd.f32 0.0, %v736
        %v738 = vpop.f32.mrb[0].mxu0
        %v739 = vpop.f32.mrb[0].mxu0
        %v740 = vadd.f32 0.0, %v739
        %v741 = vpop.f32.mrb[0].mxu0
        %742 = vmatprep.mubr.bf16.mxu0 0
        %743 = vmatmul.mubr.bf16.gmra.mrb[0].mxu0 %v570
        %v744 = vpop.f32.mrb[0].mxu0
        %v745 = vadd.f32 0.0, %v744
        %v746 = vpop.f32.mrb[0].mxu0
        %v747 = vpop.f32.mrb[0].mxu0
        %v748 = vadd.f32 0.0, %v747
        %v749 = vpop.f32.mrb[0].mxu0
        %750 = vmatprep.mubr.bf16.mxu0 0
        %751 = vmatmul.mubr.bf16.gmra.mrb[0].mxu0 %v573
        %v752 = vpop.f32.mrb[0].mxu0
        %v753 = vadd.f32 0.0, %v752
        %v754 = vpop.f32.mrb[0].mxu0
        %v755 = vpop.f32.mrb[0].mxu0
        %v756 = vadd.f32 0.0, %v755
        %v757 = vpop.f32.mrb[0].mxu0
        %758 = vmatprep.mubr.bf16.mxu0 0
        %759 = vmatmul.mubr.bf16.gmra.mrb[0].mxu0 %v576
        %v760 = vpop.f32.mrb[0].mxu0
        %v761 = vadd.f32 0.0, %v760
        %v762 = vpop.f32.mrb[0].mxu0
        %v763 = vpop.f32.mrb[0].mxu0
        %v764 = vadd.f32 0.0, %v763
        %v765 = vpop.f32.mrb[0].mxu0
        %766 = vmatprep.mubr.bf16.mxu0 0
        %767 = vmatmul.mubr.bf16.gmra.mrb[0].mxu0 %v579
        %v768 = vpop.f32.mrb[0].mxu0
        %v769 = vadd.f32 0.0, %v768
        %v770 = vpop.f32.mrb[0].mxu0
        %v771 = vpop.f32.mrb[0].mxu0
        %v772 = vadd.f32 0.0, %v771
        %v773 = vpop.f32.mrb[0].mxu0
        %774 = vmatprep.mubr.bf16.mxu0 0
        %775 = vmatmul.mubr.bf16.gmra.mrb[0].mxu0 %v582
        %v776 = vpop.f32.mrb[0].mxu0
        %v777 = vadd.f32 0.0, %v776
        %v778 = vpop.f32.mrb[0].mxu0
        %v779 = vpop.f32.mrb[0].mxu0
        %v780 = vadd.f32 0.0, %v779
        %v781 = vpop.f32.mrb[0].mxu0
        %782 = vmatprep.mubr.bf16.mxu0 0
        %783 = vmatmul.mubr.bf16.gmra.mrb[0].mxu0 %v585
        %v784 = vpop.f32.mrb[0].mxu0
        %v785 = vadd.f32 0.0, %v784
        %v786 = vpop.f32.mrb[0].mxu0
        %v787 = vpop.f32.mrb[0].mxu0
        %v788 = vadd.f32 0.0, %v787
        %v789 = vpop.f32.mrb[0].mxu0
        %790 = vmatprep.mubr.bf16.mxu0 0
        %791 = vmatmul.mubr.bf16.gmra.mrb[0].mxu0 %v588
        %v792 = vpop.f32.mrb[0].mxu0
        %v793 = vadd.f32 0.0, %v792
        %v794 = vpop.f32.mrb[0].mxu0
        %v795 = vpop.f32.mrb[0].mxu0
        %v796 = vadd.f32 0.0, %v795
        %v797 = vpop.f32.mrb[0].mxu0
        %798 = vmatprep.mubr.bf16.mxu0 0
        %799 = vmatmul.mubr.bf16.gmra.mrb[0].mxu0 %v591
        %v800 = vpop.f32.mrb[0].mxu0
        %v801 = vadd.f32 0.0, %v800
        %v802 = vpop.f32.mrb[0].mxu0
        %v803 = vpop.f32.mrb[0].mxu0
        %v804 = vadd.f32 0.0, %v803
        %v805 = vpop.f32.mrb[0].mxu0
        %806 = vmatprep.mubr.bf16.mxu0 0
        %807 = vmatmul.mubr.bf16.gmra.mrb[0].mxu0 %v594
        %v808 = vpop.f32.mrb[0].mxu0
        %v809 = vadd.f32 0.0, %v808
        %v810 = vpop.f32.mrb[0].mxu0
        %v811 = vpop.f32.mrb[0].mxu0
        %v812 = vadd.f32 0.0, %v811
        %v813 = vpop.f32.mrb[0].mxu0
        %814 = vmatprep.mubr.bf16.mxu0 0
        %815 = vmatmul.mubr.bf16.gmra.mrb[0].mxu0 %v597
        %v816 = vpop.f32.mrb[0].mxu0
        %v817 = vadd.f32 0.0, %v816
        %v818 = vpop.f32.mrb[0].mxu0
        %v819 = vpop.f32.mrb[0].mxu0
        %v820 = vadd.f32 0.0, %v819
        %v821 = vpop.f32.mrb[0].mxu0
        %822 = vmatprep.mubr.bf16.mxu0 0
        %823 = vmatmul.mubr.bf16.gmra.mrb[0].mxu0 %v600
        %v824 = vpop.f32.mrb[0].mxu0
        %v825 = vadd.f32 0.0, %v824
        %v826 = vpop.f32.mrb[0].mxu0
        %v827 = vpop.f32.mrb[0].mxu0
        %v828 = vadd.f32 0.0, %v827
        %v829 = vpop.f32.mrb[0].mxu0
        %830 = vmatprep.mubr.bf16.mxu0 0
        %831 = vmatmul.mubr.bf16.gmra.mrb[0].mxu0 %v603
        %v832 = vpop.f32.mrb[0].mxu0
        %v833 = vadd.f32 0.0, %v832
        %v834 = vpop.f32.mrb[0].mxu0
        %v835 = vpop.f32.mrb[0].mxu0
        %v836 = vadd.f32 0.0, %v835
        %v837 = vpop.f32.mrb[0].mxu0
        %838 = vmatprep.mubr.bf16.mxu0 0
        %839 = vmatmul.mubr.bf16.gmra.mrb[0].mxu0 %v606
        %v840 = vpop.f32.mrb[0].mxu0
        %v841 = vadd.f32 0.0, %v840
        %v842 = vpop.f32.mrb[0].mxu0
        %v843 = vpop.f32.mrb[0].mxu0
        %v844 = vadd.f32 0.0, %v843
        %v845 = vpop.f32.mrb[0].mxu0
        %846 = vmatprep.mubr.bf16.mxu0 0
        %847 = vmatmul.mubr.bf16.gmra.mrb[0].mxu0 %v609
        %v848 = vpop.f32.mrb[0].mxu0
        %v849 = vadd.f32 0.0, %v848
        %v850 = vpop.f32.mrb[0].mxu0
        %v851 = vpop.f32.mrb[0].mxu0
        %v852 = vadd.f32 0.0, %v851
        %v853 = vpop.f32.mrb[0].mxu0
        %854 = vmatprep.mubr.bf16.mxu0 0
        %855 = vmatmul.mubr.bf16.gmra.mrb[0].mxu0 %v612
        %v856 = vpop.f32.mrb[0].mxu0
        %v857 = vadd.f32 0.0, %v856
        %v858 = vpop.f32.mrb[0].mxu0
        %v859 = vpop.f32.mrb[0].mxu0
        %v860 = vadd.f32 0.0, %v859
        %v861 = vpop.f32.mrb[0].mxu0
        %862 = vmatprep.mubr.bf16.mxu0 0
        %863 = vmatmul.mubr.bf16.gmra.mrb[0].mxu0 %v615
        %v864 = vpop.f32.mrb[0].mxu0
        %v865 = vadd.f32 0.0, %v864
        %v866 = vpop.f32.mrb[0].mxu0
        %v867 = vpop.f32.mrb[0].mxu0
        %v868 = vadd.f32 0.0, %v867
        %v869 = vpop.f32.mrb[0].mxu0
        %870 = vmatprep.mubr.bf16.mxu0 0
        %871 = vmatmul.mubr.bf16.gmra.mrb[0].mxu0 %v618
        %v872 = vpop.f32.mrb[0].mxu0
        %v873 = vadd.f32 0.0, %v872
        %v874 = vpop.f32.mrb[0].mxu0
        %v875 = vpop.f32.mrb[0].mxu0
        %v876 = vadd.f32 0.0, %v875
        %v877 = vpop.f32.mrb[0].mxu0
        %878 = vmatprep.mubr.bf16.mxu0 0
        %879 = vmatmul.mubr.bf16.gmra.mrb[0].mxu0 %v621
        %v880 = vpop.f32.mrb[0].mxu0
        %v881 = vadd.f32 0.0, %v880
        %v882 = vpop.f32.mrb[0].mxu0
        %v883 = vpop.f32.mrb[0].mxu0
        %v884 = vadd.f32 0.0, %v883
        %v885 = vpop.f32.mrb[0].mxu0
        %886 = vmatprep.mubr.bf16.mxu0 0
        %887 = vmatmul.mubr.bf16.gmra.mrb[0].mxu0 %v624
        %v888 = vpop.f32.mrb[0].mxu0
        %v889 = vadd.f32 0.0, %v888
        %v890 = vpop.f32.mrb[0].mxu0
        %v891 = vpop.f32.mrb[0].mxu0
        %v892 = vadd.f32 0.0, %v891
        %v893 = vpop.f32.mrb[0].mxu0
        %894 = vmatprep.mubr.bf16.mxu0 0
        %895 = vmatmul.mubr.bf16.gmra.mrb[0].mxu0 %v627
        %v896 = vpop.f32.mrb[0].mxu0
        %v897 = vadd.f32 0.0, %v896
        %v898 = vpop.f32.mrb[0].mxu0
        %v899 = vpop.f32.mrb[0].mxu0
        %v900 = vadd.f32 0.0, %v899
        %v901 = vpop.f32.mrb[0].mxu0
        %902 = vmatprep.mubr.bf16.mxu0 0
        %903 = vmatmul.mubr.bf16.gmra.mrb[0].mxu0 %v630
        %v904 = vpop.f32.mrb[0].mxu0
        %v905 = vadd.f32 0.0, %v904
        %v906 = vpop.f32.mrb[0].mxu0
        %v907 = vpop.f32.mrb[0].mxu0
        %v908 = vadd.f32 0.0, %v907
        %v909 = vpop.f32.mrb[0].mxu0
        %910 = vmatprep.mubr.bf16.mxu0 0
        %911 = vmatmul.mubr.bf16.gmra.mrb[0].mxu0 %v633
        %v912 = vpop.f32.mrb[0].mxu0
        %v913 = vadd.f32 0.0, %v912
        %v914 = vpop.f32.mrb[0].mxu0
        %v915 = vpop.f32.mrb[0].mxu0
        %v916 = vadd.f32 0.0, %v915
        %v917 = vpop.f32.mrb[0].mxu0
        %918 = vmatprep.mubr.bf16.mxu0 0
        %919 = vmatmul.mubr.bf16.gmra.mrb[0].mxu0 %v636
        %v920 = vpop.f32.mrb[0].mxu0
        %v921 = vadd.f32 0.0, %v920
        %v922 = vpop.f32.mrb[0].mxu0
        %v923 = vpop.f32.mrb[0].mxu0
        %v924 = vadd.f32 0.0, %v923
        %v925 = vpop.f32.mrb[0].mxu0
        %926 = vdwg.mxu0
        %p927 = scmp.eq.s32.totalorder %s20, 0
        // Predicated region
        $region78: #{convt_bn_relu.2} parent=72 // pred_check
          %p928 = pneg %p927
        $region79: #{convt_bn_relu.2} parent=72 // pred_check_branch
          %930 = sbr.rel (%p928) target = $region81
        $region80: #{convt_bn_relu.2} parent=72 // pred_region
          %v931 = vld [vmem:[%s3] sm:$0xff]
          %v932 = vld [vmem:[%s3 + $0x8] sm:$0xff]
          %v933 = vld [vmem:[%s3 + $0x10] sm:$0xff]
          %v934 = vld [vmem:[%s3 + $0x18] sm:$0xff]
          %v935 = vld [vmem:[%s3 + $0x20] sm:$0xff]
          %v936 = vld [vmem:[%s3 + $0x28] sm:$0xff]
          %v937 = vld [vmem:[%s3 + $0x30] sm:$0xff]
          %v938 = vld [vmem:[%s3 + $0x38] sm:$0xff]
          %v939 = vld [vmem:[%s3 + $0x40] sm:$0xff]
          %v940 = vld [vmem:[%s3 + $0x48] sm:$0xff]
          %v941 = vld [vmem:[%s3 + $0x50] sm:$0xff]
          %v942 = vld [vmem:[%s3 + $0x58] sm:$0xff]
          %v943 = vld [vmem:[%s3 + $0x60] sm:$0xff]
          %v944 = vld [vmem:[%s3 + $0x68] sm:$0xff]
          %v945 = vld [vmem:[%s3 + $0x70] sm:$0xff]
          %v946 = vld [vmem:[%s3 + $0x78] sm:$0xff]
          %947 = vmatprep.subr.mxu0 0.0
          %948 = vmatpush1.msra.mxu0 %v931
          %949 = vmatprep.subr.mxu0 0.0
          %950 = vmatpush1.msra.mxu0 %v932
          %951 = vmatprep.subr.mxu0 0.0
          %952 = vmatpush1.msra.mxu0 %v933
          %953 = vmatprep.subr.mxu0 0.0
          %954 = vmatpush1.msra.mxu0 %v934
          %955 = vmatprep.subr.mxu0 0.0
          %956 = vmatpush1.msra.mxu0 %v935
          %957 = vmatprep.subr.mxu0 0.0
          %958 = vmatpush1.msra.mxu0 %v936
          %959 = vmatprep.subr.mxu0 0.0
          %960 = vmatpush1.msra.mxu0 %v937
          %961 = vmatprep.subr.mxu0 0.0
          %962 = vmatpush1.msra.mxu0 %v938
          %963 = vmatprep.subr.mxu0 0.0
          %964 = vmatpush1.msra.mxu0 %v939
          %965 = vmatprep.subr.mxu0 0.0
          %966 = vmatpush1.msra.mxu0 %v940
          %967 = vmatprep.subr.mxu0 0.0
          %968 = vmatpush1.msra.mxu0 %v941
          %969 = vmatprep.subr.mxu0 0.0
          %970 = vmatpush1.msra.mxu0 %v942
          %971 = vmatprep.subr.mxu0 0.0
          %972 = vmatpush1.msra.mxu0 %v943
          %973 = vmatprep.subr.mxu0 0.0
          %974 = vmatpush1.msra.mxu0 %v944
          %975 = vmatprep.subr.mxu0 0.0
          %976 = vmatpush1.msra.mxu0 %v945
          %977 = vmatprep.subr.mxu0 0.0
          %978 = vmatpush1.msra.mxu0 %v946
          %979 = vmatprep.subr.mxu0 0.0
          %980 = vmatpush1.msra.mxu0 0.0
          %981 = vmatprep.subr.mxu0 0.0
          %982 = vmatpush1.msra.mxu0 0.0
          %983 = vmatprep.subr.mxu0 0.0
          %984 = vmatpush1.msra.mxu0 0.0
          %985 = vmatprep.subr.mxu0 0.0
          %986 = vmatpush1.msra.mxu0 0.0
          %987 = vmatprep.subr.mxu0 0.0
          %988 = vmatpush1.msra.mxu0 0.0
          %989 = vmatprep.subr.mxu0 0.0
          %990 = vmatpush1.msra.mxu0 0.0
          %991 = vmatprep.subr.mxu0 0.0
          %992 = vmatpush1.msra.mxu0 0.0
          %993 = vmatprep.subr.mxu0 0.0
          %994 = vmatpush1.msra.mxu0 0.0
          %995 = vmatprep.subr.mxu0 0.0
          %996 = vmatpush1.msra.mxu0 0.0
          %997 = vmatprep.subr.mxu0 0.0
          %998 = vmatpush1.msra.mxu0 0.0
          %999 = vmatprep.subr.mxu0 0.0
          %1000 = vmatpush1.msra.mxu0 0.0
          %1001 = vmatprep.subr.mxu0 0.0
          %1002 = vmatpush1.msra.mxu0 0.0
          %1003 = vmatprep.subr.mxu0 0.0
          %1004 = vmatpush1.msra.mxu0 0.0
          %1005 = vmatprep.subr.mxu0 0.0
          %1006 = vmatpush1.msra.mxu0 0.0
          %1007 = vmatprep.subr.mxu0 0.0
          %1008 = vmatpush1.msra.mxu0 0.0
          %1009 = vmatprep.subr.mxu0 0.0
          %1010 = vmatpush1.msra.mxu0 0.0
          %1011 = vmatprep.mubr.f32.mxu0 0.0
          %1012 = vmatmul.mubr.f32.gmra.mrb[0].mxu0 %v673
          %v1013 = vpop.f32.mrb[0].mxu0
          %v1014 = vadd.f32 0.0, %v1013
          %v1015 = vpop.f32.mrb[0].mxu0
          %1016 = vdwg.mxu0
          %v1017 = vmul.f32 %v1014, 0.25
          %1018 = vst [vmem:[#allocation2] sm:$0x1] %v1017
          %1019 = vst [vmem:[#allocation3] sm:$0x1] 0.0
          %1020 = vst [vmem:[#allocation4] sm:$0x1] 0.0
        $region81: #{convt_bn_relu.2} parent=72 // pred_fallthru
          _
        %v1021 = vld [vmem:[#allocation2] sm:$0x1]
        %v1023 = vlaneseq
        %v1024 = vshrl.u32 %v1023, 7
        %v1025 = vsub.s32 0, %v1024
        %v1026 = vrot.slane %v1021, %v1025
        %v1028 = vsub.f32 %v673, %v1026
        %v1029 = vsub.f32 %v676, %v1026
        %v1030 = vsub.f32 %v681, %v1026
        %v1031 = vsub.f32 %v684, %v1026
        %v1032 = vsub.f32 %v689, %v1026
        %v1033 = vsub.f32 %v692, %v1026
        %v1034 = vsub.f32 %v697, %v1026
        %v1035 = vsub.f32 %v700, %v1026
        %v1036 = vsub.f32 %v705, %v1026
        %v1037 = vsub.f32 %v708, %v1026
        %v1038 = vsub.f32 %v713, %v1026
        %v1039 = vsub.f32 %v716, %v1026
        %v1040 = vsub.f32 %v721, %v1026
        %v1041 = vsub.f32 %v724, %v1026
        %v1042 = vsub.f32 %v729, %v1026
        %v1043 = vsub.f32 %v732, %v1026
        %v1044 = vsub.f32 %v737, %v1026
        %v1045 = vsub.f32 %v740, %v1026
        %v1046 = vsub.f32 %v745, %v1026
        %v1047 = vsub.f32 %v748, %v1026
        %v1048 = vsub.f32 %v753, %v1026
        %v1049 = vsub.f32 %v756, %v1026
        %v1050 = vsub.f32 %v761, %v1026
        %v1051 = vsub.f32 %v764, %v1026
        %v1052 = vsub.f32 %v769, %v1026
        %v1053 = vsub.f32 %v772, %v1026
        %v1054 = vsub.f32 %v777, %v1026
        %v1055 = vsub.f32 %v780, %v1026
        %v1056 = vsub.f32 %v785, %v1026
        %v1057 = vsub.f32 %v788, %v1026
        %v1058 = vsub.f32 %v793, %v1026
        %v1059 = vsub.f32 %v796, %v1026
        %v1060 = vsub.f32 %v801, %v1026
        %v1061 = vsub.f32 %v804, %v1026
        %v1062 = vsub.f32 %v809, %v1026
        %v1063 = vsub.f32 %v812, %v1026
        %v1064 = vsub.f32 %v817, %v1026
        %v1065 = vsub.f32 %v820, %v1026
        %v1066 = vsub.f32 %v825, %v1026
        %v1067 = vsub.f32 %v828, %v1026
        %v1068 = vsub.f32 %v833, %v1026
        %v1069 = vsub.f32 %v836, %v1026
        %v1070 = vsub.f32 %v841, %v1026
        %v1071 = vsub.f32 %v844, %v1026
        %v1072 = vsub.f32 %v849, %v1026
        %v1073 = vsub.f32 %v852, %v1026
        %v1074 = vsub.f32 %v857, %v1026
        %v1075 = vsub.f32 %v860, %v1026
        %v1076 = vsub.f32 %v865, %v1026
        %v1077 = vsub.f32 %v868, %v1026
        %v1078 = vsub.f32 %v873, %v1026
        %v1079 = vsub.f32 %v876, %v1026
        %v1080 = vsub.f32 %v881, %v1026
        %v1081 = vsub.f32 %v884, %v1026
        %v1082 = vsub.f32 %v889, %v1026
        %v1083 = vsub.f32 %v892, %v1026
        %v1084 = vsub.f32 %v897, %v1026
        %v1085 = vsub.f32 %v900, %v1026
        %v1086 = vsub.f32 %v905, %v1026
        %v1087 = vsub.f32 %v908, %v1026
        %v1088 = vsub.f32 %v913, %v1026
        %v1089 = vsub.f32 %v916, %v1026
        %v1090 = vsub.f32 %v921, %v1026
        %v1091 = vsub.f32 %v924, %v1026
        %v1092 = vld [vmem:[#allocation3] sm:$0x1]
        %v1093 = vadd.f32 %v1028, %v1029
        %v1094 = vadd.f32 %v1093, %v1030
        %v1095 = vadd.f32 %v1094, %v1031
        %v1096 = vadd.f32 %v1095, %v1032
        %v1097 = vadd.f32 %v1096, %v1033
        %v1098 = vadd.f32 %v1097, %v1034
        %v1099 = vadd.f32 %v1098, %v1035
        %v1100 = vadd.f32 %v1099, %v1036
        %v1101 = vadd.f32 %v1100, %v1037
        %v1102 = vadd.f32 %v1101, %v1038
        %v1103 = vadd.f32 %v1102, %v1039
        %v1104 = vadd.f32 %v1103, %v1040
        %v1105 = vadd.f32 %v1104, %v1041
        %v1106 = vadd.f32 %v1105, %v1042
        %v1107 = vadd.f32 %v1106, %v1043
        %v1108 = vadd.f32 %v1107, %v1044
        %v1109 = vadd.f32 %v1108, %v1045
        %v1110 = vadd.f32 %v1109, %v1046
        %v1111 = vadd.f32 %v1110, %v1047
        %v1112 = vadd.f32 %v1111, %v1048
        %v1113 = vadd.f32 %v1112, %v1049
        %v1114 = vadd.f32 %v1113, %v1050
        %v1115 = vadd.f32 %v1114, %v1051
        %v1116 = vadd.f32 %v1115, %v1052
        %v1117 = vadd.f32 %v1116, %v1053
        %v1118 = vadd.f32 %v1117, %v1054
        %v1119 = vadd.f32 %v1118, %v1055
        %v1120 = vadd.f32 %v1119, %v1056
        %v1121 = vadd.f32 %v1120, %v1057
        %v1122 = vadd.f32 %v1121, %v1058
        %v1123 = vadd.f32 %v1122, %v1059
        %v1124 = vadd.f32 %v1123, %v1060
        %v1125 = vadd.f32 %v1124, %v1061
        %v1126 = vadd.f32 %v1125, %v1062
        %v1127 = vadd.f32 %v1126, %v1063
        %v1128 = vadd.f32 %v1127, %v1064
        %v1129 = vadd.f32 %v1128, %v1065
        %v1130 = vadd.f32 %v1129, %v1066
        %v1131 = vadd.f32 %v1130, %v1067
        %v1132 = vadd.f32 %v1131, %v1068
        %v1133 = vadd.f32 %v1132, %v1069
        %v1134 = vadd.f32 %v1133, %v1070
        %v1135 = vadd.f32 %v1134, %v1071
        %v1136 = vadd.f32 %v1135, %v1072
        %v1137 = vadd.f32 %v1136, %v1073
        %v1138 = vadd.f32 %v1137, %v1074
        %v1139 = vadd.f32 %v1138, %v1075
        %v1140 = vadd.f32 %v1139, %v1076
        %v1141 = vadd.f32 %v1140, %v1077
        %v1142 = vadd.f32 %v1141, %v1078
        %v1143 = vadd.f32 %v1142, %v1079
        %v1144 = vadd.f32 %v1143, %v1080
        %v1145 = vadd.f32 %v1144, %v1081
        %v1146 = vadd.f32 %v1145, %v1082
        %v1147 = vadd.f32 %v1146, %v1083
        %v1148 = vadd.f32 %v1147, %v1084
        %v1149 = vadd.f32 %v1148, %v1085
        %v1150 = vadd.f32 %v1149, %v1086
        %v1151 = vadd.f32 %v1150, %v1087
        %v1152 = vadd.f32 %v1151, %v1088
        %v1153 = vadd.f32 %v1152, %v1089
        %v1154 = vadd.f32 %v1153, %v1090
        %v1155 = vadd.f32 %v1154, %v1091
        %v1156 = vrot.slane %v1155, 4
        %v1157 = vadd.f32 %v1155, %v1156
        %v1158 = vrot.slane %v1157, 2
        %v1159 = vadd.f32 %v1157, %v1158
        %v1160 = vrot.slane %v1159, 1
        %v1161 = vadd.f32 %v1159, %v1160
        %v1162 = vadd.f32 %v1092, %v1161
        %1163 = vst [vmem:[#allocation3] sm:$0x1] %v1162
        %v1164 = vld [vmem:[#allocation4] sm:$0x1]
        %v1165 = vmul.f32 %v1028, %v1028
        %v1166 = vmul.f32 %v1029, %v1029
        %v1167 = vmul.f32 %v1030, %v1030
        %v1168 = vmul.f32 %v1031, %v1031
        %v1169 = vmul.f32 %v1032, %v1032
        %v1170 = vmul.f32 %v1033, %v1033
        %v1171 = vmul.f32 %v1034, %v1034
        %v1172 = vmul.f32 %v1035, %v1035
        %v1173 = vmul.f32 %v1036, %v1036
        %v1174 = vmul.f32 %v1037, %v1037
        %v1175 = vmul.f32 %v1038, %v1038
        %v1176 = vmul.f32 %v1039, %v1039
        %v1177 = vmul.f32 %v1040, %v1040
        %v1178 = vmul.f32 %v1041, %v1041
        %v1179 = vmul.f32 %v1042, %v1042
        %v1180 = vmul.f32 %v1043, %v1043
        %v1181 = vmul.f32 %v1044, %v1044
        %v1182 = vmul.f32 %v1045, %v1045
        %v1183 = vmul.f32 %v1046, %v1046
        %v1184 = vmul.f32 %v1047, %v1047
        %v1185 = vmul.f32 %v1048, %v1048
        %v1186 = vmul.f32 %v1049, %v1049
        %v1187 = vmul.f32 %v1050, %v1050
        %v1188 = vmul.f32 %v1051, %v1051
        %v1189 = vmul.f32 %v1052, %v1052
        %v1190 = vmul.f32 %v1053, %v1053
        %v1191 = vmul.f32 %v1054, %v1054
        %v1192 = vmul.f32 %v1055, %v1055
        %v1193 = vmul.f32 %v1056, %v1056
        %v1194 = vmul.f32 %v1057, %v1057
        %v1195 = vmul.f32 %v1058, %v1058
        %v1196 = vmul.f32 %v1059, %v1059
        %v1197 = vmul.f32 %v1060, %v1060
        %v1198 = vmul.f32 %v1061, %v1061
        %v1199 = vmul.f32 %v1062, %v1062
        %v1200 = vmul.f32 %v1063, %v1063
        %v1201 = vmul.f32 %v1064, %v1064
        %v1202 = vmul.f32 %v1065, %v1065
        %v1203 = vmul.f32 %v1066, %v1066
        %v1204 = vmul.f32 %v1067, %v1067
        %v1205 = vmul.f32 %v1068, %v1068
        %v1206 = vmul.f32 %v1069, %v1069
        %v1207 = vmul.f32 %v1070, %v1070
        %v1208 = vmul.f32 %v1071, %v1071
        %v1209 = vmul.f32 %v1072, %v1072
        %v1210 = vmul.f32 %v1073, %v1073
        %v1211 = vmul.f32 %v1074, %v1074
        %v1212 = vmul.f32 %v1075, %v1075
        %v1213 = vmul.f32 %v1076, %v1076
        %v1214 = vmul.f32 %v1077, %v1077
        %v1215 = vmul.f32 %v1078, %v1078
        %v1216 = vmul.f32 %v1079, %v1079
        %v1217 = vmul.f32 %v1080, %v1080
        %v1218 = vmul.f32 %v1081, %v1081
        %v1219 = vmul.f32 %v1082, %v1082
        %v1220 = vmul.f32 %v1083, %v1083
        %v1221 = vmul.f32 %v1084, %v1084
        %v1222 = vmul.f32 %v1085, %v1085
        %v1223 = vmul.f32 %v1086, %v1086
        %v1224 = vmul.f32 %v1087, %v1087
        %v1225 = vmul.f32 %v1088, %v1088
        %v1226 = vmul.f32 %v1089, %v1089
        %v1227 = vmul.f32 %v1090, %v1090
        %v1228 = vmul.f32 %v1091, %v1091
        %v1229 = vadd.f32 %v1165, %v1166
        %v1230 = vadd.f32 %v1229, %v1167
        %v1231 = vadd.f32 %v1230, %v1168
        %v1232 = vadd.f32 %v1231, %v1169
        %v1233 = vadd.f32 %v1232, %v1170
        %v1234 = vadd.f32 %v1233, %v1171
        %v1235 = vadd.f32 %v1234, %v1172
        %v1236 = vadd.f32 %v1235, %v1173
        %v1237 = vadd.f32 %v1236, %v1174
        %v1238 = vadd.f32 %v1237, %v1175
        %v1239 = vadd.f32 %v1238, %v1176
        %v1240 = vadd.f32 %v1239, %v1177
        %v1241 = vadd.f32 %v1240, %v1178
        %v1242 = vadd.f32 %v1241, %v1179
        %v1243 = vadd.f32 %v1242, %v1180
        %v1244 = vadd.f32 %v1243, %v1181
        %v1245 = vadd.f32 %v1244, %v1182
        %v1246 = vadd.f32 %v1245, %v1183
        %v1247 = vadd.f32 %v1246, %v1184
        %v1248 = vadd.f32 %v1247, %v1185
        %v1249 = vadd.f32 %v1248, %v1186
        %v1250 = vadd.f32 %v1249, %v1187
        %v1251 = vadd.f32 %v1250, %v1188
        %v1252 = vadd.f32 %v1251, %v1189
        %v1253 = vadd.f32 %v1252, %v1190
        %v1254 = vadd.f32 %v1253, %v1191
        %v1255 = vadd.f32 %v1254, %v1192
        %v1256 = vadd.f32 %v1255, %v1193
        %v1257 = vadd.f32 %v1256, %v1194
        %v1258 = vadd.f32 %v1257, %v1195
        %v1259 = vadd.f32 %v1258, %v1196
        %v1260 = vadd.f32 %v1259, %v1197
        %v1261 = vadd.f32 %v1260, %v1198
        %v1262 = vadd.f32 %v1261, %v1199
        %v1263 = vadd.f32 %v1262, %v1200
        %v1264 = vadd.f32 %v1263, %v1201
        %v1265 = vadd.f32 %v1264, %v1202
        %v1266 = vadd.f32 %v1265, %v1203
        %v1267 = vadd.f32 %v1266, %v1204
        %v1268 = vadd.f32 %v1267, %v1205
        %v1269 = vadd.f32 %v1268, %v1206
        %v1270 = vadd.f32 %v1269, %v1207
        %v1271 = vadd.f32 %v1270, %v1208
        %v1272 = vadd.f32 %v1271, %v1209
        %v1273 = vadd.f32 %v1272, %v1210
        %v1274 = vadd.f32 %v1273, %v1211
        %v1275 = vadd.f32 %v1274, %v1212
        %v1276 = vadd.f32 %v1275, %v1213
        %v1277 = vadd.f32 %v1276, %v1214
        %v1278 = vadd.f32 %v1277, %v1215
        %v1279 = vadd.f32 %v1278, %v1216
        %v1280 = vadd.f32 %v1279, %v1217
        %v1281 = vadd.f32 %v1280, %v1218
        %v1282 = vadd.f32 %v1281, %v1219
        %v1283 = vadd.f32 %v1282, %v1220
        %v1284 = vadd.f32 %v1283, %v1221
        %v1285 = vadd.f32 %v1284, %v1222
        %v1286 = vadd.f32 %v1285, %v1223
        %v1287 = vadd.f32 %v1286, %v1224
        %v1288 = vadd.f32 %v1287, %v1225
        %v1289 = vadd.f32 %v1288, %v1226
        %v1290 = vadd.f32 %v1289, %v1227
        %v1291 = vadd.f32 %v1290, %v1228
        %v1292 = vrot.slane %v1291, 4
        %v1293 = vadd.f32 %v1291, %v1292
        %v1294 = vrot.slane %v1293, 2
        %v1295 = vadd.f32 %v1293, %v1294
        %v1296 = vrot.slane %v1295, 1
        %v1297 = vadd.f32 %v1295, %v1296
        %v1298 = vadd.f32 %v1164, %v1297
        %1299 = vst [vmem:[#allocation4] sm:$0x1] %v1298
        // Predicated region
        $region82: #{convt_bn_relu.2} parent=72 // pred_check
          %p1300 = pneg %p927
        $region83: #{convt_bn_relu.2} parent=72 // pred_check_branch
          %1302 = sbr.rel (%p1300) target = $region85
        $region84: #{convt_bn_relu.2} parent=72 // pred_region
          %v1303 = vld [vmem:[#allocation3] sm:$0x1]
          %v1304 = vld [vmem:[%s3] sm:$0xff]
          %v1305 = vld [vmem:[%s3 + $0x8] sm:$0xff]
          %v1306 = vld [vmem:[%s3 + $0x10] sm:$0xff]
          %v1307 = vld [vmem:[%s3 + $0x18] sm:$0xff]
          %v1308 = vld [vmem:[%s3 + $0x20] sm:$0xff]
          %v1309 = vld [vmem:[%s3 + $0x28] sm:$0xff]
          %v1310 = vld [vmem:[%s3 + $0x30] sm:$0xff]
          %v1311 = vld [vmem:[%s3 + $0x38] sm:$0xff]
          %v1312 = vld [vmem:[%s3 + $0x40] sm:$0xff]
          %v1313 = vld [vmem:[%s3 + $0x48] sm:$0xff]
          %v1314 = vld [vmem:[%s3 + $0x50] sm:$0xff]
          %v1315 = vld [vmem:[%s3 + $0x58] sm:$0xff]
          %v1316 = vld [vmem:[%s3 + $0x60] sm:$0xff]
          %v1317 = vld [vmem:[%s3 + $0x68] sm:$0xff]
          %v1318 = vld [vmem:[%s3 + $0x70] sm:$0xff]
          %v1319 = vld [vmem:[%s3 + $0x78] sm:$0xff]
          %1320 = vmatprep.subr.mxu0 0.0
          %1321 = vmatpush1.msra.mxu0 %v1304
          %1322 = vmatprep.subr.mxu0 0.0
          %1323 = vmatpush1.msra.mxu0 %v1305
          %1324 = vmatprep.subr.mxu0 0.0
          %1325 = vmatpush1.msra.mxu0 %v1306
          %1326 = vmatprep.subr.mxu0 0.0
          %1327 = vmatpush1.msra.mxu0 %v1307
          %1328 = vmatprep.subr.mxu0 0.0
          %1329 = vmatpush1.msra.mxu0 %v1308
          %1330 = vmatprep.subr.mxu0 0.0
          %1331 = vmatpush1.msra.mxu0 %v1309
          %1332 = vmatprep.subr.mxu0 0.0
          %1333 = vmatpush1.msra.mxu0 %v1310
          %1334 = vmatprep.subr.mxu0 0.0
          %1335 = vmatpush1.msra.mxu0 %v1311
          %1336 = vmatprep.subr.mxu0 0.0
          %1337 = vmatpush1.msra.mxu0 %v1312
          %1338 = vmatprep.subr.mxu0 0.0
          %1339 = vmatpush1.msra.mxu0 %v1313
          %1340 = vmatprep.subr.mxu0 0.0
          %1341 = vmatpush1.msra.mxu0 %v1314
          %1342 = vmatprep.subr.mxu0 0.0
          %1343 = vmatpush1.msra.mxu0 %v1315
          %1344 = vmatprep.subr.mxu0 0.0
          %1345 = vmatpush1.msra.mxu0 %v1316
          %1346 = vmatprep.subr.mxu0 0.0
          %1347 = vmatpush1.msra.mxu0 %v1317
          %1348 = vmatprep.subr.mxu0 0.0
          %1349 = vmatpush1.msra.mxu0 %v1318
          %1350 = vmatprep.subr.mxu0 0.0
          %1351 = vmatpush1.msra.mxu0 %v1319
          %1352 = vmatprep.subr.mxu0 0.0
          %1353 = vmatpush1.msra.mxu0 0.0
          %1354 = vmatprep.subr.mxu0 0.0
          %1355 = vmatpush1.msra.mxu0 0.0
          %1356 = vmatprep.subr.mxu0 0.0
          %1357 = vmatpush1.msra.mxu0 0.0
          %1358 = vmatprep.subr.mxu0 0.0
          %1359 = vmatpush1.msra.mxu0 0.0
          %1360 = vmatprep.subr.mxu0 0.0
          %1361 = vmatpush1.msra.mxu0 0.0
          %1362 = vmatprep.subr.mxu0 0.0
          %1363 = vmatpush1.msra.mxu0 0.0
          %1364 = vmatprep.subr.mxu0 0.0
          %1365 = vmatpush1.msra.mxu0 0.0
          %1366 = vmatprep.subr.mxu0 0.0
          %1367 = vmatpush1.msra.mxu0 0.0
          %1368 = vmatprep.subr.mxu0 0.0
          %1369 = vmatpush1.msra.mxu0 0.0
          %1370 = vmatprep.subr.mxu0 0.0
          %1371 = vmatpush1.msra.mxu0 0.0
          %1372 = vmatprep.subr.mxu0 0.0
          %1373 = vmatpush1.msra.mxu0 0.0
          %1374 = vmatprep.subr.mxu0 0.0
          %1375 = vmatpush1.msra.mxu0 0.0
          %1376 = vmatprep.subr.mxu0 0.0
          %1377 = vmatpush1.msra.mxu0 0.0
          %1378 = vmatprep.subr.mxu0 0.0
          %1379 = vmatpush1.msra.mxu0 0.0
          %1380 = vmatprep.subr.mxu0 0.0
          %1381 = vmatpush1.msra.mxu0 0.0
          %1382 = vmatprep.subr.mxu0 0.0
          %1383 = vmatpush1.msra.mxu0 0.0
          %1384 = vmatprep.mubr.f32.mxu0 0.0
          %1385 = vmatmul.mubr.f32.gmra.mrb[0].mxu0 %v1303
          %v1386 = vpop.f32.mrb[0].mxu0
          %v1387 = vadd.f32 0.0, %v1386
          %v1388 = vpop.f32.mrb[0].mxu0
          %1389 = vdwg.mxu0
          %v1390 = vld [vmem:[#allocation4] sm:$0x1]
          %1391 = vmatprep.subr.mxu0 0.0
          %1392 = vmatpush1.msra.mxu0 %v1304
          %1393 = vmatprep.subr.mxu0 0.0
          %1394 = vmatpush1.msra.mxu0 %v1305
          %1395 = vmatprep.subr.mxu0 0.0
          %1396 = vmatpush1.msra.mxu0 %v1306
          %1397 = vmatprep.subr.mxu0 0.0
          %1398 = vmatpush1.msra.mxu0 %v1307
          %1399 = vmatprep.subr.mxu0 0.0
          %1400 = vmatpush1.msra.mxu0 %v1308
          %1401 = vmatprep.subr.mxu0 0.0
          %1402 = vmatpush1.msra.mxu0 %v1309
          %1403 = vmatprep.subr.mxu0 0.0
          %1404 = vmatpush1.msra.mxu0 %v1310
          %1405 = vmatprep.subr.mxu0 0.0
          %1406 = vmatpush1.msra.mxu0 %v1311
          %1407 = vmatprep.subr.mxu0 0.0
          %1408 = vmatpush1.msra.mxu0 %v1312
          %1409 = vmatprep.subr.mxu0 0.0
          %1410 = vmatpush1.msra.mxu0 %v1313
          %1411 = vmatprep.subr.mxu0 0.0
          %1412 = vmatpush1.msra.mxu0 %v1314
          %1413 = vmatprep.subr.mxu0 0.0
          %1414 = vmatpush1.msra.mxu0 %v1315
          %1415 = vmatprep.subr.mxu0 0.0
          %1416 = vmatpush1.msra.mxu0 %v1316
          %1417 = vmatprep.subr.mxu0 0.0
          %1418 = vmatpush1.msra.mxu0 %v1317
          %1419 = vmatprep.subr.mxu0 0.0
          %1420 = vmatpush1.msra.mxu0 %v1318
          %1421 = vmatprep.subr.mxu0 0.0
          %1422 = vmatpush1.msra.mxu0 %v1319
          %1423 = vmatprep.subr.mxu0 0.0
          %1424 = vmatpush1.msra.mxu0 0.0
          %1425 = vmatprep.subr.mxu0 0.0
          %1426 = vmatpush1.msra.mxu0 0.0
          %1427 = vmatprep.subr.mxu0 0.0
          %1428 = vmatpush1.msra.mxu0 0.0
          %1429 = vmatprep.subr.mxu0 0.0
          %1430 = vmatpush1.msra.mxu0 0.0
          %1431 = vmatprep.subr.mxu0 0.0
          %1432 = vmatpush1.msra.mxu0 0.0
          %1433 = vmatprep.subr.mxu0 0.0
          %1434 = vmatpush1.msra.mxu0 0.0
          %1435 = vmatprep.subr.mxu0 0.0
          %1436 = vmatpush1.msra.mxu0 0.0
          %1437 = vmatprep.subr.mxu0 0.0
          %1438 = vmatpush1.msra.mxu0 0.0
          %1439 = vmatprep.subr.mxu0 0.0
          %1440 = vmatpush1.msra.mxu0 0.0
          %1441 = vmatprep.subr.mxu0 0.0
          %1442 = vmatpush1.msra.mxu0 0.0
          %1443 = vmatprep.subr.mxu0 0.0
          %1444 = vmatpush1.msra.mxu0 0.0
          %1445 = vmatprep.subr.mxu0 0.0
          %1446 = vmatpush1.msra.mxu0 0.0
          %1447 = vmatprep.subr.mxu0 0.0
          %1448 = vmatpush1.msra.mxu0 0.0
          %1449 = vmatprep.subr.mxu0 0.0
          %1450 = vmatpush1.msra.mxu0 0.0
          %1451 = vmatprep.subr.mxu0 0.0
          %1452 = vmatpush1.msra.mxu0 0.0
          %1453 = vmatprep.subr.mxu0 0.0
          %1454 = vmatpush1.msra.mxu0 0.0
          %1455 = vmatprep.mubr.f32.mxu0 0.0
          %1456 = vmatmul.mubr.f32.gmra.mrb[0].mxu0 %v1390
          %v1457 = vpop.f32.mrb[0].mxu0
          %v1458 = vadd.f32 0.0, %v1457
          %v1459 = vpop.f32.mrb[0].mxu0
          %1460 = vdwg.mxu0
          %v1461 = vmul.f32 %v1387, 0.00048828125
          %v1462 = vmul.f32 %v1458, 0.00048828125
          %v1463 = vmul.f32 %v1461, %v1461
          %v1464 = vsub.f32 %v1462, %v1463
          %v1465 = vld [vmem:[#allocation2] sm:$0x1]
          %v1466 = vadd.f32 %v1461, %v1465
          %v1467 = vadd.f32 %v1464, 1e-05
          %v1468 = vrsqrt.pop %v1467
          %v1469 = vld [vmem:[%s295] sm:$0x1]
          %v1470 = vmul.f32 %v1469, %v1468
          %v1471 = vld [vmem:[%s295 + $0x1] sm:$0x1]
          %v1472 = vmul.f32 %v1466, %v1470
          %v1473 = vsub.f32 %v1471, %v1472
          %1474 = vst [vmem:[%s299] sm:$0x1] %v1470
          %1475 = vst [vmem:[%s299 + $0x1] sm:$0x1] %v1473
        $region85: #{convt_bn_relu.2} parent=72 // pred_fallthru
          _
        %p1476 = scmp.lt.s32.totalorder %s19, 1
        %s1477 = scalar_select %p1476, %s19, 1
        %s1478 = smul.addr %s1477, 2
        %s1479 = scalar_lea.vmem %s4, %s1478
        // Predicated region
        $region86: #{convt_bn_relu.2} parent=72 // pred_check
          %p1480 = pneg %p144
        $region87: #{convt_bn_relu.2} parent=72 // pred_check_branch
          %1482 = sbr.rel (%p1480) target = $region89
        $region88: #{convt_bn_relu.2} parent=72 // pred_region
          _
        $region89: #{convt_bn_relu.2} parent=72 // pred_fallthru
          _
      $region73: #{convt_bn_relu.2} parent=5 // pred_fallthru
        _
      %p1483 = scmp.le.s32.totalorder 2, %s10
      // Predicated region
      $region90: #{convt_bn_relu.2} parent=5 // pred_check
        %p1484 = pneg %p1483
      $region91: #{convt_bn_relu.2} parent=5 // pred_check_branch
        %1486 = sbr.rel (%p1484) target = $region93
      $region92: #{convt_bn_relu.2} parent=5 // pred_region
        %s1487 = ssub.s32 %s10, 2
        // Predicated region
        $region94: #{convt_bn_relu.2} parent=92 // pred_check
          %p1488 = pneg %p150
        $region95: #{convt_bn_relu.2} parent=92 // pred_check_branch
          %1490 = sbr.rel (%p1488) target = $region97
        $region96: #{convt_bn_relu.2} parent=92 // pred_region
          %p1491 = scmp.lt.s32.totalorder %s21, 1
          %s1492 = scalar_select %p1491, %s21, 1
          %s1493 = smul.addr %s1492, 2
          %s1494 = scalar_lea.vmem %s4, %s1493
        $region97: #{convt_bn_relu.2} parent=92 // pred_fallthru
          _
      $region93: #{convt_bn_relu.2} parent=5 // pred_fallthru
        _
    $region6: #{convt_bn_relu.2} parent=1 // loop_footer
      %s14 = sadd.s32 1, %s10
    $region7: #{convt_bn_relu.2} parent=1 // loop_footer_branch
      %9 = sbr.rel target = $region3
    $region8: #{convt_bn_relu.2} parent=1 // loop_exit
      _

</llo_original>
